<compile_context>
chip_gen: v5e
topology: v5e:2x2
jax: 0.10.0
libtpu: 0.0.40
codegen_flags: <defaults>
</compile_context>

<pallas_src>
import math
from collections import namedtuple

import jax
import jax.numpy as jnp
import numpy as np
from jax.experimental import pallas as pl
from jax.experimental.pallas import tpu as pltpu

# ----------------------------- config -------------------------------------
B, S, D, H, L = 2, 8, 32, 4, 2        # batch, seq, hidden, heads, layers
DH = D // H                            # per-head dim
F = 64                                 # FFN dim
VOCAB = 100
C = 2                                  # num labels
EAR_REG_STRENGTH = 0.01
NEG_BIG = -1e9

EARClassificationOutput = namedtuple(
    "EARClassificationOutput",
    ["model_output", "negative_entropy", "reg_loss", "loss"])


# ------------------ Pallas kernel: fused EAR forward -----------------------
def fused_forward_kernel(hid_ref, maskf_ref, onehot_ref,
                         w_attn_ref, b_qkv_ref, w_ffn1_ref, c1_ref,
                         w_ffn2_ref, vecs_ref, w_head_ref, b_head_ref,
                         hid_out_ref, attn_out_ref, logits_ref,
                         loss_ref, negent_ref):
    h = hid_ref[...]                                      # [B*S, D]
    maskf = maskf_ref[...]                                # [B, S] (0/1 float)

    # Hoisted (loop-invariant) broadcasts / reductions.
    add_mask = ((1.0 - maskf) * NEG_BIG)[:, None, :]      # [B, 1, S] additive key mask
    col = maskf[:, None, :]                               # [B, 1, S] column mask
    cnt = jnp.maximum(jnp.sum(maskf, axis=-1, keepdims=True), 1.0)   # [B, 1]
    scale = 1.0 / math.sqrt(DH)

    ent_acc = jnp.zeros((B, 1), jnp.float32)              # sum over layers of per-batch entropy

    def ln(x, g, b):
        mu = jnp.mean(x, axis=-1, keepdims=True)
        var = jnp.mean((x - mu) ** 2, axis=-1, keepdims=True)
        return (x - mu) * jax.lax.rsqrt(var + 1e-12) * g + b

    for li in range(L):                                   # L=2, fully unrolled
        w_attn = w_attn_ref[li]                           # [D, 4D] = [Wq|Wk|Wv|Wo]
        wqkv = w_attn[:, :3 * D]                          # [D, 3D]
        wo = w_attn[:, 3 * D:]                            # [D, D]
        bqkv = b_qkv_ref[li]                              # [1, 3D]
        w1 = w_ffn1_ref[li]                               # [D, F]
        c1 = c1_ref[li]                                   # [1, F]
        w2 = w_ffn2_ref[li]                               # [F, D]
        vecs = vecs_ref[li]                               # [6, D]
        bo, g1, b1 = vecs[0:1], vecs[1:2], vecs[2:3]
        c2, g2, b2 = vecs[3:4], vecs[4:5], vecs[5:6]

        # Single full-width QKV matmul on the [B*S, D] slab.
        qkv = jnp.dot(h, wqkv, preferred_element_type=jnp.float32) + bqkv   # [B*S, 3D]

        ctx_heads = []
        pool = jnp.zeros((B, S, S), jnp.float32)          # head-mean of attention probs
        for hd in range(H):                               # H=4, fully unrolled
            qh = qkv[:, hd * DH:(hd + 1) * DH].reshape(B, S, DH)
            kh = qkv[:, D + hd * DH:D + (hd + 1) * DH].reshape(B, S, DH)
            vh = qkv[:, 2 * D + hd * DH:2 * D + (hd + 1) * DH].reshape(B, S, DH)

            sc = jnp.einsum("bsd,btd->bst", qh, kh,
                            preferred_element_type=jnp.float32) * scale
            sc = sc + add_mask                            # mask key positions
            m = jnp.max(sc, axis=-1, keepdims=True)
            e = jnp.exp(sc - m)
            denom = jnp.sum(e, axis=-1, keepdims=True)
            probs = e * pl.reciprocal(denom, approx=True)  # EUP reciprocal
            attn_out_ref[li * H + hd] = probs             # [B, S, S] per (layer, head)
            pool = pool + probs

            ctx_h = jnp.einsum("bst,btd->bsd", probs, vh,
                               preferred_element_type=jnp.float32)
            ctx_heads.append(ctx_h.reshape(B * S, DH))

        ctx = jnp.concatenate(ctx_heads, axis=-1)         # [B*S, D]
        proj = jnp.dot(ctx, wo, preferred_element_type=jnp.float32) + bo
        h1 = ln(h + proj, g1, b1)

        z = jnp.dot(h1, w1, preferred_element_type=jnp.float32) + c1
        gelu = 0.5 * z * (1.0 + jnp.tanh(0.7978845608028654 * (z + 0.044715 * z ** 3)))
        ff = jnp.dot(gelu, w2, preferred_element_type=jnp.float32) + c2
        h = ln(h1 + ff, g2, b2)

        # EAR negative-entropy contribution of this layer (masked rows & cols).
        pool = pool * (1.0 / H)                           # mean over heads
        x = jnp.where(col > 0.0, pool, NEG_BIG)
        mx = jnp.max(x, axis=-1, keepdims=True)
        ee = jnp.exp(x - mx) * col
        den = jnp.maximum(jnp.sum(ee, axis=-1, keepdims=True), 1e-30)
        p = ee / den                                      # exact division for the entropy
        logp = (x - mx) - jnp.log(den)
        ent_row = jnp.sum(jnp.where(col > 0.0, p * logp, 0.0), axis=-1)   # [B, S]
        ent_acc = ent_acc + jnp.sum(ent_row * maskf, axis=-1, keepdims=True) / cnt

    hid_out_ref[...] = h                                  # last hidden state [B*S, D]
    # mean_b( sum_l ent[l, b] )
    negent_ref[...] = jnp.sum(ent_acc, axis=0, keepdims=True) * (1.0 / B)

    # Classifier head on the CLS token (row 0 of each sequence) + CE loss.
    cls = jnp.concatenate([h[b * S:b * S + 1, :] for b in range(B)], axis=0)  # [B, D]
    w_head = w_head_ref[...]                              # [D, D+C] = [Wp|Wc]
    b_head = b_head_ref[...]                              # [1, D+C]
    wp, wc = w_head[:, :D], w_head[:, D:]
    bp, bc = b_head[:, :D], b_head[:, D:]
    pooled = jnp.tanh(jnp.dot(cls, wp, preferred_element_type=jnp.float32) + bp)
    logits = jnp.dot(pooled, wc, preferred_element_type=jnp.float32) + bc
    logits_ref[...] = logits

    m = jnp.max(logits, axis=-1, keepdims=True)
    lse = m + jnp.log(jnp.sum(jnp.exp(logits - m), axis=-1, keepdims=True))
    picked = jnp.sum(onehot_ref[...] * logits, axis=-1, keepdims=True)
    loss_ref[...] = jnp.sum(lse - picked, axis=0, keepdims=True) * (1.0 / B)


# ----------------------------- parameters ----------------------------------
def init_params(key):
    def normal(k, shape):
        return (0.02 * jax.random.normal(k, shape)).astype(jnp.float32)

    keys = jax.random.split(key, 4 + L)
    w_attn, w_ffn1, w_ffn2 = [], [], []
    for li in range(L):
        lk = jax.random.split(keys[4 + li], 3)
        w_attn.append(normal(lk[0], (D, 4 * D)))          # [Wq|Wk|Wv|Wo]
        w_ffn1.append(normal(lk[1], (D, F)))
        w_ffn2.append(normal(lk[2], (F, D)))

    # bias / LN slab rows: 0=bo, 1=g1, 2=b1, 3=c2, 4=g2, 5=b2
    vecs = jnp.zeros((L, 6, D), jnp.float32)
    vecs = vecs.at[:, 1].set(1.0).at[:, 4].set(1.0)

    return {
        "word_emb": normal(keys[0], (VOCAB, D)),
        "pos_emb": normal(keys[1], (S, D)),
        "w_attn": jnp.stack(w_attn),                      # [L, D, 4D]
        "b_qkv": jnp.zeros((L, 1, 3 * D), jnp.float32),
        "w_ffn1": jnp.stack(w_ffn1),                      # [L, D, F]
        "c1": jnp.zeros((L, 1, F), jnp.float32),
        "w_ffn2": jnp.stack(w_ffn2),                      # [L, F, D]
        "vecs": vecs,                                     # [L, 6, D]
        "w_head": jnp.concatenate([normal(keys[2], (D, D)),
                                   normal(keys[3], (D, C))], axis=1),  # [D, D+C]
        "b_head": jnp.zeros((1, D + C), jnp.float32),
    }


# ------------------------------ forward ------------------------------------
def ear_forward(params, input_ids, attention_mask, labels):
    maskf = attention_mask.astype(jnp.float32)            # [B, S]
    # TODO(synk): embedding gather kept as XLA glue (tiny table lookup; a
    # Pallas DMA-gather adds nothing at this size).
    hidden = (jnp.take(params["word_emb"], input_ids, axis=0)
              + params["pos_emb"][None]).astype(jnp.float32)          # [B, S, D]
    hidden2d = hidden.reshape(B * S, D)
    onehot = jax.nn.one_hot(labels, C, dtype=jnp.float32)

    out_shapes = (
        jax.ShapeDtypeStruct((B * S, D), jnp.float32),        # last hidden state
        jax.ShapeDtypeStruct((L * H, B, S, S), jnp.float32),  # attention probs
        jax.ShapeDtypeStruct((B, C), jnp.float32),            # logits
        jax.ShapeDtypeStruct((1, 1), jnp.float32),            # CE loss
        jax.ShapeDtypeStruct((1, 1), jnp.float32),            # negative entropy
    )

    hid2d, attn_lh, logits, ce, negent = pl.pallas_call(
        fused_forward_kernel,
        out_shape=out_shapes,
        compiler_params=pltpu.CompilerParams(vmem_limit_bytes=32 * 1024 * 1024),
    )(hidden2d, maskf, onehot,
      params["w_attn"], params["b_qkv"], params["w_ffn1"], params["c1"],
      params["w_ffn2"], params["vecs"], params["w_head"], params["b_head"])

    last_hidden = hid2d.reshape(B, S, D)
    attentions = attn_lh.reshape(L, H, B, S, S).transpose(0, 2, 1, 3, 4)  # [L,B,H,S,S]
    ce_loss = ce[0, 0]
    negative_entropy = negent[0, 0]
    reg_loss = EAR_REG_STRENGTH * negative_entropy
    loss = reg_loss + ce_loss

    model_output = {"logits": logits, "loss": ce_loss,
                    "attentions": attentions, "last_hidden_state": last_hidden}
    return EARClassificationOutput(model_output=model_output,
                                   negative_entropy=negative_entropy,
                                   reg_loss=reg_loss, loss=loss)


# --------------------- numpy reference for the EAR term --------------------
def ref_negative_entropy(att_stack, mask):
    pool = att_stack.mean(2)                               # [L, B, S, S]
    ents = []
    for b in range(mask.shape[0]):
        mb = mask[b].astype(bool)
        sample = pool[:, b][:, mb, :][:, :, mb]            # [L, s, s]
        x = sample - sample.max(-1, keepdims=True)
        e = np.exp(x)
        den = e.sum(-1, keepdims=True)
        p = e / den
        logp = x - np.log(den)
        neg_ent = (p * logp).sum(-1)                       # [L, s]
        ents.append(neg_ent.mean(-1).sum(0))
    return float(np.mean(ents))


# -------------------------------- main --------------------------------------
if __name__ == "__main__":
    key = jax.random.PRNGKey(0)
    k_params, k_ids = jax.random.split(key)

    params = init_params(k_params)
    input_ids = jax.random.randint(k_ids, (B, S), 0, VOCAB, dtype=jnp.int32)
    attention_mask = jnp.array([[1, 1, 1, 1, 1, 1, 1, 1],
                                [1, 1, 1, 1, 1, 0, 0, 0]], dtype=jnp.int32)
    labels = jnp.array([0, 1], dtype=jnp.int32)

    out = jax.jit(ear_forward)(params, input_ids, attention_mask, labels)
    jax.block_until_ready(out.loss)

    # sanity check of the EAR regularizer against a numpy replica of the torch code
    att_np = np.asarray(out.model_output["attentions"])
    ref_ent = ref_negative_entropy(att_np, np.asarray(attention_mask))
    np.testing.assert_allclose(float(out.negative_entropy), ref_ent,
                               rtol=1e-4, atol=1e-5)
    assert np.isfinite(float(out.loss))
    assert np.isclose(float(out.loss),
                      float(out.reg_loss) + float(out.model_output["loss"]),
                      rtol=1e-6, atol=1e-6)

    print("KERNEL_OK")
</pallas_src>

<mosaic_0001>
module attributes {stable_mosaic.version = 11 : i64} {
  func.func @fused_forward_kernel(%arg0: memref<16x32xf32, #tpu.memory_space<vmem>>, %arg1: memref<2x8xf32, #tpu.memory_space<vmem>>, %arg2: memref<2x2xf32, #tpu.memory_space<vmem>>, %arg3: memref<2x32x128xf32, #tpu.memory_space<vmem>>, %arg4: memref<2x1x96xf32, #tpu.memory_space<vmem>>, %arg5: memref<2x32x64xf32, #tpu.memory_space<vmem>>, %arg6: memref<2x1x64xf32, #tpu.memory_space<vmem>>, %arg7: memref<2x64x32xf32, #tpu.memory_space<vmem>>, %arg8: memref<2x6x32xf32, #tpu.memory_space<vmem>>, %arg9: memref<32x34xf32, #tpu.memory_space<vmem>>, %arg10: memref<1x34xf32, #tpu.memory_space<vmem>>, %arg11: memref<16x32xf32, #tpu.memory_space<vmem>>, %arg12: memref<8x2x8x8xf32, #tpu.memory_space<vmem>>, %arg13: memref<2x2xf32, #tpu.memory_space<vmem>>, %arg14: memref<1x1xf32, #tpu.memory_space<vmem>>, %arg15: memref<1x1xf32, #tpu.memory_space<vmem>>) attributes {dimension_semantics = [], scalar_prefetch = 0 : i64, scratch_operands = 0 : i64, tpu.core_type = #tpu.core_type<tc>} {
    %c0 = arith.constant 0 : index
    %c0_0 = arith.constant 0 : index
    %0 = vector.load %arg0[%c0, %c0_0] : memref<16x32xf32, #tpu.memory_space<vmem>>, vector<16x32xf32>
    %c0_1 = arith.constant 0 : index
    %c0_2 = arith.constant 0 : index
    %1 = vector.load %arg1[%c0_1, %c0_2] : memref<2x8xf32, #tpu.memory_space<vmem>>, vector<2x8xf32>
    %cst = arith.constant 1.000000e+00 : f32
    %2 = vector.broadcast %cst : f32 to vector<2x8xf32>
    %3 = arith.subf %2, %1 : vector<2x8xf32>
    %cst_3 = arith.constant -1.000000e+09 : f32
    %4 = vector.broadcast %cst_3 : f32 to vector<2x8xf32>
    %5 = arith.mulf %3, %4 : vector<2x8xf32>
    %6 = vector.shape_cast %5 : vector<2x8xf32> to vector<2x1x8xf32>
    %7 = vector.shape_cast %1 : vector<2x8xf32> to vector<2x1x8xf32>
    %cst_4 = arith.constant dense<0.000000e+00> : vector<2xf32>
    %8 = vector.multi_reduction <add>, %1, %cst_4 [1] : vector<2x8xf32> to vector<2xf32>
    %9 = vector.shape_cast %8 : vector<2xf32> to vector<2x1xf32>
    %cst_5 = arith.constant 1.000000e+00 : f32
    %10 = vector.broadcast %cst_5 : f32 to vector<2x1xf32>
    %11 = arith.maximumf %9, %10 : vector<2x1xf32>
    %cst_6 = arith.constant 0.000000e+00 : f32
    %12 = vector.broadcast %cst_6 : f32 to vector<2x1xf32>
    %c0_7 = arith.constant 0 : index
    %c0_8 = arith.constant 0 : index
    %c0_9 = arith.constant 0 : index
    %13 = vector.load %arg3[%c0_7, %c0_8, %c0_9] : memref<2x32x128xf32, #tpu.memory_space<vmem>>, vector<1x32x128xf32>
    %14 = vector.shape_cast %13 : vector<1x32x128xf32> to vector<32x128xf32>
    %15 = vector.extract_strided_slice %14 {offsets = [0, 0], sizes = [32, 96], strides = [1, 1]} : vector<32x128xf32> to vector<32x96xf32>
    %16 = vector.extract_strided_slice %14 {offsets = [0, 96], sizes = [32, 32], strides = [1, 1]} : vector<32x128xf32> to vector<32x32xf32>
    %c0_10 = arith.constant 0 : index
    %c0_11 = arith.constant 0 : index
    %c0_12 = arith.constant 0 : index
    %17 = vector.load %arg4[%c0_10, %c0_11, %c0_12] : memref<2x1x96xf32, #tpu.memory_space<vmem>>, vector<1x1x96xf32>
    %18 = vector.shape_cast %17 : vector<1x1x96xf32> to vector<1x96xf32>
    %c0_13 = arith.constant 0 : index
    %c0_14 = arith.constant 0 : index
    %c0_15 = arith.constant 0 : index
    %19 = vector.load %arg5[%c0_13, %c0_14, %c0_15] : memref<2x32x64xf32, #tpu.memory_space<vmem>>, vector<1x32x64xf32>
    %20 = vector.shape_cast %19 : vector<1x32x64xf32> to vector<32x64xf32>
    %c0_16 = arith.constant 0 : index
    %c0_17 = arith.constant 0 : index
    %c0_18 = arith.constant 0 : index
    %21 = vector.load %arg6[%c0_16, %c0_17, %c0_18] : memref<2x1x64xf32, #tpu.memory_space<vmem>>, vector<1x1x64xf32>
    %22 = vector.shape_cast %21 : vector<1x1x64xf32> to vector<1x64xf32>
    %c0_19 = arith.constant 0 : index
    %c0_20 = arith.constant 0 : index
    %c0_21 = arith.constant 0 : index
    %23 = vector.load %arg7[%c0_19, %c0_20, %c0_21] : memref<2x64x32xf32, #tpu.memory_space<vmem>>, vector<1x64x32xf32>
    %24 = vector.shape_cast %23 : vector<1x64x32xf32> to vector<64x32xf32>
    %c0_22 = arith.constant 0 : index
    %c0_23 = arith.constant 0 : index
    %c0_24 = arith.constant 0 : index
    %25 = vector.load %arg8[%c0_22, %c0_23, %c0_24] : memref<2x6x32xf32, #tpu.memory_space<vmem>>, vector<1x6x32xf32>
    %26 = vector.shape_cast %25 : vector<1x6x32xf32> to vector<6x32xf32>
    %27 = vector.extract_strided_slice %26 {offsets = [0, 0], sizes = [1, 32], strides = [1, 1]} : vector<6x32xf32> to vector<1x32xf32>
    %28 = vector.extract_strided_slice %26 {offsets = [1, 0], sizes = [1, 32], strides = [1, 1]} : vector<6x32xf32> to vector<1x32xf32>
    %29 = vector.extract_strided_slice %26 {offsets = [2, 0], sizes = [1, 32], strides = [1, 1]} : vector<6x32xf32> to vector<1x32xf32>
    %30 = vector.extract_strided_slice %26 {offsets = [3, 0], sizes = [1, 32], strides = [1, 1]} : vector<6x32xf32> to vector<1x32xf32>
    %31 = vector.extract_strided_slice %26 {offsets = [4, 0], sizes = [1, 32], strides = [1, 1]} : vector<6x32xf32> to vector<1x32xf32>
    %32 = vector.extract_strided_slice %26 {offsets = [5, 0], sizes = [1, 32], strides = [1, 1]} : vector<6x32xf32> to vector<1x32xf32>
    %cst_25 = arith.constant dense<0.000000e+00> : vector<16x96xf32>
    %33 = tpu.matmul %0, %15, %cst_25 {dimension_numbers = #tpu.dot_dimension_numbers<[1], [0], [0], [1], [0, 0, 1, 1], [], []>} : vector<16x32xf32>, vector<32x96xf32>, vector<16x96xf32> -> vector<16x96xf32>
    %34 = vector.broadcast %18 : vector<1x96xf32> to vector<16x96xf32>
    %35 = arith.addf %33, %34 : vector<16x96xf32>
    %cst_26 = arith.constant 0.000000e+00 : f32
    %36 = vector.broadcast %cst_26 : f32 to vector<2x8x8xf32>
    %37 = vector.extract_strided_slice %35 {offsets = [0, 0], sizes = [16, 8], strides = [1, 1]} : vector<16x96xf32> to vector<16x8xf32>
    %38 = vector.shape_cast %37 : vector<16x8xf32> to vector<2x8x8xf32>
    %39 = vector.extract_strided_slice %35 {offsets = [0, 32], sizes = [16, 8], strides = [1, 1]} : vector<16x96xf32> to vector<16x8xf32>
    %40 = vector.shape_cast %39 : vector<16x8xf32> to vector<2x8x8xf32>
    %41 = vector.extract_strided_slice %35 {offsets = [0, 64], sizes = [16, 8], strides = [1, 1]} : vector<16x96xf32> to vector<16x8xf32>
    %42 = vector.shape_cast %41 : vector<16x8xf32> to vector<2x8x8xf32>
    "tpu.trace_start"() <{level = 10 : i32, message = "bsd,btd->bst"}> : () -> ()
    %cst_27 = arith.constant dense<0.000000e+00> : vector<2x8x8xf32>
    %43 = tpu.matmul %38, %40, %cst_27 {dimension_numbers = #tpu.dot_dimension_numbers<[2], [2], [1], [1], [0, 0, 0, 1, 1, 1], [0], [0]>} : vector<2x8x8xf32>, vector<2x8x8xf32>, vector<2x8x8xf32> -> vector<2x8x8xf32>
    "tpu.trace_stop"() : () -> ()
    %cst_28 = arith.constant 0.353553385 : f32
    %44 = vector.broadcast %cst_28 : f32 to vector<2x8x8xf32>
    %45 = arith.mulf %43, %44 : vector<2x8x8xf32>
    %46 = vector.broadcast %6 : vector<2x1x8xf32> to vector<2x8x8xf32>
    %47 = arith.addf %45, %46 : vector<2x8x8xf32>
    %cst_29 = arith.constant dense<0xFF800000> : vector<2x8xf32>
    %48 = vector.multi_reduction <maximumf>, %47, %cst_29 [2] : vector<2x8x8xf32> to vector<2x8xf32>
    %49 = vector.shape_cast %48 : vector<2x8xf32> to vector<2x8x1xf32>
    %50 = vector.broadcast %49 : vector<2x8x1xf32> to vector<2x8x8xf32>
    %51 = arith.subf %47, %50 : vector<2x8x8xf32>
    %52 = math.exp %51 : vector<2x8x8xf32>
    %cst_30 = arith.constant dense<0.000000e+00> : vector<2x8xf32>
    %53 = vector.multi_reduction <add>, %52, %cst_30 [2] : vector<2x8x8xf32> to vector<2x8xf32>
    %54 = vector.shape_cast %53 : vector<2x8xf32> to vector<2x8x1xf32>
    %55 = tpu.reciprocal %54 {approx = true} : vector<2x8x1xf32> -> vector<2x8x1xf32>
    %56 = vector.broadcast %55 : vector<2x8x1xf32> to vector<2x8x8xf32>
    %57 = arith.mulf %52, %56 : vector<2x8x8xf32>
    %c0_31 = arith.constant 0 : index
    %c0_32 = arith.constant 0 : index
    %c0_33 = arith.constant 0 : index
    %c0_34 = arith.constant 0 : index
    %58 = vector.load %arg12[%c0_31, %c0_32, %c0_33, %c0_34] : memref<8x2x8x8xf32, #tpu.memory_space<vmem>>, vector<1x2x8x8xf32>
    %59 = vector.shape_cast %58 : vector<1x2x8x8xf32> to vector<2x8x8xf32>
    %60 = vector.shape_cast %57 : vector<2x8x8xf32> to vector<1x2x8x8xf32>
    tpu.vector_store %arg12[%c0_31, %c0_32, %c0_33, %c0_34], %60 {strides = array<i32>} : memref<8x2x8x8xf32, #tpu.memory_space<vmem>>, vector<1x2x8x8xf32>,
    %61 = arith.addf %36, %57 : vector<2x8x8xf32>
    "tpu.trace_start"() <{level = 10 : i32, message = "bst,btd->bsd"}> : () -> ()
    %cst_35 = arith.constant dense<0.000000e+00> : vector<2x8x8xf32>
    %62 = tpu.matmul %57, %42, %cst_35 {dimension_numbers = #tpu.dot_dimension_numbers<[2], [1], [1], [2], [0, 0, 0, 1, 1, 2], [0], [0]>} : vector<2x8x8xf32>, vector<2x8x8xf32>, vector<2x8x8xf32> -> vector<2x8x8xf32>
    "tpu.trace_stop"() : () -> ()
    %63 = vector.shape_cast %62 : vector<2x8x8xf32> to vector<16x8xf32>
    %64 = vector.extract_strided_slice %35 {offsets = [0, 8], sizes = [16, 8], strides = [1, 1]} : vector<16x96xf32> to vector<16x8xf32>
    %65 = vector.shape_cast %64 : vector<16x8xf32> to vector<2x8x8xf32>
    %66 = vector.extract_strided_slice %35 {offsets = [0, 40], sizes = [16, 8], strides = [1, 1]} : vector<16x96xf32> to vector<16x8xf32>
    %67 = vector.shape_cast %66 : vector<16x8xf32> to vector<2x8x8xf32>
    %68 = vector.extract_strided_slice %35 {offsets = [0, 72], sizes = [16, 8], strides = [1, 1]} : vector<16x96xf32> to vector<16x8xf32>
    %69 = vector.shape_cast %68 : vector<16x8xf32> to vector<2x8x8xf32>
    "tpu.trace_start"() <{level = 10 : i32, message = "bsd,btd->bst"}> : () -> ()
    %cst_36 = arith.constant dense<0.000000e+00> : vector<2x8x8xf32>
    %70 = tpu.matmul %65, %67, %cst_36 {dimension_numbers = #tpu.dot_dimension_numbers<[2], [2], [1], [1], [0, 0, 0, 1, 1, 1], [0], [0]>} : vector<2x8x8xf32>, vector<2x8x8xf32>, vector<2x8x8xf32> -> vector<2x8x8xf32>
    "tpu.trace_stop"() : () -> ()
    %cst_37 = arith.constant 0.353553385 : f32
    %71 = vector.broadcast %cst_37 : f32 to vector<2x8x8xf32>
    %72 = arith.mulf %70, %71 : vector<2x8x8xf32>
    %73 = vector.broadcast %6 : vector<2x1x8xf32> to vector<2x8x8xf32>
    %74 = arith.addf %72, %73 : vector<2x8x8xf32>
    %cst_38 = arith.constant dense<0xFF800000> : vector<2x8xf32>
    %75 = vector.multi_reduction <maximumf>, %74, %cst_38 [2] : vector<2x8x8xf32> to vector<2x8xf32>
    %76 = vector.shape_cast %75 : vector<2x8xf32> to vector<2x8x1xf32>
    %77 = vector.broadcast %76 : vector<2x8x1xf32> to vector<2x8x8xf32>
    %78 = arith.subf %74, %77 : vector<2x8x8xf32>
    %79 = math.exp %78 : vector<2x8x8xf32>
    %cst_39 = arith.constant dense<0.000000e+00> : vector<2x8xf32>
    %80 = vector.multi_reduction <add>, %79, %cst_39 [2] : vector<2x8x8xf32> to vector<2x8xf32>
    %81 = vector.shape_cast %80 : vector<2x8xf32> to vector<2x8x1xf32>
    %82 = tpu.reciprocal %81 {approx = true} : vector<2x8x1xf32> -> vector<2x8x1xf32>
    %83 = vector.broadcast %82 : vector<2x8x1xf32> to vector<2x8x8xf32>
    %84 = arith.mulf %79, %83 : vector<2x8x8xf32>
    %c1 = arith.constant 1 : index
    %c0_40 = arith.constant 0 : index
    %c0_41 = arith.constant 0 : index
    %c0_42 = arith.constant 0 : index
    %85 = vector.load %arg12[%c1, %c0_40, %c0_41, %c0_42] : memref<8x2x8x8xf32, #tpu.memory_space<vmem>>, vector<1x2x8x8xf32>
    %86 = vector.shape_cast %85 : vector<1x2x8x8xf32> to vector<2x8x8xf32>
    %87 = vector.shape_cast %84 : vector<2x8x8xf32> to vector<1x2x8x8xf32>
    tpu.vector_store %arg12[%c1, %c0_40, %c0_41, %c0_42], %87 {strides = array<i32>} : memref<8x2x8x8xf32, #tpu.memory_space<vmem>>, vector<1x2x8x8xf32>,
    %88 = arith.addf %61, %84 : vector<2x8x8xf32>
    "tpu.trace_start"() <{level = 10 : i32, message = "bst,btd->bsd"}> : () -> ()
    %cst_43 = arith.constant dense<0.000000e+00> : vector<2x8x8xf32>
    %89 = tpu.matmul %84, %69, %cst_43 {dimension_numbers = #tpu.dot_dimension_numbers<[2], [1], [1], [2], [0, 0, 0, 1, 1, 2], [0], [0]>} : vector<2x8x8xf32>, vector<2x8x8xf32>, vector<2x8x8xf32> -> vector<2x8x8xf32>
    "tpu.trace_stop"() : () -> ()
    %90 = vector.shape_cast %89 : vector<2x8x8xf32> to vector<16x8xf32>
    %91 = vector.extract_strided_slice %35 {offsets = [0, 16], sizes = [16, 8], strides = [1, 1]} : vector<16x96xf32> to vector<16x8xf32>
    %92 = vector.shape_cast %91 : vector<16x8xf32> to vector<2x8x8xf32>
    %93 = vector.extract_strided_slice %35 {offsets = [0, 48], sizes = [16, 8], strides = [1, 1]} : vector<16x96xf32> to vector<16x8xf32>
    %94 = vector.shape_cast %93 : vector<16x8xf32> to vector<2x8x8xf32>
    %95 = vector.extract_strided_slice %35 {offsets = [0, 80], sizes = [16, 8], strides = [1, 1]} : vector<16x96xf32> to vector<16x8xf32>
    %96 = vector.shape_cast %95 : vector<16x8xf32> to vector<2x8x8xf32>
    "tpu.trace_start"() <{level = 10 : i32, message = "bsd,btd->bst"}> : () -> ()
    %cst_44 = arith.constant dense<0.000000e+00> : vector<2x8x8xf32>
    %97 = tpu.matmul %92, %94, %cst_44 {dimension_numbers = #tpu.dot_dimension_numbers<[2], [2], [1], [1], [0, 0, 0, 1, 1, 1], [0], [0]>} : vector<2x8x8xf32>, vector<2x8x8xf32>, vector<2x8x8xf32> -> vector<2x8x8xf32>
    "tpu.trace_stop"() : () -> ()
    %cst_45 = arith.constant 0.353553385 : f32
    %98 = vector.broadcast %cst_45 : f32 to vector<2x8x8xf32>
    %99 = arith.mulf %97, %98 : vector<2x8x8xf32>
    %100 = vector.broadcast %6 : vector<2x1x8xf32> to vector<2x8x8xf32>
    %101 = arith.addf %99, %100 : vector<2x8x8xf32>
    %cst_46 = arith.constant dense<0xFF800000> : vector<2x8xf32>
    %102 = vector.multi_reduction <maximumf>, %101, %cst_46 [2] : vector<2x8x8xf32> to vector<2x8xf32>
    %103 = vector.shape_cast %102 : vector<2x8xf32> to vector<2x8x1xf32>
    %104 = vector.broadcast %103 : vector<2x8x1xf32> to vector<2x8x8xf32>
    %105 = arith.subf %101, %104 : vector<2x8x8xf32>
    %106 = math.exp %105 : vector<2x8x8xf32>
    %cst_47 = arith.constant dense<0.000000e+00> : vector<2x8xf32>
    %107 = vector.multi_reduction <add>, %106, %cst_47 [2] : vector<2x8x8xf32> to vector<2x8xf32>
    %108 = vector.shape_cast %107 : vector<2x8xf32> to vector<2x8x1xf32>
    %109 = tpu.reciprocal %108 {approx = true} : vector<2x8x1xf32> -> vector<2x8x1xf32>
    %110 = vector.broadcast %109 : vector<2x8x1xf32> to vector<2x8x8xf32>
    %111 = arith.mulf %106, %110 : vector<2x8x8xf32>
    %c2 = arith.constant 2 : index
    %c0_48 = arith.constant 0 : index
    %c0_49 = arith.constant 0 : index
    %c0_50 = arith.constant 0 : index
    %112 = vector.load %arg12[%c2, %c0_48, %c0_49, %c0_50] : memref<8x2x8x8xf32, #tpu.memory_space<vmem>>, vector<1x2x8x8xf32>
    %113 = vector.shape_cast %112 : vector<1x2x8x8xf32> to vector<2x8x8xf32>
    %114 = vector.shape_cast %111 : vector<2x8x8xf32> to vector<1x2x8x8xf32>
    tpu.vector_store %arg12[%c2, %c0_48, %c0_49, %c0_50], %114 {strides = array<i32>} : memref<8x2x8x8xf32, #tpu.memory_space<vmem>>, vector<1x2x8x8xf32>,
    %115 = arith.addf %88, %111 : vector<2x8x8xf32>
    "tpu.trace_start"() <{level = 10 : i32, message = "bst,btd->bsd"}> : () -> ()
    %cst_51 = arith.constant dense<0.000000e+00> : vector<2x8x8xf32>
    %116 = tpu.matmul %111, %96, %cst_51 {dimension_numbers = #tpu.dot_dimension_numbers<[2], [1], [1], [2], [0, 0, 0, 1, 1, 2], [0], [0]>} : vector<2x8x8xf32>, vector<2x8x8xf32>, vector<2x8x8xf32> -> vector<2x8x8xf32>
    "tpu.trace_stop"() : () -> ()
    %117 = vector.shape_cast %116 : vector<2x8x8xf32> to vector<16x8xf32>
    %118 = vector.extract_strided_slice %35 {offsets = [0, 24], sizes = [16, 8], strides = [1, 1]} : vector<16x96xf32> to vector<16x8xf32>
    %119 = vector.shape_cast %118 : vector<16x8xf32> to vector<2x8x8xf32>
    %120 = vector.extract_strided_slice %35 {offsets = [0, 56], sizes = [16, 8], strides = [1, 1]} : vector<16x96xf32> to vector<16x8xf32>
    %121 = vector.shape_cast %120 : vector<16x8xf32> to vector<2x8x8xf32>
    %122 = vector.extract_strided_slice %35 {offsets = [0, 88], sizes = [16, 8], strides = [1, 1]} : vector<16x96xf32> to vector<16x8xf32>
    %123 = vector.shape_cast %122 : vector<16x8xf32> to vector<2x8x8xf32>
    "tpu.trace_start"() <{level = 10 : i32, message = "bsd,btd->bst"}> : () -> ()
    %cst_52 = arith.constant dense<0.000000e+00> : vector<2x8x8xf32>
    %124 = tpu.matmul %119, %121, %cst_52 {dimension_numbers = #tpu.dot_dimension_numbers<[2], [2], [1], [1], [0, 0, 0, 1, 1, 1], [0], [0]>} : vector<2x8x8xf32>, vector<2x8x8xf32>, vector<2x8x8xf32> -> vector<2x8x8xf32>
    "tpu.trace_stop"() : () -> ()
    %cst_53 = arith.constant 0.353553385 : f32
    %125 = vector.broadcast %cst_53 : f32 to vector<2x8x8xf32>
    %126 = arith.mulf %124, %125 : vector<2x8x8xf32>
    %127 = vector.broadcast %6 : vector<2x1x8xf32> to vector<2x8x8xf32>
    %128 = arith.addf %126, %127 : vector<2x8x8xf32>
    %cst_54 = arith.constant dense<0xFF800000> : vector<2x8xf32>
    %129 = vector.multi_reduction <maximumf>, %128, %cst_54 [2] : vector<2x8x8xf32> to vector<2x8xf32>
    %130 = vector.shape_cast %129 : vector<2x8xf32> to vector<2x8x1xf32>
    %131 = vector.broadcast %130 : vector<2x8x1xf32> to vector<2x8x8xf32>
    %132 = arith.subf %128, %131 : vector<2x8x8xf32>
    %133 = math.exp %132 : vector<2x8x8xf32>
    %cst_55 = arith.constant dense<0.000000e+00> : vector<2x8xf32>
    %134 = vector.multi_reduction <add>, %133, %cst_55 [2] : vector<2x8x8xf32> to vector<2x8xf32>
    %135 = vector.shape_cast %134 : vector<2x8xf32> to vector<2x8x1xf32>
    %136 = tpu.reciprocal %135 {approx = true} : vector<2x8x1xf32> -> vector<2x8x1xf32>
    %137 = vector.broadcast %136 : vector<2x8x1xf32> to vector<2x8x8xf32>
    %138 = arith.mulf %133, %137 : vector<2x8x8xf32>
    %c3 = arith.constant 3 : index
    %c0_56 = arith.constant 0 : index
    %c0_57 = arith.constant 0 : index
    %c0_58 = arith.constant 0 : index
    %139 = vector.load %arg12[%c3, %c0_56, %c0_57, %c0_58] : memref<8x2x8x8xf32, #tpu.memory_space<vmem>>, vector<1x2x8x8xf32>
    %140 = vector.shape_cast %139 : vector<1x2x8x8xf32> to vector<2x8x8xf32>
    %141 = vector.shape_cast %138 : vector<2x8x8xf32> to vector<1x2x8x8xf32>
    tpu.vector_store %arg12[%c3, %c0_56, %c0_57, %c0_58], %141 {strides = array<i32>} : memref<8x2x8x8xf32, #tpu.memory_space<vmem>>, vector<1x2x8x8xf32>,
    %142 = arith.addf %115, %138 : vector<2x8x8xf32>
    "tpu.trace_start"() <{level = 10 : i32, message = "bst,btd->bsd"}> : () -> ()
    %cst_59 = arith.constant dense<0.000000e+00> : vector<2x8x8xf32>
    %143 = tpu.matmul %138, %123, %cst_59 {dimension_numbers = #tpu.dot_dimension_numbers<[2], [1], [1], [2], [0, 0, 0, 1, 1, 2], [0], [0]>} : vector<2x8x8xf32>, vector<2x8x8xf32>, vector<2x8x8xf32> -> vector<2x8x8xf32>
    "tpu.trace_stop"() : () -> ()
    %144 = vector.shape_cast %143 : vector<2x8x8xf32> to vector<16x8xf32>
    %145 = tpu.concatenate %63, %90, %117, %144 in 1 : vector<16x8xf32>, vector<16x8xf32>, vector<16x8xf32>, vector<16x8xf32> -> vector<16x32xf32>
    %cst_60 = arith.constant dense<0.000000e+00> : vector<16x32xf32>
    %146 = tpu.matmul %145, %16, %cst_60 {dimension_numbers = #tpu.dot_dimension_numbers<[1], [0], [0], [1], [0, 0, 1, 1], [], []>} : vector<16x32xf32>, vector<32x32xf32>, vector<16x32xf32> -> vector<16x32xf32>
    %147 = vector.broadcast %27 : vector<1x32xf32> to vector<16x32xf32>
    %148 = arith.addf %146, %147 : vector<16x32xf32>
    %149 = arith.addf %0, %148 : vector<16x32xf32>
    %cst_61 = arith.constant dense<0.000000e+00> : vector<16xf32>
    %150 = vector.multi_reduction <add>, %149, %cst_61 [1] : vector<16x32xf32> to vector<16xf32>
    %151 = vector.shape_cast %150 : vector<16xf32> to vector<16x1xf32>
    %cst_62 = arith.constant 3.200000e+01 : f32
    %152 = vector.broadcast %cst_62 : f32 to vector<16x1xf32>
    %153 = arith.divf %151, %152 : vector<16x1xf32>
    %154 = vector.broadcast %153 : vector<16x1xf32> to vector<16x32xf32>
    %155 = arith.subf %149, %154 : vector<16x32xf32>
    %156 = arith.mulf %155, %155 : vector<16x32xf32>
    %cst_63 = arith.constant dense<0.000000e+00> : vector<16xf32>
    %157 = vector.multi_reduction <add>, %156, %cst_63 [1] : vector<16x32xf32> to vector<16xf32>
    %158 = vector.shape_cast %157 : vector<16xf32> to vector<16x1xf32>
    %cst_64 = arith.constant 3.200000e+01 : f32
    %159 = vector.broadcast %cst_64 : f32 to vector<16x1xf32>
    %160 = arith.divf %158, %159 : vector<16x1xf32>
    %161 = vector.broadcast %153 : vector<16x1xf32> to vector<16x32xf32>
    %162 = arith.subf %149, %161 : vector<16x32xf32>
    %cst_65 = arith.constant 9.99999996E-13 : f32
    %163 = vector.broadcast %cst_65 : f32 to vector<16x1xf32>
    %164 = arith.addf %160, %163 : vector<16x1xf32>
    %165 = math.rsqrt %164 : vector<16x1xf32>
    %166 = vector.broadcast %165 : vector<16x1xf32> to vector<16x32xf32>
    %167 = arith.mulf %162, %166 : vector<16x32xf32>
    %168 = vector.broadcast %28 : vector<1x32xf32> to vector<16x32xf32>
    %169 = arith.mulf %167, %168 : vector<16x32xf32>
    %170 = vector.broadcast %29 : vector<1x32xf32> to vector<16x32xf32>
    %171 = arith.addf %169, %170 : vector<16x32xf32>
    %cst_66 = arith.constant dense<0.000000e+00> : vector<16x64xf32>
    %172 = tpu.matmul %171, %20, %cst_66 {dimension_numbers = #tpu.dot_dimension_numbers<[1], [0], [0], [1], [0, 0, 1, 1], [], []>} : vector<16x32xf32>, vector<32x64xf32>, vector<16x64xf32> -> vector<16x64xf32>
    %173 = vector.broadcast %22 : vector<1x64xf32> to vector<16x64xf32>
    %174 = arith.addf %172, %173 : vector<16x64xf32>
    %cst_67 = arith.constant 5.000000e-01 : f32
    %175 = vector.broadcast %cst_67 : f32 to vector<16x64xf32>
    %176 = arith.mulf %175, %174 : vector<16x64xf32>
    %177 = arith.mulf %174, %174 : vector<16x64xf32>
    %178 = arith.mulf %174, %177 : vector<16x64xf32>
    %cst_68 = arith.constant 4.471500e-02 : f32
    %179 = vector.broadcast %cst_68 : f32 to vector<16x64xf32>
    %180 = arith.mulf %179, %178 : vector<16x64xf32>
    %181 = arith.addf %174, %180 : vector<16x64xf32>
    %cst_69 = arith.constant 0.797884583 : f32
    %182 = vector.broadcast %cst_69 : f32 to vector<16x64xf32>
    %183 = arith.mulf %182, %181 : vector<16x64xf32>
    %184 = math.tanh %183 : vector<16x64xf32>
    %cst_70 = arith.constant 1.000000e+00 : f32
    %185 = vector.broadcast %cst_70 : f32 to vector<16x64xf32>
    %186 = arith.addf %185, %184 : vector<16x64xf32>
    %187 = arith.mulf %176, %186 : vector<16x64xf32>
    %cst_71 = arith.constant dense<0.000000e+00> : vector<16x32xf32>
    %188 = tpu.matmul %187, %24, %cst_71 {dimension_numbers = #tpu.dot_dimension_numbers<[1], [0], [0], [1], [0, 0, 1, 1], [], []>} : vector<16x64xf32>, vector<64x32xf32>, vector<16x32xf32> -> vector<16x32xf32>
    %189 = vector.broadcast %30 : vector<1x32xf32> to vector<16x32xf32>
    %190 = arith.addf %188, %189 : vector<16x32xf32>
    %191 = arith.addf %171, %190 : vector<16x32xf32>
    %cst_72 = arith.constant dense<0.000000e+00> : vector<16xf32>
    %192 = vector.multi_reduction <add>, %191, %cst_72 [1] : vector<16x32xf32> to vector<16xf32>
    %193 = vector.shape_cast %192 : vector<16xf32> to vector<16x1xf32>
    %cst_73 = arith.constant 3.200000e+01 : f32
    %194 = vector.broadcast %cst_73 : f32 to vector<16x1xf32>
    %195 = arith.divf %193, %194 : vector<16x1xf32>
    %196 = vector.broadcast %195 : vector<16x1xf32> to vector<16x32xf32>
    %197 = arith.subf %191, %196 : vector<16x32xf32>
    %198 = arith.mulf %197, %197 : vector<16x32xf32>
    %cst_74 = arith.constant dense<0.000000e+00> : vector<16xf32>
    %199 = vector.multi_reduction <add>, %198, %cst_74 [1] : vector<16x32xf32> to vector<16xf32>
    %200 = vector.shape_cast %199 : vector<16xf32> to vector<16x1xf32>
    %cst_75 = arith.constant 3.200000e+01 : f32
    %201 = vector.broadcast %cst_75 : f32 to vector<16x1xf32>
    %202 = arith.divf %200, %201 : vector<16x1xf32>
    %203 = vector.broadcast %195 : vector<16x1xf32> to vector<16x32xf32>
    %204 = arith.subf %191, %203 : vector<16x32xf32>
    %cst_76 = arith.constant 9.99999996E-13 : f32
    %205 = vector.broadcast %cst_76 : f32 to vector<16x1xf32>
    %206 = arith.addf %202, %205 : vector<16x1xf32>
    %207 = math.rsqrt %206 : vector<16x1xf32>
    %208 = vector.broadcast %207 : vector<16x1xf32> to vector<16x32xf32>
    %209 = arith.mulf %204, %208 : vector<16x32xf32>
    %210 = vector.broadcast %31 : vector<1x32xf32> to vector<16x32xf32>
    %211 = arith.mulf %209, %210 : vector<16x32xf32>
    %212 = vector.broadcast %32 : vector<1x32xf32> to vector<16x32xf32>
    %213 = arith.addf %211, %212 : vector<16x32xf32>
    %cst_77 = arith.constant 2.500000e-01 : f32
    %214 = vector.broadcast %cst_77 : f32 to vector<2x8x8xf32>
    %215 = arith.mulf %142, %214 : vector<2x8x8xf32>
    %cst_78 = arith.constant 0.000000e+00 : f32
    %216 = vector.broadcast %cst_78 : f32 to vector<2x1x8xf32>
    %217 = arith.cmpf ogt, %7, %216 : vector<2x1x8xf32>
    %cst_79 = arith.constant -1.000000e+09 : f32
    %218 = vector.shape_cast %217 : vector<2x1x8xi1> to vector<2x1x8xi1>
    %219 = vector.broadcast %218 : vector<2x1x8xi1> to vector<2x8x8xi1>
    %220 = vector.broadcast %cst_79 : f32 to vector<2x8x8xf32>
    %221 = arith.select %219, %215, %220 : vector<2x8x8xi1>, vector<2x8x8xf32>
    %cst_80 = arith.constant dense<0xFF800000> : vector<2x8xf32>
    %222 = vector.multi_reduction <maximumf>, %221, %cst_80 [2] : vector<2x8x8xf32> to vector<2x8xf32>
    %223 = vector.shape_cast %222 : vector<2x8xf32> to vector<2x8x1xf32>
    %224 = vector.broadcast %223 : vector<2x8x1xf32> to vector<2x8x8xf32>
    %225 = arith.subf %221, %224 : vector<2x8x8xf32>
    %226 = math.exp %225 : vector<2x8x8xf32>
    %227 = vector.broadcast %7 : vector<2x1x8xf32> to vector<2x8x8xf32>
    %228 = arith.mulf %226, %227 : vector<2x8x8xf32>
    %cst_81 = arith.constant dense<0.000000e+00> : vector<2x8xf32>
    %229 = vector.multi_reduction <add>, %228, %cst_81 [2] : vector<2x8x8xf32> to vector<2x8xf32>
    %230 = vector.shape_cast %229 : vector<2x8xf32> to vector<2x8x1xf32>
    %cst_82 = arith.constant 1.000000e-30 : f32
    %231 = vector.broadcast %cst_82 : f32 to vector<2x8x1xf32>
    %232 = arith.maximumf %230, %231 : vector<2x8x1xf32>
    %233 = vector.broadcast %232 : vector<2x8x1xf32> to vector<2x8x8xf32>
    %234 = arith.divf %228, %233 : vector<2x8x8xf32>
    %235 = vector.broadcast %223 : vector<2x8x1xf32> to vector<2x8x8xf32>
    %236 = arith.subf %221, %235 : vector<2x8x8xf32>
    %237 = math.log %232 : vector<2x8x1xf32>
    %238 = vector.broadcast %237 : vector<2x8x1xf32> to vector<2x8x8xf32>
    %239 = arith.subf %236, %238 : vector<2x8x8xf32>
    %cst_83 = arith.constant 0.000000e+00 : f32
    %240 = vector.broadcast %cst_83 : f32 to vector<2x1x8xf32>
    %241 = arith.cmpf ogt, %7, %240 : vector<2x1x8xf32>
    %242 = arith.mulf %234, %239 : vector<2x8x8xf32>
    %cst_84 = arith.constant 0.000000e+00 : f32
    %243 = vector.shape_cast %241 : vector<2x1x8xi1> to vector<2x1x8xi1>
    %244 = vector.broadcast %243 : vector<2x1x8xi1> to vector<2x8x8xi1>
    %245 = vector.broadcast %cst_84 : f32 to vector<2x8x8xf32>
    %246 = arith.select %244, %242, %245 : vector<2x8x8xi1>, vector<2x8x8xf32>
    %cst_85 = arith.constant dense<0.000000e+00> : vector<2x8xf32>
    %247 = vector.multi_reduction <add>, %246, %cst_85 [2] : vector<2x8x8xf32> to vector<2x8xf32>
    %248 = arith.mulf %247, %1 : vector<2x8xf32>
    %cst_86 = arith.constant dense<0.000000e+00> : vector<2xf32>
    %249 = vector.multi_reduction <add>, %248, %cst_86 [1] : vector<2x8xf32> to vector<2xf32>
    %250 = vector.shape_cast %249 : vector<2xf32> to vector<2x1xf32>
    %251 = arith.divf %250, %11 : vector<2x1xf32>
    %252 = arith.addf %12, %251 : vector<2x1xf32>
    %c1_87 = arith.constant 1 : index
    %c0_88 = arith.constant 0 : index
    %c0_89 = arith.constant 0 : index
    %253 = vector.load %arg3[%c1_87, %c0_88, %c0_89] : memref<2x32x128xf32, #tpu.memory_space<vmem>>, vector<1x32x128xf32>
    %254 = vector.shape_cast %253 : vector<1x32x128xf32> to vector<32x128xf32>
    %255 = vector.extract_strided_slice %254 {offsets = [0, 0], sizes = [32, 96], strides = [1, 1]} : vector<32x128xf32> to vector<32x96xf32>
    %256 = vector.extract_strided_slice %254 {offsets = [0, 96], sizes = [32, 32], strides = [1, 1]} : vector<32x128xf32> to vector<32x32xf32>
    %c1_90 = arith.constant 1 : index
    %c0_91 = arith.constant 0 : index
    %c0_92 = arith.constant 0 : index
    %257 = vector.load %arg4[%c1_90, %c0_91, %c0_92] : memref<2x1x96xf32, #tpu.memory_space<vmem>>, vector<1x1x96xf32>
    %258 = vector.shape_cast %257 : vector<1x1x96xf32> to vector<1x96xf32>
    %c1_93 = arith.constant 1 : index
    %c0_94 = arith.constant 0 : index
    %c0_95 = arith.constant 0 : index
    %259 = vector.load %arg5[%c1_93, %c0_94, %c0_95] : memref<2x32x64xf32, #tpu.memory_space<vmem>>, vector<1x32x64xf32>
    %260 = vector.shape_cast %259 : vector<1x32x64xf32> to vector<32x64xf32>
    %c1_96 = arith.constant 1 : index
    %c0_97 = arith.constant 0 : index
    %c0_98 = arith.constant 0 : index
    %261 = vector.load %arg6[%c1_96, %c0_97, %c0_98] : memref<2x1x64xf32, #tpu.memory_space<vmem>>, vector<1x1x64xf32>
    %262 = vector.shape_cast %261 : vector<1x1x64xf32> to vector<1x64xf32>
    %c1_99 = arith.constant 1 : index
    %c0_100 = arith.constant 0 : index
    %c0_101 = arith.constant 0 : index
    %263 = vector.load %arg7[%c1_99, %c0_100, %c0_101] : memref<2x64x32xf32, #tpu.memory_space<vmem>>, vector<1x64x32xf32>
    %264 = vector.shape_cast %263 : vector<1x64x32xf32> to vector<64x32xf32>
    %c1_102 = arith.constant 1 : index
    %c0_103 = arith.constant 0 : index
    %c0_104 = arith.constant 0 : index
    %265 = vector.load %arg8[%c1_102, %c0_103, %c0_104] : memref<2x6x32xf32, #tpu.memory_space<vmem>>, vector<1x6x32xf32>
    %266 = vector.shape_cast %265 : vector<1x6x32xf32> to vector<6x32xf32>
    %267 = vector.extract_strided_slice %266 {offsets = [0, 0], sizes = [1, 32], strides = [1, 1]} : vector<6x32xf32> to vector<1x32xf32>
    %268 = vector.extract_strided_slice %266 {offsets = [1, 0], sizes = [1, 32], strides = [1, 1]} : vector<6x32xf32> to vector<1x32xf32>
    %269 = vector.extract_strided_slice %266 {offsets = [2, 0], sizes = [1, 32], strides = [1, 1]} : vector<6x32xf32> to vector<1x32xf32>
    %270 = vector.extract_strided_slice %266 {offsets = [3, 0], sizes = [1, 32], strides = [1, 1]} : vector<6x32xf32> to vector<1x32xf32>
    %271 = vector.extract_strided_slice %266 {offsets = [4, 0], sizes = [1, 32], strides = [1, 1]} : vector<6x32xf32> to vector<1x32xf32>
    %272 = vector.extract_strided_slice %266 {offsets = [5, 0], sizes = [1, 32], strides = [1, 1]} : vector<6x32xf32> to vector<1x32xf32>
    %cst_105 = arith.constant dense<0.000000e+00> : vector<16x96xf32>
    %273 = tpu.matmul %213, %255, %cst_105 {dimension_numbers = #tpu.dot_dimension_numbers<[1], [0], [0], [1], [0, 0, 1, 1], [], []>} : vector<16x32xf32>, vector<32x96xf32>, vector<16x96xf32> -> vector<16x96xf32>
    %274 = vector.broadcast %258 : vector<1x96xf32> to vector<16x96xf32>
    %275 = arith.addf %273, %274 : vector<16x96xf32>
    %cst_106 = arith.constant 0.000000e+00 : f32
    %276 = vector.broadcast %cst_106 : f32 to vector<2x8x8xf32>
    %277 = vector.extract_strided_slice %275 {offsets = [0, 0], sizes = [16, 8], strides = [1, 1]} : vector<16x96xf32> to vector<16x8xf32>
    %278 = vector.shape_cast %277 : vector<16x8xf32> to vector<2x8x8xf32>
    %279 = vector.extract_strided_slice %275 {offsets = [0, 32], sizes = [16, 8], strides = [1, 1]} : vector<16x96xf32> to vector<16x8xf32>
    %280 = vector.shape_cast %279 : vector<16x8xf32> to vector<2x8x8xf32>
    %281 = vector.extract_strided_slice %275 {offsets = [0, 64], sizes = [16, 8], strides = [1, 1]} : vector<16x96xf32> to vector<16x8xf32>
    %282 = vector.shape_cast %281 : vector<16x8xf32> to vector<2x8x8xf32>
    "tpu.trace_start"() <{level = 10 : i32, message = "bsd,btd->bst"}> : () -> ()
    %cst_107 = arith.constant dense<0.000000e+00> : vector<2x8x8xf32>
    %283 = tpu.matmul %278, %280, %cst_107 {dimension_numbers = #tpu.dot_dimension_numbers<[2], [2], [1], [1], [0, 0, 0, 1, 1, 1], [0], [0]>} : vector<2x8x8xf32>, vector<2x8x8xf32>, vector<2x8x8xf32> -> vector<2x8x8xf32>
    "tpu.trace_stop"() : () -> ()
    %cst_108 = arith.constant 0.353553385 : f32
    %284 = vector.broadcast %cst_108 : f32 to vector<2x8x8xf32>
    %285 = arith.mulf %283, %284 : vector<2x8x8xf32>
    %286 = vector.broadcast %6 : vector<2x1x8xf32> to vector<2x8x8xf32>
    %287 = arith.addf %285, %286 : vector<2x8x8xf32>
    %cst_109 = arith.constant dense<0xFF800000> : vector<2x8xf32>
    %288 = vector.multi_reduction <maximumf>, %287, %cst_109 [2] : vector<2x8x8xf32> to vector<2x8xf32>
    %289 = vector.shape_cast %288 : vector<2x8xf32> to vector<2x8x1xf32>
    %290 = vector.broadcast %289 : vector<2x8x1xf32> to vector<2x8x8xf32>
    %291 = arith.subf %287, %290 : vector<2x8x8xf32>
    %292 = math.exp %291 : vector<2x8x8xf32>
    %cst_110 = arith.constant dense<0.000000e+00> : vector<2x8xf32>
    %293 = vector.multi_reduction <add>, %292, %cst_110 [2] : vector<2x8x8xf32> to vector<2x8xf32>
    %294 = vector.shape_cast %293 : vector<2x8xf32> to vector<2x8x1xf32>
    %295 = tpu.reciprocal %294 {approx = true} : vector<2x8x1xf32> -> vector<2x8x1xf32>
    %296 = vector.broadcast %295 : vector<2x8x1xf32> to vector<2x8x8xf32>
    %297 = arith.mulf %292, %296 : vector<2x8x8xf32>
    %c4 = arith.constant 4 : index
    %c0_111 = arith.constant 0 : index
    %c0_112 = arith.constant 0 : index
    %c0_113 = arith.constant 0 : index
    %298 = vector.load %arg12[%c4, %c0_111, %c0_112, %c0_113] : memref<8x2x8x8xf32, #tpu.memory_space<vmem>>, vector<1x2x8x8xf32>
    %299 = vector.shape_cast %298 : vector<1x2x8x8xf32> to vector<2x8x8xf32>
    %300 = vector.shape_cast %297 : vector<2x8x8xf32> to vector<1x2x8x8xf32>
    tpu.vector_store %arg12[%c4, %c0_111, %c0_112, %c0_113], %300 {strides = array<i32>} : memref<8x2x8x8xf32, #tpu.memory_space<vmem>>, vector<1x2x8x8xf32>,
    %301 = arith.addf %276, %297 : vector<2x8x8xf32>
    "tpu.trace_start"() <{level = 10 : i32, message = "bst,btd->bsd"}> : () -> ()
    %cst_114 = arith.constant dense<0.000000e+00> : vector<2x8x8xf32>
    %302 = tpu.matmul %297, %282, %cst_114 {dimension_numbers = #tpu.dot_dimension_numbers<[2], [1], [1], [2], [0, 0, 0, 1, 1, 2], [0], [0]>} : vector<2x8x8xf32>, vector<2x8x8xf32>, vector<2x8x8xf32> -> vector<2x8x8xf32>
    "tpu.trace_stop"() : () -> ()
    %303 = vector.shape_cast %302 : vector<2x8x8xf32> to vector<16x8xf32>
    %304 = vector.extract_strided_slice %275 {offsets = [0, 8], sizes = [16, 8], strides = [1, 1]} : vector<16x96xf32> to vector<16x8xf32>
    %305 = vector.shape_cast %304 : vector<16x8xf32> to vector<2x8x8xf32>
    %306 = vector.extract_strided_slice %275 {offsets = [0, 40], sizes = [16, 8], strides = [1, 1]} : vector<16x96xf32> to vector<16x8xf32>
    %307 = vector.shape_cast %306 : vector<16x8xf32> to vector<2x8x8xf32>
    %308 = vector.extract_strided_slice %275 {offsets = [0, 72], sizes = [16, 8], strides = [1, 1]} : vector<16x96xf32> to vector<16x8xf32>
    %309 = vector.shape_cast %308 : vector<16x8xf32> to vector<2x8x8xf32>
    "tpu.trace_start"() <{level = 10 : i32, message = "bsd,btd->bst"}> : () -> ()
    %cst_115 = arith.constant dense<0.000000e+00> : vector<2x8x8xf32>
    %310 = tpu.matmul %305, %307, %cst_115 {dimension_numbers = #tpu.dot_dimension_numbers<[2], [2], [1], [1], [0, 0, 0, 1, 1, 1], [0], [0]>} : vector<2x8x8xf32>, vector<2x8x8xf32>, vector<2x8x8xf32> -> vector<2x8x8xf32>
    "tpu.trace_stop"() : () -> ()
    %cst_116 = arith.constant 0.353553385 : f32
    %311 = vector.broadcast %cst_116 : f32 to vector<2x8x8xf32>
    %312 = arith.mulf %310, %311 : vector<2x8x8xf32>
    %313 = vector.broadcast %6 : vector<2x1x8xf32> to vector<2x8x8xf32>
    %314 = arith.addf %312, %313 : vector<2x8x8xf32>
    %cst_117 = arith.constant dense<0xFF800000> : vector<2x8xf32>
    %315 = vector.multi_reduction <maximumf>, %314, %cst_117 [2] : vector<2x8x8xf32> to vector<2x8xf32>
    %316 = vector.shape_cast %315 : vector<2x8xf32> to vector<2x8x1xf32>
    %317 = vector.broadcast %316 : vector<2x8x1xf32> to vector<2x8x8xf32>
    %318 = arith.subf %314, %317 : vector<2x8x8xf32>
    %319 = math.exp %318 : vector<2x8x8xf32>
    %cst_118 = arith.constant dense<0.000000e+00> : vector<2x8xf32>
    %320 = vector.multi_reduction <add>, %319, %cst_118 [2] : vector<2x8x8xf32> to vector<2x8xf32>
    %321 = vector.shape_cast %320 : vector<2x8xf32> to vector<2x8x1xf32>
    %322 = tpu.reciprocal %321 {approx = true} : vector<2x8x1xf32> -> vector<2x8x1xf32>
    %323 = vector.broadcast %322 : vector<2x8x1xf32> to vector<2x8x8xf32>
    %324 = arith.mulf %319, %323 : vector<2x8x8xf32>
    %c5 = arith.constant 5 : index
    %c0_119 = arith.constant 0 : index
    %c0_120 = arith.constant 0 : index
    %c0_121 = arith.constant 0 : index
    %325 = vector.load %arg12[%c5, %c0_119, %c0_120, %c0_121] : memref<8x2x8x8xf32, #tpu.memory_space<vmem>>, vector<1x2x8x8xf32>
    %326 = vector.shape_cast %325 : vector<1x2x8x8xf32> to vector<2x8x8xf32>
    %327 = vector.shape_cast %324 : vector<2x8x8xf32> to vector<1x2x8x8xf32>
    tpu.vector_store %arg12[%c5, %c0_119, %c0_120, %c0_121], %327 {strides = array<i32>} : memref<8x2x8x8xf32, #tpu.memory_space<vmem>>, vector<1x2x8x8xf32>,
    %328 = arith.addf %301, %324 : vector<2x8x8xf32>
    "tpu.trace_start"() <{level = 10 : i32, message = "bst,btd->bsd"}> : () -> ()
    %cst_122 = arith.constant dense<0.000000e+00> : vector<2x8x8xf32>
    %329 = tpu.matmul %324, %309, %cst_122 {dimension_numbers = #tpu.dot_dimension_numbers<[2], [1], [1], [2], [0, 0, 0, 1, 1, 2], [0], [0]>} : vector<2x8x8xf32>, vector<2x8x8xf32>, vector<2x8x8xf32> -> vector<2x8x8xf32>
    "tpu.trace_stop"() : () -> ()
    %330 = vector.shape_cast %329 : vector<2x8x8xf32> to vector<16x8xf32>
    %331 = vector.extract_strided_slice %275 {offsets = [0, 16], sizes = [16, 8], strides = [1, 1]} : vector<16x96xf32> to vector<16x8xf32>
    %332 = vector.shape_cast %331 : vector<16x8xf32> to vector<2x8x8xf32>
    %333 = vector.extract_strided_slice %275 {offsets = [0, 48], sizes = [16, 8], strides = [1, 1]} : vector<16x96xf32> to vector<16x8xf32>
    %334 = vector.shape_cast %333 : vector<16x8xf32> to vector<2x8x8xf32>
    %335 = vector.extract_strided_slice %275 {offsets = [0, 80], sizes = [16, 8], strides = [1, 1]} : vector<16x96xf32> to vector<16x8xf32>
    %336 = vector.shape_cast %335 : vector<16x8xf32> to vector<2x8x8xf32>
    "tpu.trace_start"() <{level = 10 : i32, message = "bsd,btd->bst"}> : () -> ()
    %cst_123 = arith.constant dense<0.000000e+00> : vector<2x8x8xf32>
    %337 = tpu.matmul %332, %334, %cst_123 {dimension_numbers = #tpu.dot_dimension_numbers<[2], [2], [1], [1], [0, 0, 0, 1, 1, 1], [0], [0]>} : vector<2x8x8xf32>, vector<2x8x8xf32>, vector<2x8x8xf32> -> vector<2x8x8xf32>
    "tpu.trace_stop"() : () -> ()
    %cst_124 = arith.constant 0.353553385 : f32
    %338 = vector.broadcast %cst_124 : f32 to vector<2x8x8xf32>
    %339 = arith.mulf %337, %338 : vector<2x8x8xf32>
    %340 = vector.broadcast %6 : vector<2x1x8xf32> to vector<2x8x8xf32>
    %341 = arith.addf %339, %340 : vector<2x8x8xf32>
    %cst_125 = arith.constant dense<0xFF800000> : vector<2x8xf32>
    %342 = vector.multi_reduction <maximumf>, %341, %cst_125 [2] : vector<2x8x8xf32> to vector<2x8xf32>
    %343 = vector.shape_cast %342 : vector<2x8xf32> to vector<2x8x1xf32>
    %344 = vector.broadcast %343 : vector<2x8x1xf32> to vector<2x8x8xf32>
    %345 = arith.subf %341, %344 : vector<2x8x8xf32>
    %346 = math.exp %345 : vector<2x8x8xf32>
    %cst_126 = arith.constant dense<0.000000e+00> : vector<2x8xf32>
    %347 = vector.multi_reduction <add>, %346, %cst_126 [2] : vector<2x8x8xf32> to vector<2x8xf32>
    %348 = vector.shape_cast %347 : vector<2x8xf32> to vector<2x8x1xf32>
    %349 = tpu.reciprocal %348 {approx = true} : vector<2x8x1xf32> -> vector<2x8x1xf32>
    %350 = vector.broadcast %349 : vector<2x8x1xf32> to vector<2x8x8xf32>
    %351 = arith.mulf %346, %350 : vector<2x8x8xf32>
    %c6 = arith.constant 6 : index
    %c0_127 = arith.constant 0 : index
    %c0_128 = arith.constant 0 : index
    %c0_129 = arith.constant 0 : index
    %352 = vector.load %arg12[%c6, %c0_127, %c0_128, %c0_129] : memref<8x2x8x8xf32, #tpu.memory_space<vmem>>, vector<1x2x8x8xf32>
    %353 = vector.shape_cast %352 : vector<1x2x8x8xf32> to vector<2x8x8xf32>
    %354 = vector.shape_cast %351 : vector<2x8x8xf32> to vector<1x2x8x8xf32>
    tpu.vector_store %arg12[%c6, %c0_127, %c0_128, %c0_129], %354 {strides = array<i32>} : memref<8x2x8x8xf32, #tpu.memory_space<vmem>>, vector<1x2x8x8xf32>,
    %355 = arith.addf %328, %351 : vector<2x8x8xf32>
    "tpu.trace_start"() <{level = 10 : i32, message = "bst,btd->bsd"}> : () -> ()
    %cst_130 = arith.constant dense<0.000000e+00> : vector<2x8x8xf32>
    %356 = tpu.matmul %351, %336, %cst_130 {dimension_numbers = #tpu.dot_dimension_numbers<[2], [1], [1], [2], [0, 0, 0, 1, 1, 2], [0], [0]>} : vector<2x8x8xf32>, vector<2x8x8xf32>, vector<2x8x8xf32> -> vector<2x8x8xf32>
    "tpu.trace_stop"() : () -> ()
    %357 = vector.shape_cast %356 : vector<2x8x8xf32> to vector<16x8xf32>
    %358 = vector.extract_strided_slice %275 {offsets = [0, 24], sizes = [16, 8], strides = [1, 1]} : vector<16x96xf32> to vector<16x8xf32>
    %359 = vector.shape_cast %358 : vector<16x8xf32> to vector<2x8x8xf32>
    %360 = vector.extract_strided_slice %275 {offsets = [0, 56], sizes = [16, 8], strides = [1, 1]} : vector<16x96xf32> to vector<16x8xf32>
    %361 = vector.shape_cast %360 : vector<16x8xf32> to vector<2x8x8xf32>
    %362 = vector.extract_strided_slice %275 {offsets = [0, 88], sizes = [16, 8], strides = [1, 1]} : vector<16x96xf32> to vector<16x8xf32>
    %363 = vector.shape_cast %362 : vector<16x8xf32> to vector<2x8x8xf32>
    "tpu.trace_start"() <{level = 10 : i32, message = "bsd,btd->bst"}> : () -> ()
    %cst_131 = arith.constant dense<0.000000e+00> : vector<2x8x8xf32>
    %364 = tpu.matmul %359, %361, %cst_131 {dimension_numbers = #tpu.dot_dimension_numbers<[2], [2], [1], [1], [0, 0, 0, 1, 1, 1], [0], [0]>} : vector<2x8x8xf32>, vector<2x8x8xf32>, vector<2x8x8xf32> -> vector<2x8x8xf32>
    "tpu.trace_stop"() : () -> ()
    %cst_132 = arith.constant 0.353553385 : f32
    %365 = vector.broadcast %cst_132 : f32 to vector<2x8x8xf32>
    %366 = arith.mulf %364, %365 : vector<2x8x8xf32>
    %367 = vector.broadcast %6 : vector<2x1x8xf32> to vector<2x8x8xf32>
    %368 = arith.addf %366, %367 : vector<2x8x8xf32>
    %cst_133 = arith.constant dense<0xFF800000> : vector<2x8xf32>
    %369 = vector.multi_reduction <maximumf>, %368, %cst_133 [2] : vector<2x8x8xf32> to vector<2x8xf32>
    %370 = vector.shape_cast %369 : vector<2x8xf32> to vector<2x8x1xf32>
    %371 = vector.broadcast %370 : vector<2x8x1xf32> to vector<2x8x8xf32>
    %372 = arith.subf %368, %371 : vector<2x8x8xf32>
    %373 = math.exp %372 : vector<2x8x8xf32>
    %cst_134 = arith.constant dense<0.000000e+00> : vector<2x8xf32>
    %374 = vector.multi_reduction <add>, %373, %cst_134 [2] : vector<2x8x8xf32> to vector<2x8xf32>
    %375 = vector.shape_cast %374 : vector<2x8xf32> to vector<2x8x1xf32>
    %376 = tpu.reciprocal %375 {approx = true} : vector<2x8x1xf32> -> vector<2x8x1xf32>
    %377 = vector.broadcast %376 : vector<2x8x1xf32> to vector<2x8x8xf32>
    %378 = arith.mulf %373, %377 : vector<2x8x8xf32>
    %c7 = arith.constant 7 : index
    %c0_135 = arith.constant 0 : index
    %c0_136 = arith.constant 0 : index
    %c0_137 = arith.constant 0 : index
    %379 = vector.load %arg12[%c7, %c0_135, %c0_136, %c0_137] : memref<8x2x8x8xf32, #tpu.memory_space<vmem>>, vector<1x2x8x8xf32>
    %380 = vector.shape_cast %379 : vector<1x2x8x8xf32> to vector<2x8x8xf32>
    %381 = vector.shape_cast %378 : vector<2x8x8xf32> to vector<1x2x8x8xf32>
    tpu.vector_store %arg12[%c7, %c0_135, %c0_136, %c0_137], %381 {strides = array<i32>} : memref<8x2x8x8xf32, #tpu.memory_space<vmem>>, vector<1x2x8x8xf32>,
    %382 = arith.addf %355, %378 : vector<2x8x8xf32>
    "tpu.trace_start"() <{level = 10 : i32, message = "bst,btd->bsd"}> : () -> ()
    %cst_138 = arith.constant dense<0.000000e+00> : vector<2x8x8xf32>
    %383 = tpu.matmul %378, %363, %cst_138 {dimension_numbers = #tpu.dot_dimension_numbers<[2], [1], [1], [2], [0, 0, 0, 1, 1, 2], [0], [0]>} : vector<2x8x8xf32>, vector<2x8x8xf32>, vector<2x8x8xf32> -> vector<2x8x8xf32>
    "tpu.trace_stop"() : () -> ()
    %384 = vector.shape_cast %383 : vector<2x8x8xf32> to vector<16x8xf32>
    %385 = tpu.concatenate %303, %330, %357, %384 in 1 : vector<16x8xf32>, vector<16x8xf32>, vector<16x8xf32>, vector<16x8xf32> -> vector<16x32xf32>
    %cst_139 = arith.constant dense<0.000000e+00> : vector<16x32xf32>
    %386 = tpu.matmul %385, %256, %cst_139 {dimension_numbers = #tpu.dot_dimension_numbers<[1], [0], [0], [1], [0, 0, 1, 1], [], []>} : vector<16x32xf32>, vector<32x32xf32>, vector<16x32xf32> -> vector<16x32xf32>
    %387 = vector.broadcast %267 : vector<1x32xf32> to vector<16x32xf32>
    %388 = arith.addf %386, %387 : vector<16x32xf32>
    %389 = arith.addf %213, %388 : vector<16x32xf32>
    %cst_140 = arith.constant dense<0.000000e+00> : vector<16xf32>
    %390 = vector.multi_reduction <add>, %389, %cst_140 [1] : vector<16x32xf32> to vector<16xf32>
    %391 = vector.shape_cast %390 : vector<16xf32> to vector<16x1xf32>
    %cst_141 = arith.constant 3.200000e+01 : f32
    %392 = vector.broadcast %cst_141 : f32 to vector<16x1xf32>
    %393 = arith.divf %391, %392 : vector<16x1xf32>
    %394 = vector.broadcast %393 : vector<16x1xf32> to vector<16x32xf32>
    %395 = arith.subf %389, %394 : vector<16x32xf32>
    %396 = arith.mulf %395, %395 : vector<16x32xf32>
    %cst_142 = arith.constant dense<0.000000e+00> : vector<16xf32>
    %397 = vector.multi_reduction <add>, %396, %cst_142 [1] : vector<16x32xf32> to vector<16xf32>
    %398 = vector.shape_cast %397 : vector<16xf32> to vector<16x1xf32>
    %cst_143 = arith.constant 3.200000e+01 : f32
    %399 = vector.broadcast %cst_143 : f32 to vector<16x1xf32>
    %400 = arith.divf %398, %399 : vector<16x1xf32>
    %401 = vector.broadcast %393 : vector<16x1xf32> to vector<16x32xf32>
    %402 = arith.subf %389, %401 : vector<16x32xf32>
    %cst_144 = arith.constant 9.99999996E-13 : f32
    %403 = vector.broadcast %cst_144 : f32 to vector<16x1xf32>
    %404 = arith.addf %400, %403 : vector<16x1xf32>
    %405 = math.rsqrt %404 : vector<16x1xf32>
    %406 = vector.broadcast %405 : vector<16x1xf32> to vector<16x32xf32>
    %407 = arith.mulf %402, %406 : vector<16x32xf32>
    %408 = vector.broadcast %268 : vector<1x32xf32> to vector<16x32xf32>
    %409 = arith.mulf %407, %408 : vector<16x32xf32>
    %410 = vector.broadcast %269 : vector<1x32xf32> to vector<16x32xf32>
    %411 = arith.addf %409, %410 : vector<16x32xf32>
    %cst_145 = arith.constant dense<0.000000e+00> : vector<16x64xf32>
    %412 = tpu.matmul %411, %260, %cst_145 {dimension_numbers = #tpu.dot_dimension_numbers<[1], [0], [0], [1], [0, 0, 1, 1], [], []>} : vector<16x32xf32>, vector<32x64xf32>, vector<16x64xf32> -> vector<16x64xf32>
    %413 = vector.broadcast %262 : vector<1x64xf32> to vector<16x64xf32>
    %414 = arith.addf %412, %413 : vector<16x64xf32>
    %cst_146 = arith.constant 5.000000e-01 : f32
    %415 = vector.broadcast %cst_146 : f32 to vector<16x64xf32>
    %416 = arith.mulf %415, %414 : vector<16x64xf32>
    %417 = arith.mulf %414, %414 : vector<16x64xf32>
    %418 = arith.mulf %414, %417 : vector<16x64xf32>
    %cst_147 = arith.constant 4.471500e-02 : f32
    %419 = vector.broadcast %cst_147 : f32 to vector<16x64xf32>
    %420 = arith.mulf %419, %418 : vector<16x64xf32>
    %421 = arith.addf %414, %420 : vector<16x64xf32>
    %cst_148 = arith.constant 0.797884583 : f32
    %422 = vector.broadcast %cst_148 : f32 to vector<16x64xf32>
    %423 = arith.mulf %422, %421 : vector<16x64xf32>
    %424 = math.tanh %423 : vector<16x64xf32>
    %cst_149 = arith.constant 1.000000e+00 : f32
    %425 = vector.broadcast %cst_149 : f32 to vector<16x64xf32>
    %426 = arith.addf %425, %424 : vector<16x64xf32>
    %427 = arith.mulf %416, %426 : vector<16x64xf32>
    %cst_150 = arith.constant dense<0.000000e+00> : vector<16x32xf32>
    %428 = tpu.matmul %427, %264, %cst_150 {dimension_numbers = #tpu.dot_dimension_numbers<[1], [0], [0], [1], [0, 0, 1, 1], [], []>} : vector<16x64xf32>, vector<64x32xf32>, vector<16x32xf32> -> vector<16x32xf32>
    %429 = vector.broadcast %270 : vector<1x32xf32> to vector<16x32xf32>
    %430 = arith.addf %428, %429 : vector<16x32xf32>
    %431 = arith.addf %411, %430 : vector<16x32xf32>
    %cst_151 = arith.constant dense<0.000000e+00> : vector<16xf32>
    %432 = vector.multi_reduction <add>, %431, %cst_151 [1] : vector<16x32xf32> to vector<16xf32>
    %433 = vector.shape_cast %432 : vector<16xf32> to vector<16x1xf32>
    %cst_152 = arith.constant 3.200000e+01 : f32
    %434 = vector.broadcast %cst_152 : f32 to vector<16x1xf32>
    %435 = arith.divf %433, %434 : vector<16x1xf32>
    %436 = vector.broadcast %435 : vector<16x1xf32> to vector<16x32xf32>
    %437 = arith.subf %431, %436 : vector<16x32xf32>
    %438 = arith.mulf %437, %437 : vector<16x32xf32>
    %cst_153 = arith.constant dense<0.000000e+00> : vector<16xf32>
    %439 = vector.multi_reduction <add>, %438, %cst_153 [1] : vector<16x32xf32> to vector<16xf32>
    %440 = vector.shape_cast %439 : vector<16xf32> to vector<16x1xf32>
    %cst_154 = arith.constant 3.200000e+01 : f32
    %441 = vector.broadcast %cst_154 : f32 to vector<16x1xf32>
    %442 = arith.divf %440, %441 : vector<16x1xf32>
    %443 = vector.broadcast %435 : vector<16x1xf32> to vector<16x32xf32>
    %444 = arith.subf %431, %443 : vector<16x32xf32>
    %cst_155 = arith.constant 9.99999996E-13 : f32
    %445 = vector.broadcast %cst_155 : f32 to vector<16x1xf32>
    %446 = arith.addf %442, %445 : vector<16x1xf32>
    %447 = math.rsqrt %446 : vector<16x1xf32>
    %448 = vector.broadcast %447 : vector<16x1xf32> to vector<16x32xf32>
    %449 = arith.mulf %444, %448 : vector<16x32xf32>
    %450 = vector.broadcast %271 : vector<1x32xf32> to vector<16x32xf32>
    %451 = arith.mulf %449, %450 : vector<16x32xf32>
    %452 = vector.broadcast %272 : vector<1x32xf32> to vector<16x32xf32>
    %453 = arith.addf %451, %452 : vector<16x32xf32>
    %cst_156 = arith.constant 2.500000e-01 : f32
    %454 = vector.broadcast %cst_156 : f32 to vector<2x8x8xf32>
    %455 = arith.mulf %382, %454 : vector<2x8x8xf32>
    %cst_157 = arith.constant 0.000000e+00 : f32
    %456 = vector.broadcast %cst_157 : f32 to vector<2x1x8xf32>
    %457 = arith.cmpf ogt, %7, %456 : vector<2x1x8xf32>
    %cst_158 = arith.constant -1.000000e+09 : f32
    %458 = vector.shape_cast %457 : vector<2x1x8xi1> to vector<2x1x8xi1>
    %459 = vector.broadcast %458 : vector<2x1x8xi1> to vector<2x8x8xi1>
    %460 = vector.broadcast %cst_158 : f32 to vector<2x8x8xf32>
    %461 = arith.select %459, %455, %460 : vector<2x8x8xi1>, vector<2x8x8xf32>
    %cst_159 = arith.constant dense<0xFF800000> : vector<2x8xf32>
    %462 = vector.multi_reduction <maximumf>, %461, %cst_159 [2] : vector<2x8x8xf32> to vector<2x8xf32>
    %463 = vector.shape_cast %462 : vector<2x8xf32> to vector<2x8x1xf32>
    %464 = vector.broadcast %463 : vector<2x8x1xf32> to vector<2x8x8xf32>
    %465 = arith.subf %461, %464 : vector<2x8x8xf32>
    %466 = math.exp %465 : vector<2x8x8xf32>
    %467 = vector.broadcast %7 : vector<2x1x8xf32> to vector<2x8x8xf32>
    %468 = arith.mulf %466, %467 : vector<2x8x8xf32>
    %cst_160 = arith.constant dense<0.000000e+00> : vector<2x8xf32>
    %469 = vector.multi_reduction <add>, %468, %cst_160 [2] : vector<2x8x8xf32> to vector<2x8xf32>
    %470 = vector.shape_cast %469 : vector<2x8xf32> to vector<2x8x1xf32>
    %cst_161 = arith.constant 1.000000e-30 : f32
    %471 = vector.broadcast %cst_161 : f32 to vector<2x8x1xf32>
    %472 = arith.maximumf %470, %471 : vector<2x8x1xf32>
    %473 = vector.broadcast %472 : vector<2x8x1xf32> to vector<2x8x8xf32>
    %474 = arith.divf %468, %473 : vector<2x8x8xf32>
    %475 = vector.broadcast %463 : vector<2x8x1xf32> to vector<2x8x8xf32>
    %476 = arith.subf %461, %475 : vector<2x8x8xf32>
    %477 = math.log %472 : vector<2x8x1xf32>
    %478 = vector.broadcast %477 : vector<2x8x1xf32> to vector<2x8x8xf32>
    %479 = arith.subf %476, %478 : vector<2x8x8xf32>
    %cst_162 = arith.constant 0.000000e+00 : f32
    %480 = vector.broadcast %cst_162 : f32 to vector<2x1x8xf32>
    %481 = arith.cmpf ogt, %7, %480 : vector<2x1x8xf32>
    %482 = arith.mulf %474, %479 : vector<2x8x8xf32>
    %cst_163 = arith.constant 0.000000e+00 : f32
    %483 = vector.shape_cast %481 : vector<2x1x8xi1> to vector<2x1x8xi1>
    %484 = vector.broadcast %483 : vector<2x1x8xi1> to vector<2x8x8xi1>
    %485 = vector.broadcast %cst_163 : f32 to vector<2x8x8xf32>
    %486 = arith.select %484, %482, %485 : vector<2x8x8xi1>, vector<2x8x8xf32>
    %cst_164 = arith.constant dense<0.000000e+00> : vector<2x8xf32>
    %487 = vector.multi_reduction <add>, %486, %cst_164 [2] : vector<2x8x8xf32> to vector<2x8xf32>
    %488 = arith.mulf %487, %1 : vector<2x8xf32>
    %cst_165 = arith.constant dense<0.000000e+00> : vector<2xf32>
    %489 = vector.multi_reduction <add>, %488, %cst_165 [1] : vector<2x8xf32> to vector<2xf32>
    %490 = vector.shape_cast %489 : vector<2xf32> to vector<2x1xf32>
    %491 = arith.divf %490, %11 : vector<2x1xf32>
    %492 = arith.addf %252, %491 : vector<2x1xf32>
    %c0_166 = arith.constant 0 : index
    %c0_167 = arith.constant 0 : index
    %493 = vector.load %arg11[%c0_166, %c0_167] : memref<16x32xf32, #tpu.memory_space<vmem>>, vector<16x32xf32>
    tpu.vector_store %arg11[%c0_166, %c0_167], %453 {strides = array<i32>} : memref<16x32xf32, #tpu.memory_space<vmem>>, vector<16x32xf32>,
    %cst_168 = arith.constant dense<0.000000e+00> : vector<1xf32>
    %494 = vector.multi_reduction <add>, %492, %cst_168 [0] : vector<2x1xf32> to vector<1xf32>
    %495 = vector.shape_cast %494 : vector<1xf32> to vector<1x1xf32>
    %cst_169 = arith.constant 5.000000e-01 : f32
    %496 = vector.broadcast %cst_169 : f32 to vector<1x1xf32>
    %497 = arith.mulf %495, %496 : vector<1x1xf32>
    %c0_170 = arith.constant 0 : index
    %c0_171 = arith.constant 0 : index
    %498 = vector.load %arg15[%c0_170, %c0_171] : memref<1x1xf32, #tpu.memory_space<vmem>>, vector<1x1xf32>
    tpu.vector_store %arg15[%c0_170, %c0_171], %497 {strides = array<i32>} : memref<1x1xf32, #tpu.memory_space<vmem>>, vector<1x1xf32>,
    %499 = vector.extract_strided_slice %453 {offsets = [0, 0], sizes = [1, 32], strides = [1, 1]} : vector<16x32xf32> to vector<1x32xf32>
    %500 = vector.extract_strided_slice %453 {offsets = [8, 0], sizes = [1, 32], strides = [1, 1]} : vector<16x32xf32> to vector<1x32xf32>
    %501 = tpu.concatenate %499, %500 in 0 : vector<1x32xf32>, vector<1x32xf32> -> vector<2x32xf32>
    %c0_172 = arith.constant 0 : index
    %c0_173 = arith.constant 0 : index
    %502 = vector.load %arg9[%c0_172, %c0_173] : memref<32x34xf32, #tpu.memory_space<vmem>>, vector<32x34xf32>
    %c0_174 = arith.constant 0 : index
    %c0_175 = arith.constant 0 : index
    %503 = vector.load %arg10[%c0_174, %c0_175] : memref<1x34xf32, #tpu.memory_space<vmem>>, vector<1x34xf32>
    %504 = vector.extract_strided_slice %502 {offsets = [0, 0], sizes = [32, 32], strides = [1, 1]} : vector<32x34xf32> to vector<32x32xf32>
    %505 = vector.extract_strided_slice %502 {offsets = [0, 32], sizes = [32, 2], strides = [1, 1]} : vector<32x34xf32> to vector<32x2xf32>
    %506 = vector.extract_strided_slice %503 {offsets = [0, 0], sizes = [1, 32], strides = [1, 1]} : vector<1x34xf32> to vector<1x32xf32>
    %507 = vector.extract_strided_slice %503 {offsets = [0, 32], sizes = [1, 2], strides = [1, 1]} : vector<1x34xf32> to vector<1x2xf32>
    %cst_176 = arith.constant dense<0.000000e+00> : vector<2x32xf32>
    %508 = tpu.matmul %501, %504, %cst_176 {dimension_numbers = #tpu.dot_dimension_numbers<[1], [0], [0], [1], [0, 0, 1, 1], [], []>} : vector<2x32xf32>, vector<32x32xf32>, vector<2x32xf32> -> vector<2x32xf32>
    %509 = vector.broadcast %506 : vector<1x32xf32> to vector<2x32xf32>
    %510 = arith.addf %508, %509 : vector<2x32xf32>
    %511 = math.tanh %510 : vector<2x32xf32>
    %cst_177 = arith.constant dense<0.000000e+00> : vector<2x2xf32>
    %512 = tpu.matmul %511, %505, %cst_177 {dimension_numbers = #tpu.dot_dimension_numbers<[1], [0], [0], [1], [0, 0, 1, 1], [], []>} : vector<2x32xf32>, vector<32x2xf32>, vector<2x2xf32> -> vector<2x2xf32>
    %513 = vector.broadcast %507 : vector<1x2xf32> to vector<2x2xf32>
    %514 = arith.addf %512, %513 : vector<2x2xf32>
    %c0_178 = arith.constant 0 : index
    %c0_179 = arith.constant 0 : index
    %515 = vector.load %arg13[%c0_178, %c0_179] : memref<2x2xf32, #tpu.memory_space<vmem>>, vector<2x2xf32>
    tpu.vector_store %arg13[%c0_178, %c0_179], %514 {strides = array<i32>} : memref<2x2xf32, #tpu.memory_space<vmem>>, vector<2x2xf32>,
    %cst_180 = arith.constant dense<0xFF800000> : vector<2xf32>
    %516 = vector.multi_reduction <maximumf>, %514, %cst_180 [1] : vector<2x2xf32> to vector<2xf32>
    %517 = vector.shape_cast %516 : vector<2xf32> to vector<2x1xf32>
    %518 = vector.broadcast %517 : vector<2x1xf32> to vector<2x2xf32>
    %519 = arith.subf %514, %518 : vector<2x2xf32>
    %520 = math.exp %519 : vector<2x2xf32>
    %cst_181 = arith.constant dense<0.000000e+00> : vector<2xf32>
    %521 = vector.multi_reduction <add>, %520, %cst_181 [1] : vector<2x2xf32> to vector<2xf32>
    %522 = vector.shape_cast %521 : vector<2xf32> to vector<2x1xf32>
    %523 = math.log %522 : vector<2x1xf32>
    %524 = arith.addf %517, %523 : vector<2x1xf32>
    %c0_182 = arith.constant 0 : index
    %c0_183 = arith.constant 0 : index
    %525 = vector.load %arg2[%c0_182, %c0_183] : memref<2x2xf32, #tpu.memory_space<vmem>>, vector<2x2xf32>
    %526 = arith.mulf %525, %514 : vector<2x2xf32>
    %cst_184 = arith.constant dense<0.000000e+00> : vector<2xf32>
    %527 = vector.multi_reduction <add>, %526, %cst_184 [1] : vector<2x2xf32> to vector<2xf32>
    %528 = vector.shape_cast %527 : vector<2xf32> to vector<2x1xf32>
    %529 = arith.subf %524, %528 : vector<2x1xf32>
    %cst_185 = arith.constant dense<0.000000e+00> : vector<1xf32>
    %530 = vector.multi_reduction <add>, %529, %cst_185 [0] : vector<2x1xf32> to vector<1xf32>
    %531 = vector.shape_cast %530 : vector<1xf32> to vector<1x1xf32>
    %cst_186 = arith.constant 5.000000e-01 : f32
    %532 = vector.broadcast %cst_186 : f32 to vector<1x1xf32>
    %533 = arith.mulf %531, %532 : vector<1x1xf32>
    %c0_187 = arith.constant 0 : index
    %c0_188 = arith.constant 0 : index
    %534 = vector.load %arg14[%c0_187, %c0_188] : memref<1x1xf32, #tpu.memory_space<vmem>>, vector<1x1xf32>
    tpu.vector_store %arg14[%c0_187, %c0_188], %533 {strides = array<i32>} : memref<1x1xf32, #tpu.memory_space<vmem>>, vector<1x1xf32>,
    return
  }
}

</mosaic_0001>

<llo_original>
// kernel: ear_forward.1
$region0: #{ear_forward.1}
  #allocation0 [shape = 'u32[]', space=smem, size = 0x4, offset = 0x4, fixed_abs, tag = 'smem constant byte address 0x4 - core index']
  #allocation1 [shape = 'u32[72,128]{1,0:T(1,128)}', space=vmem, size = 0x9000, scoped, tag = 'internal scratch']
  %s0 = inlined_call_operand.vmem [shape: f32[16,32], index: 0, kind: input, shape index: {}]
  %s1 = inlined_call_operand.vmem [shape: f32[2,8], index: 1, kind: input, shape index: {}]
  %s2 = inlined_call_operand.vmem [shape: f32[2,2], index: 2, kind: input, shape index: {}]
  %s3 = inlined_call_operand.vmem [shape: f32[2,32,128], index: 3, kind: input, shape index: {}]
  %s4 = inlined_call_operand.vmem [shape: f32[2,1,96], index: 4, kind: input, shape index: {}]
  %s5 = inlined_call_operand.vmem [shape: f32[2,32,64], index: 5, kind: input, shape index: {}]
  %s6 = inlined_call_operand.vmem [shape: f32[2,1,64], index: 6, kind: input, shape index: {}]
  %s7 = inlined_call_operand.vmem [shape: f32[2,64,32], index: 7, kind: input, shape index: {}]
  %s8 = inlined_call_operand.vmem [shape: f32[2,6,32], index: 8, kind: input, shape index: {}]
  %s9 = inlined_call_operand.vmem [shape: f32[32,34], index: 9, kind: input, shape index: {}]
  %s10 = inlined_call_operand.vmem [shape: f32[1,34], index: 10, kind: input, shape index: {}]
  %s11 = inlined_call_operand.hbm [shape: f32[16,32], index: 11, kind: output, shape index: {0}]
  %s12 = inlined_call_operand.vmem [shape: f32[8,2,8,8], index: 12, kind: output, shape index: {1}]
  %s13 = inlined_call_operand.hbm [shape: f32[2,2], index: 13, kind: output, shape index: {2}]
  %s14 = inlined_call_operand.hbm [shape: f32[1,1], index: 14, kind: output, shape index: {3}]
  %s15 = inlined_call_operand.hbm [shape: f32[1,1], index: 15, kind: output, shape index: {4}]
  %16 = xla_tuple %s11, %s12, %s13, %s14, %s15
  %s17 = sld [smem:[#allocation0]]
  $region86: #{ear_forward.1} parent=0
    _
  %s19 = ssub.s32 1, %s17
  %s20 = scalar_select 0, %s19, %s17
  $region1: #{ear_forward.1} parent=0
    #allocation2 [shape = 'u8[8192]{0}', space=vmem, size = 0x2000, scoped, tag = 'output window, operand 0, single buffered']
    #allocation3 [shape = 's32[1]{0}', space=sflag, size = 0x4, scoped, tag = 'scoped memory for ear_forward.1']
    #allocation4 [shape = 'u8[1024]{0}', space=vmem, size = 0x400, scoped, tag = 'output window, operand 2, single buffered']
    #allocation5 [shape = 's32[1]{0}', space=sflag, size = 0x4, scoped, tag = 'scoped memory for ear_forward.1']
    #allocation6 [shape = 'u8[512]{0}', space=vmem, size = 0x400, scoped, tag = 'output window, operand 3, single buffered']
    #allocation7 [shape = 'u8[512]{0}', space=vmem, size = 0x400, scoped, tag = 'output window, operand 4, single buffered']
    #allocation8 [shape = 's32[1]{0}', space=sflag, size = 0x4, scoped, tag = 'scoped memory for ear_forward.1']
    %21 = vsyncpa [#allocation3], 0
    %22 = vsyncpa [#allocation5], 0
    %23 = vsyncpa [#allocation8], 0
    // Predicated region
    $region2: #{ear_forward.1} parent=1 // pred_check
      _
    $region3: #{ear_forward.1} parent=1 // pred_check_branch
      %25 = sbr.rel (0) target = $region5
    $region4: #{ear_forward.1} parent=1 // pred_region
      _
    $region5: #{ear_forward.1} parent=1 // pred_fallthru
      _
    // Predicated region
    $region6: #{ear_forward.1} parent=1 // pred_check
      _
    $region7: #{ear_forward.1} parent=1 // pred_check_branch
      %27 = sbr.rel (0) target = $region9
    $region8: #{ear_forward.1} parent=1 // pred_region
      _
    $region9: #{ear_forward.1} parent=1 // pred_fallthru
      _
    // Predicated region
    $region10: #{ear_forward.1} parent=1 // pred_check
      _
    $region11: #{ear_forward.1} parent=1 // pred_check_branch
      %29 = sbr.rel (0) target = $region13
    $region12: #{ear_forward.1} parent=1 // pred_region
      _
    $region13: #{ear_forward.1} parent=1 // pred_fallthru
      _
    // Predicated region
    $region14: #{ear_forward.1} parent=1 // pred_check
      _
    $region15: #{ear_forward.1} parent=1 // pred_check_branch
      %31 = sbr.rel (0) target = $region17
    $region16: #{ear_forward.1} parent=1 // pred_region
      _
    $region17: #{ear_forward.1} parent=1 // pred_fallthru
      _
    // Predicated region
    $region18: #{ear_forward.1} parent=1 // pred_check
      _
    $region19: #{ear_forward.1} parent=1 // pred_check_branch
      %33 = sbr.rel (0) target = $region21
    $region20: #{ear_forward.1} parent=1 // pred_region
      _
    $region21: #{ear_forward.1} parent=1 // pred_fallthru
      _
    // Predicated region
    $region22: #{ear_forward.1} parent=1 // pred_check
      _
    $region23: #{ear_forward.1} parent=1 // pred_check_branch
      %35 = sbr.rel (0) target = $region25
    $region24: #{ear_forward.1} parent=1 // pred_region
      _
    $region25: #{ear_forward.1} parent=1 // pred_fallthru
      _
    // Predicated region
    $region26: #{ear_forward.1} parent=1 // pred_check
      _
    $region27: #{ear_forward.1} parent=1 // pred_check_branch
      %37 = sbr.rel (0) target = $region29
    $region28: #{ear_forward.1} parent=1 // pred_region
      _
    $region29: #{ear_forward.1} parent=1 // pred_fallthru
      _
    // Predicated region
    $region30: #{ear_forward.1} parent=1 // pred_check
      _
    $region31: #{ear_forward.1} parent=1 // pred_check_branch
      %39 = sbr.rel (0) target = $region33
    $region32: #{ear_forward.1} parent=1 // pred_region
      _
    $region33: #{ear_forward.1} parent=1 // pred_fallthru
      _
    // Predicated region
    $region34: #{ear_forward.1} parent=1 // pred_check
      _
    $region35: #{ear_forward.1} parent=1 // pred_check_branch
      %41 = sbr.rel (0) target = $region37
    $region36: #{ear_forward.1} parent=1 // pred_region
      _
    $region37: #{ear_forward.1} parent=1 // pred_fallthru
      _
    // Predicated region
    $region38: #{ear_forward.1} parent=1 // pred_check
      _
    $region39: #{ear_forward.1} parent=1 // pred_check_branch
      %43 = sbr.rel (0) target = $region41
    $region40: #{ear_forward.1} parent=1 // pred_region
      _
    $region41: #{ear_forward.1} parent=1 // pred_fallthru
      _
    // Predicated region
    $region42: #{ear_forward.1} parent=1 // pred_check
      _
    $region43: #{ear_forward.1} parent=1 // pred_check_branch
      %45 = sbr.rel (0) target = $region45
    $region44: #{ear_forward.1} parent=1 // pred_region
      _
    $region45: #{ear_forward.1} parent=1 // pred_fallthru
      _
    %v46 = vld [vmem:[%s0] sm:$0xff]
    %v47 = vld [vmem:[%s0 + $0x8] sm:$0xff]
    %v48 = vld [vmem:[%s1] sm:$0x3]
    %v49 = vsub.f32 1.0, %v48
    %v50 = vmul.f32 %v49, -1e+09
    %v52 = vrot.slane %v50, 1
    %v54 = vrot.slane %v48, 1
    %vm56 = vcmask 58368
    %v57 = vsel %vm56, %v48, 0.0
    %58 = vadd.xlane.f32.xlu0 %v57
    %v59 = vpop.xlane.xlu0 %58
    %v60 = vmax.f32 %v59, 1.0
    %v61 = vld [vmem:[%s3] sm:$0xff]
    %v62 = vld [vmem:[%s3 + $0x8] sm:$0xff]
    %v63 = vld [vmem:[%s3 + $0x10] sm:$0xff]
    %v64 = vld [vmem:[%s3 + $0x18] sm:$0xff]
    %v65 = vld [vmem:[%s4] sm:$0x1]
    %v66 = vld [vmem:[%s5] sm:$0xff]
    %v67 = vld [vmem:[%s5 + $0x8] sm:$0xff]
    %v68 = vld [vmem:[%s5 + $0x10] sm:$0xff]
    %v69 = vld [vmem:[%s5 + $0x18] sm:$0xff]
    %v70 = vld [vmem:[%s6] sm:$0x1]
    %v71 = vld [vmem:[%s7] sm:$0xff]
    %v72 = vld [vmem:[%s7 + $0x8] sm:$0xff]
    %v73 = vld [vmem:[%s7 + $0x10] sm:$0xff]
    %v74 = vld [vmem:[%s7 + $0x18] sm:$0xff]
    %v75 = vld [vmem:[%s7 + $0x20] sm:$0xff]
    %v76 = vld [vmem:[%s7 + $0x28] sm:$0xff]
    %v77 = vld [vmem:[%s7 + $0x30] sm:$0xff]
    %v78 = vld [vmem:[%s7 + $0x38] sm:$0xff]
    %v79 = vld [vmem:[%s8] sm:$0x3f]
    %v81 = vperm.slane %v65, 0
    %vm83 = vcmask 261120
    %v85 = vsel %vm83, %v46, 0
    %v88 = vsel %vm83, %v47, 0
    %90 = vmatpush.msra.mxu0 0.0
    %91 = vmatpush.msra.mxu0 0.0
    %92 = vmatpush.msra.mxu0 0.0
    %93 = vmatpush.msra.mxu0 0.0
    %94 = vmatpush.msra.mxu0 0.0
    %95 = vmatpush.msra.mxu0 0.0
    %96 = vmatpush.msra.mxu0 0.0
    %97 = vmatpush.msra.mxu0 0.0
    %98 = vmatpush.msra.mxu0 0.0
    %99 = vmatpush.msra.mxu0 0.0
    %100 = vmatpush.msra.mxu0 0.0
    %101 = vmatpush.msra.mxu0 0.0
    %102 = vmatpush.msra.mxu0 %v64
    %103 = vmatpush.msra.mxu0 %v63
    %104 = vmatpush.msra.mxu0 %v62
    %105 = vmatpush.msra.mxu0 %v61
    %106 = vmatmul.f32.gmra.mxu0 %v85
    %v107 = vpop.f32.mrf.mxu0
    %v108 = vadd.f32 %v81, %v107
    %109 = vmatmul.f32.gmra.mxu0 %v88
    %v110 = vpop.f32.mrf.mxu0
    %v111 = vadd.f32 %v81, %v110
    %112 = vdwg.mxu0
    %114 = vrot.lane.b32.xlu0 %v108, 96
    %v115 = vpop.permute.xlu0 %114
    %vm116 = vcmask 64512
    %v117 = vsel %vm116, %v108, 0
    %v119 = vsel %vm116, %v115, 0
    %121 = vmatpush.xpose.msra.mxu0 0.0
    %122 = vmatpush.xpose.msra.mxu0 0.0
    %123 = vmatpush.xpose.msra.mxu0 0.0
    %124 = vmatpush.xpose.msra.mxu0 0.0
    %125 = vmatpush.xpose.msra.mxu0 0.0
    %126 = vmatpush.xpose.msra.mxu0 0.0
    %127 = vmatpush.xpose.msra.mxu0 0.0
    %128 = vmatpush.xpose.msra.mxu0 0.0
    %129 = vmatpush.xpose.msra.mxu0 0.0
    %130 = vmatpush.xpose.msra.mxu0 0.0
    %131 = vmatpush.xpose.msra.mxu0 0.0
    %132 = vmatpush.xpose.msra.mxu0 0.0
    %133 = vmatpush.xpose.msra.mxu0 0.0
    %134 = vmatpush.xpose.msra.mxu0 0.0
    %135 = vmatpush.xpose.msra.mxu0 0.0
    %136 = vmatpush.xpose.msra.mxu0 %v119
    %137 = vmatmul.f32.gmra.mxu0 %v117
    %v138 = vpop.f32.mrf.mxu0
    %v139 = vadd.f32 0.0, %v138
    %140 = vdwg.mxu0
    %142 = vrot.lane.b32.xlu0 %v111, 96
    %v143 = vpop.permute.xlu0 %142
    %v144 = vsel %vm116, %v111, 0
    %v146 = vsel %vm116, %v143, 0
    %148 = vmatpush.xpose.msra.mxu0 0.0
    %149 = vmatpush.xpose.msra.mxu0 0.0
    %150 = vmatpush.xpose.msra.mxu0 0.0
    %151 = vmatpush.xpose.msra.mxu0 0.0
    %152 = vmatpush.xpose.msra.mxu0 0.0
    %153 = vmatpush.xpose.msra.mxu0 0.0
    %154 = vmatpush.xpose.msra.mxu0 0.0
    %155 = vmatpush.xpose.msra.mxu0 0.0
    %156 = vmatpush.xpose.msra.mxu0 0.0
    %157 = vmatpush.xpose.msra.mxu0 0.0
    %158 = vmatpush.xpose.msra.mxu0 0.0
    %159 = vmatpush.xpose.msra.mxu0 0.0
    %160 = vmatpush.xpose.msra.mxu0 0.0
    %161 = vmatpush.xpose.msra.mxu0 0.0
    %162 = vmatpush.xpose.msra.mxu0 0.0
    %163 = vmatpush.xpose.msra.mxu0 %v146
    %164 = vmatmul.f32.gmra.mxu0 %v144
    %v165 = vpop.f32.mrf.mxu0
    %v166 = vadd.f32 0.0, %v165
    %167 = vdwg.mxu0
    %v168 = vmul.f32 %v139, 0.35355338
    %v169 = vmul.f32 %v166, 0.35355338
    %v170 = vperm.slane %v50, 0
    %v171 = vperm.slane %v52, 0
    %v174 = vadd.f32 %v168, %v170
    %v175 = vadd.f32 %v169, %v171
    %v176 = vsel %vm116, %v174, -inf
    %177 = vmax.xlane.f32.xlu0 %v176
    %v178 = vpop.xlane.xlu0 %177
    %v179 = vsel %vm116, %v175, -inf
    %180 = vmax.xlane.f32.xlu0 %v179
    %v181 = vpop.xlane.xlu0 %180
    %v182 = vsub.f32 %v174, %v178
    %v183 = vsub.f32 %v175, %v181
    %v184 = vmul.f32 %v182, 1.442695
    %v185 = vpow.pop %v184
    %v186 = vmul.f32 %v183, 1.442695
    %v187 = vpow.pop %v186
    %v188 = vsel %vm116, %v185, 0.0
    %189 = vadd.xlane.f32.xlu0 %v188
    %v190 = vpop.xlane.xlu0 %189
    %v191 = vsel %vm116, %v187, 0.0
    %192 = vadd.xlane.f32.xlu0 %v191
    %v193 = vpop.xlane.xlu0 %192
    %v194 = vrcp.pop %v190
    %v195 = vrcp.pop %v193
    %v196 = vmul.f32 %v185, %v194
    %v197 = vmul.f32 %v187, %v195
    %198 = vst.msk [vmem:[%s12] sm:$0xff] %vm116, %v196
    %199 = vst.msk [vmem:[%s12 + $0x8] sm:$0xff] %vm116, %v197
    %v200 = vadd.f32 %v196, 0.0
    %v201 = vadd.f32 %v197, 0.0
    %202 = vrot.lane.b32.xlu0 %v108, 64
    %v203 = vpop.permute.xlu0 %202
    %v206 = vsel %vm116, %v196, 0
    %208 = vmatpush.msra.mxu0 0.0
    %209 = vmatpush.msra.mxu0 0.0
    %210 = vmatpush.msra.mxu0 0.0
    %211 = vmatpush.msra.mxu0 0.0
    %212 = vmatpush.msra.mxu0 0.0
    %213 = vmatpush.msra.mxu0 0.0
    %214 = vmatpush.msra.mxu0 0.0
    %215 = vmatpush.msra.mxu0 0.0
    %216 = vmatpush.msra.mxu0 0.0
    %217 = vmatpush.msra.mxu0 0.0
    %218 = vmatpush.msra.mxu0 0.0
    %219 = vmatpush.msra.mxu0 0.0
    %220 = vmatpush.msra.mxu0 0.0
    %221 = vmatpush.msra.mxu0 0.0
    %222 = vmatpush.msra.mxu0 0.0
    %223 = vmatpush.msra.mxu0 %v203
    %224 = vmatmul.f32.gmra.mxu0 %v206
    %v225 = vpop.f32.mrf.mxu0
    %v226 = vadd.f32 0.0, %v225
    %227 = vdwg.mxu0
    %228 = vrot.lane.b32.xlu0 %v111, 64
    %v229 = vpop.permute.xlu0 %228
    %v232 = vsel %vm116, %v197, 0
    %234 = vmatpush.msra.mxu0 0.0
    %235 = vmatpush.msra.mxu0 0.0
    %236 = vmatpush.msra.mxu0 0.0
    %237 = vmatpush.msra.mxu0 0.0
    %238 = vmatpush.msra.mxu0 0.0
    %239 = vmatpush.msra.mxu0 0.0
    %240 = vmatpush.msra.mxu0 0.0
    %241 = vmatpush.msra.mxu0 0.0
    %242 = vmatpush.msra.mxu0 0.0
    %243 = vmatpush.msra.mxu0 0.0
    %244 = vmatpush.msra.mxu0 0.0
    %245 = vmatpush.msra.mxu0 0.0
    %246 = vmatpush.msra.mxu0 0.0
    %247 = vmatpush.msra.mxu0 0.0
    %248 = vmatpush.msra.mxu0 0.0
    %249 = vmatpush.msra.mxu0 %v229
    %250 = vmatmul.f32.gmra.mxu0 %v232
    %v251 = vpop.f32.mrf.mxu0
    %v252 = vadd.f32 0.0, %v251
    %253 = vdwg.mxu0
    %254 = vrot.lane.b32.xlu0 %v108, 120
    %v255 = vpop.permute.xlu0 %254
    %256 = vrot.lane.b32.xlu0 %v108, 88
    %v257 = vpop.permute.xlu0 %256
    %v258 = vsel %vm116, %v255, 0
    %v260 = vsel %vm116, %v257, 0
    %262 = vmatpush.xpose.msra.mxu0 0.0
    %263 = vmatpush.xpose.msra.mxu0 0.0
    %264 = vmatpush.xpose.msra.mxu0 0.0
    %265 = vmatpush.xpose.msra.mxu0 0.0
    %266 = vmatpush.xpose.msra.mxu0 0.0
    %267 = vmatpush.xpose.msra.mxu0 0.0
    %268 = vmatpush.xpose.msra.mxu0 0.0
    %269 = vmatpush.xpose.msra.mxu0 0.0
    %270 = vmatpush.xpose.msra.mxu0 0.0
    %271 = vmatpush.xpose.msra.mxu0 0.0
    %272 = vmatpush.xpose.msra.mxu0 0.0
    %273 = vmatpush.xpose.msra.mxu0 0.0
    %274 = vmatpush.xpose.msra.mxu0 0.0
    %275 = vmatpush.xpose.msra.mxu0 0.0
    %276 = vmatpush.xpose.msra.mxu0 0.0
    %277 = vmatpush.xpose.msra.mxu0 %v260
    %278 = vmatmul.f32.gmra.mxu0 %v258
    %v279 = vpop.f32.mrf.mxu0
    %v280 = vadd.f32 0.0, %v279
    %281 = vdwg.mxu0
    %282 = vrot.lane.b32.xlu0 %v111, 120
    %v283 = vpop.permute.xlu0 %282
    %284 = vrot.lane.b32.xlu0 %v111, 88
    %v285 = vpop.permute.xlu0 %284
    %v286 = vsel %vm116, %v283, 0
    %v288 = vsel %vm116, %v285, 0
    %290 = vmatpush.xpose.msra.mxu0 0.0
    %291 = vmatpush.xpose.msra.mxu0 0.0
    %292 = vmatpush.xpose.msra.mxu0 0.0
    %293 = vmatpush.xpose.msra.mxu0 0.0
    %294 = vmatpush.xpose.msra.mxu0 0.0
    %295 = vmatpush.xpose.msra.mxu0 0.0
    %296 = vmatpush.xpose.msra.mxu0 0.0
    %297 = vmatpush.xpose.msra.mxu0 0.0
    %298 = vmatpush.xpose.msra.mxu0 0.0
    %299 = vmatpush.xpose.msra.mxu0 0.0
    %300 = vmatpush.xpose.msra.mxu0 0.0
    %301 = vmatpush.xpose.msra.mxu0 0.0
    %302 = vmatpush.xpose.msra.mxu0 0.0
    %303 = vmatpush.xpose.msra.mxu0 0.0
    %304 = vmatpush.xpose.msra.mxu0 0.0
    %305 = vmatpush.xpose.msra.mxu0 %v288
    %306 = vmatmul.f32.gmra.mxu0 %v286
    %v307 = vpop.f32.mrf.mxu0
    %v308 = vadd.f32 0.0, %v307
    %309 = vdwg.mxu0
    %v310 = vmul.f32 %v280, 0.35355338
    %v311 = vmul.f32 %v308, 0.35355338
    %v312 = vadd.f32 %v310, %v170
    %v313 = vadd.f32 %v311, %v171
    %v314 = vsel %vm116, %v312, -inf
    %315 = vmax.xlane.f32.xlu0 %v314
    %v316 = vpop.xlane.xlu0 %315
    %v317 = vsel %vm116, %v313, -inf
    %318 = vmax.xlane.f32.xlu0 %v317
    %v319 = vpop.xlane.xlu0 %318
    %v320 = vsub.f32 %v312, %v316
    %v321 = vsub.f32 %v313, %v319
    %v322 = vmul.f32 %v320, 1.442695
    %v323 = vpow.pop %v322
    %v324 = vmul.f32 %v321, 1.442695
    %v325 = vpow.pop %v324
    %v326 = vsel %vm116, %v323, 0.0
    %327 = vadd.xlane.f32.xlu0 %v326
    %v328 = vpop.xlane.xlu0 %327
    %v329 = vsel %vm116, %v325, 0.0
    %330 = vadd.xlane.f32.xlu0 %v329
    %v331 = vpop.xlane.xlu0 %330
    %v332 = vrcp.pop %v328
    %v333 = vrcp.pop %v331
    %v334 = vmul.f32 %v323, %v332
    %v335 = vmul.f32 %v325, %v333
    %s336 = scalar_lea.vmem %s12, 16
    %337 = vst.msk [vmem:[%s336] sm:$0xff] %vm116, %v334
    %338 = vst.msk [vmem:[%s336 + $0x8] sm:$0xff] %vm116, %v335
    %v339 = vadd.f32 %v200, %v334
    %v340 = vadd.f32 %v201, %v335
    %341 = vrot.lane.b32.xlu0 %v108, 56
    %v342 = vpop.permute.xlu0 %341
    %v345 = vsel %vm116, %v334, 0
    %347 = vmatpush.msra.mxu0 0.0
    %348 = vmatpush.msra.mxu0 0.0
    %349 = vmatpush.msra.mxu0 0.0
    %350 = vmatpush.msra.mxu0 0.0
    %351 = vmatpush.msra.mxu0 0.0
    %352 = vmatpush.msra.mxu0 0.0
    %353 = vmatpush.msra.mxu0 0.0
    %354 = vmatpush.msra.mxu0 0.0
    %355 = vmatpush.msra.mxu0 0.0
    %356 = vmatpush.msra.mxu0 0.0
    %357 = vmatpush.msra.mxu0 0.0
    %358 = vmatpush.msra.mxu0 0.0
    %359 = vmatpush.msra.mxu0 0.0
    %360 = vmatpush.msra.mxu0 0.0
    %361 = vmatpush.msra.mxu0 0.0
    %362 = vmatpush.msra.mxu0 %v342
    %363 = vmatmul.f32.gmra.mxu0 %v345
    %v364 = vpop.f32.mrf.mxu0
    %v365 = vadd.f32 0.0, %v364
    %366 = vdwg.mxu0
    %367 = vrot.lane.b32.xlu0 %v111, 56
    %v368 = vpop.permute.xlu0 %367
    %v371 = vsel %vm116, %v335, 0
    %373 = vmatpush.msra.mxu0 0.0
    %374 = vmatpush.msra.mxu0 0.0
    %375 = vmatpush.msra.mxu0 0.0
    %376 = vmatpush.msra.mxu0 0.0
    %377 = vmatpush.msra.mxu0 0.0
    %378 = vmatpush.msra.mxu0 0.0
    %379 = vmatpush.msra.mxu0 0.0
    %380 = vmatpush.msra.mxu0 0.0
    %381 = vmatpush.msra.mxu0 0.0
    %382 = vmatpush.msra.mxu0 0.0
    %383 = vmatpush.msra.mxu0 0.0
    %384 = vmatpush.msra.mxu0 0.0
    %385 = vmatpush.msra.mxu0 0.0
    %386 = vmatpush.msra.mxu0 0.0
    %387 = vmatpush.msra.mxu0 0.0
    %388 = vmatpush.msra.mxu0 %v368
    %389 = vmatmul.f32.gmra.mxu0 %v371
    %v390 = vpop.f32.mrf.mxu0
    %v391 = vadd.f32 0.0, %v390
    %392 = vdwg.mxu0
    %393 = vrot.lane.b32.xlu0 %v108, 112
    %v394 = vpop.permute.xlu0 %393
    %395 = vrot.lane.b32.xlu0 %v108, 80
    %v396 = vpop.permute.xlu0 %395
    %v397 = vsel %vm116, %v394, 0
    %v399 = vsel %vm116, %v396, 0
    %401 = vmatpush.xpose.msra.mxu0 0.0
    %402 = vmatpush.xpose.msra.mxu0 0.0
    %403 = vmatpush.xpose.msra.mxu0 0.0
    %404 = vmatpush.xpose.msra.mxu0 0.0
    %405 = vmatpush.xpose.msra.mxu0 0.0
    %406 = vmatpush.xpose.msra.mxu0 0.0
    %407 = vmatpush.xpose.msra.mxu0 0.0
    %408 = vmatpush.xpose.msra.mxu0 0.0
    %409 = vmatpush.xpose.msra.mxu0 0.0
    %410 = vmatpush.xpose.msra.mxu0 0.0
    %411 = vmatpush.xpose.msra.mxu0 0.0
    %412 = vmatpush.xpose.msra.mxu0 0.0
    %413 = vmatpush.xpose.msra.mxu0 0.0
    %414 = vmatpush.xpose.msra.mxu0 0.0
    %415 = vmatpush.xpose.msra.mxu0 0.0
    %416 = vmatpush.xpose.msra.mxu0 %v399
    %417 = vmatmul.f32.gmra.mxu0 %v397
    %v418 = vpop.f32.mrf.mxu0
    %v419 = vadd.f32 0.0, %v418
    %420 = vdwg.mxu0
    %421 = vrot.lane.b32.xlu0 %v111, 112
    %v422 = vpop.permute.xlu0 %421
    %423 = vrot.lane.b32.xlu0 %v111, 80
    %v424 = vpop.permute.xlu0 %423
    %v425 = vsel %vm116, %v422, 0
    %v427 = vsel %vm116, %v424, 0
    %429 = vmatpush.xpose.msra.mxu0 0.0
    %430 = vmatpush.xpose.msra.mxu0 0.0
    %431 = vmatpush.xpose.msra.mxu0 0.0
    %432 = vmatpush.xpose.msra.mxu0 0.0
    %433 = vmatpush.xpose.msra.mxu0 0.0
    %434 = vmatpush.xpose.msra.mxu0 0.0
    %435 = vmatpush.xpose.msra.mxu0 0.0
    %436 = vmatpush.xpose.msra.mxu0 0.0
    %437 = vmatpush.xpose.msra.mxu0 0.0
    %438 = vmatpush.xpose.msra.mxu0 0.0
    %439 = vmatpush.xpose.msra.mxu0 0.0
    %440 = vmatpush.xpose.msra.mxu0 0.0
    %441 = vmatpush.xpose.msra.mxu0 0.0
    %442 = vmatpush.xpose.msra.mxu0 0.0
    %443 = vmatpush.xpose.msra.mxu0 0.0
    %444 = vmatpush.xpose.msra.mxu0 %v427
    %445 = vmatmul.f32.gmra.mxu0 %v425
    %v446 = vpop.f32.mrf.mxu0
    %v447 = vadd.f32 0.0, %v446
    %448 = vdwg.mxu0
    %v449 = vmul.f32 %v419, 0.35355338
    %v450 = vmul.f32 %v447, 0.35355338
    %v451 = vadd.f32 %v449, %v170
    %v452 = vadd.f32 %v450, %v171
    %v453 = vsel %vm116, %v451, -inf
    %454 = vmax.xlane.f32.xlu0 %v453
    %v455 = vpop.xlane.xlu0 %454
    %v456 = vsel %vm116, %v452, -inf
    %457 = vmax.xlane.f32.xlu0 %v456
    %v458 = vpop.xlane.xlu0 %457
    %v459 = vsub.f32 %v451, %v455
    %v460 = vsub.f32 %v452, %v458
    %v461 = vmul.f32 %v459, 1.442695
    %v462 = vpow.pop %v461
    %v463 = vmul.f32 %v460, 1.442695
    %v464 = vpow.pop %v463
    %v465 = vsel %vm116, %v462, 0.0
    %466 = vadd.xlane.f32.xlu0 %v465
    %v467 = vpop.xlane.xlu0 %466
    %v468 = vsel %vm116, %v464, 0.0
    %469 = vadd.xlane.f32.xlu0 %v468
    %v470 = vpop.xlane.xlu0 %469
    %v471 = vrcp.pop %v467
    %v472 = vrcp.pop %v470
    %v473 = vmul.f32 %v462, %v471
    %v474 = vmul.f32 %v464, %v472
    %s475 = scalar_lea.vmem %s12, 32
    %476 = vst.msk [vmem:[%s475] sm:$0xff] %vm116, %v473
    %477 = vst.msk [vmem:[%s475 + $0x8] sm:$0xff] %vm116, %v474
    %v478 = vadd.f32 %v339, %v473
    %v479 = vadd.f32 %v340, %v474
    %480 = vrot.lane.b32.xlu0 %v108, 48
    %v481 = vpop.permute.xlu0 %480
    %v484 = vsel %vm116, %v473, 0
    %486 = vmatpush.msra.mxu0 0.0
    %487 = vmatpush.msra.mxu0 0.0
    %488 = vmatpush.msra.mxu0 0.0
    %489 = vmatpush.msra.mxu0 0.0
    %490 = vmatpush.msra.mxu0 0.0
    %491 = vmatpush.msra.mxu0 0.0
    %492 = vmatpush.msra.mxu0 0.0
    %493 = vmatpush.msra.mxu0 0.0
    %494 = vmatpush.msra.mxu0 0.0
    %495 = vmatpush.msra.mxu0 0.0
    %496 = vmatpush.msra.mxu0 0.0
    %497 = vmatpush.msra.mxu0 0.0
    %498 = vmatpush.msra.mxu0 0.0
    %499 = vmatpush.msra.mxu0 0.0
    %500 = vmatpush.msra.mxu0 0.0
    %501 = vmatpush.msra.mxu0 %v481
    %502 = vmatmul.f32.gmra.mxu0 %v484
    %v503 = vpop.f32.mrf.mxu0
    %v504 = vadd.f32 0.0, %v503
    %505 = vdwg.mxu0
    %506 = vrot.lane.b32.xlu0 %v111, 48
    %v507 = vpop.permute.xlu0 %506
    %v510 = vsel %vm116, %v474, 0
    %512 = vmatpush.msra.mxu0 0.0
    %513 = vmatpush.msra.mxu0 0.0
    %514 = vmatpush.msra.mxu0 0.0
    %515 = vmatpush.msra.mxu0 0.0
    %516 = vmatpush.msra.mxu0 0.0
    %517 = vmatpush.msra.mxu0 0.0
    %518 = vmatpush.msra.mxu0 0.0
    %519 = vmatpush.msra.mxu0 0.0
    %520 = vmatpush.msra.mxu0 0.0
    %521 = vmatpush.msra.mxu0 0.0
    %522 = vmatpush.msra.mxu0 0.0
    %523 = vmatpush.msra.mxu0 0.0
    %524 = vmatpush.msra.mxu0 0.0
    %525 = vmatpush.msra.mxu0 0.0
    %526 = vmatpush.msra.mxu0 0.0
    %527 = vmatpush.msra.mxu0 %v507
    %528 = vmatmul.f32.gmra.mxu0 %v510
    %v529 = vpop.f32.mrf.mxu0
    %v530 = vadd.f32 0.0, %v529
    %531 = vdwg.mxu0
    %532 = vrot.lane.b32.xlu0 %v108, 104
    %v533 = vpop.permute.xlu0 %532
    %534 = vrot.lane.b32.xlu0 %v108, 72
    %v535 = vpop.permute.xlu0 %534
    %v536 = vsel %vm116, %v533, 0
    %v538 = vsel %vm116, %v535, 0
    %540 = vmatpush.xpose.msra.mxu0 0.0
    %541 = vmatpush.xpose.msra.mxu0 0.0
    %542 = vmatpush.xpose.msra.mxu0 0.0
    %543 = vmatpush.xpose.msra.mxu0 0.0
    %544 = vmatpush.xpose.msra.mxu0 0.0
    %545 = vmatpush.xpose.msra.mxu0 0.0
    %546 = vmatpush.xpose.msra.mxu0 0.0
    %547 = vmatpush.xpose.msra.mxu0 0.0
    %548 = vmatpush.xpose.msra.mxu0 0.0
    %549 = vmatpush.xpose.msra.mxu0 0.0
    %550 = vmatpush.xpose.msra.mxu0 0.0
    %551 = vmatpush.xpose.msra.mxu0 0.0
    %552 = vmatpush.xpose.msra.mxu0 0.0
    %553 = vmatpush.xpose.msra.mxu0 0.0
    %554 = vmatpush.xpose.msra.mxu0 0.0
    %555 = vmatpush.xpose.msra.mxu0 %v538
    %556 = vmatmul.f32.gmra.mxu0 %v536
    %v557 = vpop.f32.mrf.mxu0
    %v558 = vadd.f32 0.0, %v557
    %559 = vdwg.mxu0
    %560 = vrot.lane.b32.xlu0 %v111, 104
    %v561 = vpop.permute.xlu0 %560
    %562 = vrot.lane.b32.xlu0 %v111, 72
    %v563 = vpop.permute.xlu0 %562
    %v564 = vsel %vm116, %v561, 0
    %v566 = vsel %vm116, %v563, 0
    %568 = vmatpush.xpose.msra.mxu0 0.0
    %569 = vmatpush.xpose.msra.mxu0 0.0
    %570 = vmatpush.xpose.msra.mxu0 0.0
    %571 = vmatpush.xpose.msra.mxu0 0.0
    %572 = vmatpush.xpose.msra.mxu0 0.0
    %573 = vmatpush.xpose.msra.mxu0 0.0
    %574 = vmatpush.xpose.msra.mxu0 0.0
    %575 = vmatpush.xpose.msra.mxu0 0.0
    %576 = vmatpush.xpose.msra.mxu0 0.0
    %577 = vmatpush.xpose.msra.mxu0 0.0
    %578 = vmatpush.xpose.msra.mxu0 0.0
    %579 = vmatpush.xpose.msra.mxu0 0.0
    %580 = vmatpush.xpose.msra.mxu0 0.0
    %581 = vmatpush.xpose.msra.mxu0 0.0
    %582 = vmatpush.xpose.msra.mxu0 0.0
    %583 = vmatpush.xpose.msra.mxu0 %v566
    %584 = vmatmul.f32.gmra.mxu0 %v564
    %v585 = vpop.f32.mrf.mxu0
    %v586 = vadd.f32 0.0, %v585
    %587 = vdwg.mxu0
    %v588 = vmul.f32 %v558, 0.35355338
    %v589 = vmul.f32 %v586, 0.35355338
    %v590 = vadd.f32 %v588, %v170
    %v591 = vadd.f32 %v589, %v171
    %v592 = vsel %vm116, %v590, -inf
    %593 = vmax.xlane.f32.xlu0 %v592
    %v594 = vpop.xlane.xlu0 %593
    %v595 = vsel %vm116, %v591, -inf
    %596 = vmax.xlane.f32.xlu0 %v595
    %v597 = vpop.xlane.xlu0 %596
    %v598 = vsub.f32 %v590, %v594
    %v599 = vsub.f32 %v591, %v597
    %v600 = vmul.f32 %v598, 1.442695
    %v601 = vpow.pop %v600
    %v602 = vmul.f32 %v599, 1.442695
    %v603 = vpow.pop %v602
    %v604 = vsel %vm116, %v601, 0.0
    %605 = vadd.xlane.f32.xlu0 %v604
    %v606 = vpop.xlane.xlu0 %605
    %v607 = vsel %vm116, %v603, 0.0
    %608 = vadd.xlane.f32.xlu0 %v607
    %v609 = vpop.xlane.xlu0 %608
    %v610 = vrcp.pop %v606
    %v611 = vrcp.pop %v609
    %v612 = vmul.f32 %v601, %v610
    %v613 = vmul.f32 %v603, %v611
    %s614 = scalar_lea.vmem %s12, 48
    %615 = vst.msk [vmem:[%s614] sm:$0xff] %vm116, %v612
    %616 = vst.msk [vmem:[%s614 + $0x8] sm:$0xff] %vm116, %v613
    %v617 = vadd.f32 %v478, %v612
    %v618 = vadd.f32 %v479, %v613
    %619 = vrot.lane.b32.xlu0 %v108, 40
    %v620 = vpop.permute.xlu0 %619
    %v623 = vsel %vm116, %v612, 0
    %625 = vmatpush.msra.mxu0 0.0
    %626 = vmatpush.msra.mxu0 0.0
    %627 = vmatpush.msra.mxu0 0.0
    %628 = vmatpush.msra.mxu0 0.0
    %629 = vmatpush.msra.mxu0 0.0
    %630 = vmatpush.msra.mxu0 0.0
    %631 = vmatpush.msra.mxu0 0.0
    %632 = vmatpush.msra.mxu0 0.0
    %633 = vmatpush.msra.mxu0 0.0
    %634 = vmatpush.msra.mxu0 0.0
    %635 = vmatpush.msra.mxu0 0.0
    %636 = vmatpush.msra.mxu0 0.0
    %637 = vmatpush.msra.mxu0 0.0
    %638 = vmatpush.msra.mxu0 0.0
    %639 = vmatpush.msra.mxu0 0.0
    %640 = vmatpush.msra.mxu0 %v620
    %641 = vmatmul.f32.gmra.mxu0 %v623
    %v642 = vpop.f32.mrf.mxu0
    %v643 = vadd.f32 0.0, %v642
    %644 = vdwg.mxu0
    %645 = vrot.lane.b32.xlu0 %v111, 40
    %v646 = vpop.permute.xlu0 %645
    %v649 = vsel %vm116, %v613, 0
    %651 = vmatpush.msra.mxu0 0.0
    %652 = vmatpush.msra.mxu0 0.0
    %653 = vmatpush.msra.mxu0 0.0
    %654 = vmatpush.msra.mxu0 0.0
    %655 = vmatpush.msra.mxu0 0.0
    %656 = vmatpush.msra.mxu0 0.0
    %657 = vmatpush.msra.mxu0 0.0
    %658 = vmatpush.msra.mxu0 0.0
    %659 = vmatpush.msra.mxu0 0.0
    %660 = vmatpush.msra.mxu0 0.0
    %661 = vmatpush.msra.mxu0 0.0
    %662 = vmatpush.msra.mxu0 0.0
    %663 = vmatpush.msra.mxu0 0.0
    %664 = vmatpush.msra.mxu0 0.0
    %665 = vmatpush.msra.mxu0 0.0
    %666 = vmatpush.msra.mxu0 %v646
    %667 = vmatmul.f32.gmra.mxu0 %v649
    %v668 = vpop.f32.mrf.mxu0
    %v669 = vadd.f32 0.0, %v668
    %670 = vdwg.mxu0
    %673 = vrot.lane.b32.xlu0 %v365, 8
    %v674 = vpop.permute.xlu0 %673
    %675 = vrot.lane.b32.xlu0 %v391, 8
    %v676 = vpop.permute.xlu0 %675
    %681 = vrot.lane.b32.xlu0 %v504, 16
    %v682 = vpop.permute.xlu0 %681
    %683 = vrot.lane.b32.xlu0 %v530, 16
    %v684 = vpop.permute.xlu0 %683
    %689 = vrot.lane.b32.xlu0 %v643, 24
    %v690 = vpop.permute.xlu0 %689
    %691 = vrot.lane.b32.xlu0 %v669, 24
    %v692 = vpop.permute.xlu0 %691
    %v695 = vsel %vm116, %v226, %v674
    %v696 = vsel %vm116, %v252, %v676
    %vm697 = vcmask 130048
    %v698 = vsel %vm697, %v695, %v682
    %v699 = vsel %vm697, %v696, %v684
    %vm700 = vcmask 195584
    %v701 = vsel %vm700, %v698, %v690
    %v702 = vsel %vm700, %v699, %v692
    %v703 = vperm.slane %v79, 0
    %708 = vrot.lane.b32.xlu0 %v61, 32
    %v709 = vpop.permute.xlu0 %708
    %710 = vrot.lane.b32.xlu0 %v62, 32
    %v711 = vpop.permute.xlu0 %710
    %712 = vrot.lane.b32.xlu0 %v63, 32
    %v713 = vpop.permute.xlu0 %712
    %714 = vrot.lane.b32.xlu0 %v64, 32
    %v715 = vpop.permute.xlu0 %714
    %v721 = vsel %vm83, %v701, 0
    %v724 = vsel %vm83, %v702, 0
    %726 = vmatpush.msra.mxu0 0.0
    %727 = vmatpush.msra.mxu0 0.0
    %728 = vmatpush.msra.mxu0 0.0
    %729 = vmatpush.msra.mxu0 0.0
    %730 = vmatpush.msra.mxu0 0.0
    %731 = vmatpush.msra.mxu0 0.0
    %732 = vmatpush.msra.mxu0 0.0
    %733 = vmatpush.msra.mxu0 0.0
    %734 = vmatpush.msra.mxu0 0.0
    %735 = vmatpush.msra.mxu0 0.0
    %736 = vmatpush.msra.mxu0 0.0
    %737 = vmatpush.msra.mxu0 0.0
    %738 = vmatpush.msra.mxu0 %v715
    %739 = vmatpush.msra.mxu0 %v713
    %740 = vmatpush.msra.mxu0 %v711
    %741 = vmatpush.msra.mxu0 %v709
    %742 = vmatmul.f32.gmra.mxu0 %v721
    %v743 = vpop.f32.mrf.mxu0
    %v744 = vadd.f32 %v703, %v743
    %745 = vmatmul.f32.gmra.mxu0 %v724
    %v746 = vpop.f32.mrf.mxu0
    %v747 = vadd.f32 %v703, %v746
    %748 = vdwg.mxu0
    %v749 = vadd.f32 %v46, %v744
    %v750 = vadd.f32 %v47, %v747
    %v751 = vsel %vm83, %v749, 0.0
    %752 = vadd.xlane.f32.xlu0 %v751
    %v753 = vpop.xlane.xlu0 %752
    %v754 = vsel %vm83, %v750, 0.0
    %755 = vadd.xlane.f32.xlu0 %v754
    %v756 = vpop.xlane.xlu0 %755
    %v757 = vrcp.pop 32.0
    %v758 = vmul.f32 32.0, %v757
    %v759 = vsub.f32 1.0, %v758
    %v760 = vmul.f32 %v757, %v759
    %v761 = vadd.f32 %v757, %v760
    %vm762 = vweird.f32 %v757
    %v763 = vsel %vm762, %v757, %v761
    %v764 = vmul.f32 %v753, %v763
    %v765 = vmul.f32 %v756, %v763
    %v766 = vsub.f32 %v749, %v764
    %v767 = vsub.f32 %v750, %v765
    %v768 = vmul.f32 %v766, %v766
    %v769 = vmul.f32 %v767, %v767
    %v770 = vsel %vm83, %v768, 0.0
    %771 = vadd.xlane.f32.xlu0 %v770
    %v772 = vpop.xlane.xlu0 %771
    %v773 = vsel %vm83, %v769, 0.0
    %774 = vadd.xlane.f32.xlu0 %v773
    %v775 = vpop.xlane.xlu0 %774
    %v776 = vmul.f32 %v772, %v763
    %v777 = vmul.f32 %v775, %v763
    %v778 = vadd.f32 %v776, 1e-12
    %v779 = vadd.f32 %v777, 1e-12
    %v780 = vrsqrt.pop %v778
    %v781 = vmul.f32 %v780, %v778
    %v782 = vmul.f32 %v781, %v780
    %v783 = vmul.f32 0.5, %v782
    %v784 = vsub.f32 1.5, %v783
    %v785 = vmul.f32 %v780, %v784
    %vm786 = vweird.f32 %v778
    %vm787 = vweird.f32 %v780
    %vm788 = vmor %vm786, %vm787
    %v789 = vsel %vm788, %v780, %v785
    %v790 = vrsqrt.pop %v779
    %v791 = vmul.f32 %v790, %v779
    %v792 = vmul.f32 %v791, %v790
    %v793 = vmul.f32 0.5, %v792
    %v794 = vsub.f32 1.5, %v793
    %v795 = vmul.f32 %v790, %v794
    %vm796 = vweird.f32 %v779
    %vm797 = vweird.f32 %v790
    %vm798 = vmor %vm796, %vm797
    %v799 = vsel %vm798, %v790, %v795
    %v800 = vmul.f32 %v766, %v789
    %v801 = vmul.f32 %v767, %v799
    %v802 = vperm.slane %v79, 1
    %v803 = vmul.f32 %v800, %v802
    %v804 = vmul.f32 %v801, %v802
    %v805 = vperm.slane %v79, 2
    %v806 = vadd.f32 %v803, %v805
    %v807 = vadd.f32 %v804, %v805
    %v809 = vperm.slane %v70, 0
    %v812 = vsel %vm83, %v806, 0
    %v815 = vsel %vm83, %v807, 0
    %817 = vmatpush.msra.mxu0 0.0
    %818 = vmatpush.msra.mxu0 0.0
    %819 = vmatpush.msra.mxu0 0.0
    %820 = vmatpush.msra.mxu0 0.0
    %821 = vmatpush.msra.mxu0 0.0
    %822 = vmatpush.msra.mxu0 0.0
    %823 = vmatpush.msra.mxu0 0.0
    %824 = vmatpush.msra.mxu0 0.0
    %825 = vmatpush.msra.mxu0 0.0
    %826 = vmatpush.msra.mxu0 0.0
    %827 = vmatpush.msra.mxu0 0.0
    %828 = vmatpush.msra.mxu0 0.0
    %829 = vmatpush.msra.mxu0 %v69
    %830 = vmatpush.msra.mxu0 %v68
    %831 = vmatpush.msra.mxu0 %v67
    %832 = vmatpush.msra.mxu0 %v66
    %833 = vmatmul.f32.gmra.mxu0 %v812
    %v834 = vpop.f32.mrf.mxu0
    %v835 = vadd.f32 %v809, %v834
    %836 = vmatmul.f32.gmra.mxu0 %v815
    %v837 = vpop.f32.mrf.mxu0
    %v838 = vadd.f32 %v809, %v837
    %839 = vdwg.mxu0
    %v840 = vmul.f32 %v835, 0.5
    %v841 = vmul.f32 %v838, 0.5
    %v842 = vmul.f32 %v835, %v835
    %v843 = vmul.f32 %v838, %v838
    %v844 = vmul.f32 %v835, %v842
    %v845 = vmul.f32 %v838, %v843
    %v846 = vmul.f32 %v844, 0.044715
    %v847 = vmul.f32 %v845, 0.044715
    %v848 = vadd.f32 %v835, %v846
    %v849 = vadd.f32 %v838, %v847
    %v850 = vmul.f32 %v848, 0.7978846
    %v851 = vmul.f32 %v849, 0.7978846
    %v852 = vtanh.pop %v850
    %v853 = vtanh.pop %v851
    %v854 = vadd.f32 %v852, 1.0
    %v855 = vadd.f32 %v853, 1.0
    %v856 = vmul.f32 %v840, %v854
    %v857 = vmul.f32 %v841, %v855
    %v858 = vperm.slane %v79, 3
    %vm859 = vcmask 523264
    %v861 = vsel %vm859, %v856, 0
    %v864 = vsel %vm859, %v857, 0
    %866 = vmatpush.msra.mxu0 0.0
    %867 = vmatpush.msra.mxu0 0.0
    %868 = vmatpush.msra.mxu0 0.0
    %869 = vmatpush.msra.mxu0 0.0
    %870 = vmatpush.msra.mxu0 0.0
    %871 = vmatpush.msra.mxu0 0.0
    %872 = vmatpush.msra.mxu0 0.0
    %873 = vmatpush.msra.mxu0 0.0
    %874 = vmatpush.msra.mxu0 %v78
    %875 = vmatpush.msra.mxu0 %v77
    %876 = vmatpush.msra.mxu0 %v76
    %877 = vmatpush.msra.mxu0 %v75
    %878 = vmatpush.msra.mxu0 %v74
    %879 = vmatpush.msra.mxu0 %v73
    %880 = vmatpush.msra.mxu0 %v72
    %881 = vmatpush.msra.mxu0 %v71
    %882 = vmatmul.f32.gmra.mxu0 %v861
    %v883 = vpop.f32.mrf.mxu0
    %v884 = vadd.f32 %v858, %v883
    %885 = vmatmul.f32.gmra.mxu0 %v864
    %v886 = vpop.f32.mrf.mxu0
    %v887 = vadd.f32 %v858, %v886
    %888 = vdwg.mxu0
    %v889 = vadd.f32 %v806, %v884
    %v890 = vadd.f32 %v807, %v887
    %v891 = vsel %vm83, %v889, 0.0
    %892 = vadd.xlane.f32.xlu0 %v891
    %v893 = vpop.xlane.xlu0 %892
    %v894 = vsel %vm83, %v890, 0.0
    %895 = vadd.xlane.f32.xlu0 %v894
    %v896 = vpop.xlane.xlu0 %895
    %v897 = vmul.f32 %v893, %v763
    %v898 = vmul.f32 %v896, %v763
    %v899 = vsub.f32 %v889, %v897
    %v900 = vsub.f32 %v890, %v898
    %v901 = vmul.f32 %v899, %v899
    %v902 = vmul.f32 %v900, %v900
    %v903 = vsel %vm83, %v901, 0.0
    %904 = vadd.xlane.f32.xlu0 %v903
    %v905 = vpop.xlane.xlu0 %904
    %v906 = vsel %vm83, %v902, 0.0
    %907 = vadd.xlane.f32.xlu0 %v906
    %v908 = vpop.xlane.xlu0 %907
    %v909 = vmul.f32 %v905, %v763
    %v910 = vmul.f32 %v908, %v763
    %v911 = vadd.f32 %v909, 1e-12
    %v912 = vadd.f32 %v910, 1e-12
    %v913 = vrsqrt.pop %v911
    %v914 = vmul.f32 %v913, %v911
    %v915 = vmul.f32 %v914, %v913
    %v916 = vmul.f32 0.5, %v915
    %v917 = vsub.f32 1.5, %v916
    %v918 = vmul.f32 %v913, %v917
    %vm919 = vweird.f32 %v911
    %vm920 = vweird.f32 %v913
    %vm921 = vmor %vm919, %vm920
    %v922 = vsel %vm921, %v913, %v918
    %v923 = vrsqrt.pop %v912
    %v924 = vmul.f32 %v923, %v912
    %v925 = vmul.f32 %v924, %v923
    %v926 = vmul.f32 0.5, %v925
    %v927 = vsub.f32 1.5, %v926
    %v928 = vmul.f32 %v923, %v927
    %vm929 = vweird.f32 %v912
    %vm930 = vweird.f32 %v923
    %vm931 = vmor %vm929, %vm930
    %v932 = vsel %vm931, %v923, %v928
    %v933 = vmul.f32 %v899, %v922
    %v934 = vmul.f32 %v900, %v932
    %v935 = vperm.slane %v79, 4
    %v936 = vmul.f32 %v933, %v935
    %v937 = vmul.f32 %v934, %v935
    %v938 = vperm.slane %v79, 5
    %v939 = vadd.f32 %v936, %v938
    %v940 = vadd.f32 %v937, %v938
    %v941 = vmul.f32 %v617, 0.25
    %v942 = vmul.f32 %v618, 0.25
    %vm943 = vcmp.gt.f32.partialorder %v48, 0.0
    %vm944 = vcmp.gt.f32.partialorder %v54, 0.0
    %v945 = vsel %vm943, 1, 0
    %v946 = vsel %vm944, 1, 0
    %v947 = vperm.slane %v945, 0
    %v948 = vperm.slane %v946, 0
    %vm949 = vcmp.eq.s32.totalorder %v947, 1
    %vm950 = vcmp.eq.s32.totalorder %v948, 1
    %v951 = vsel %vm949, %v941, -1e+09
    %v952 = vsel %vm950, %v942, -1e+09
    %v953 = vsel %vm116, %v951, -inf
    %954 = vmax.xlane.f32.xlu0 %v953
    %v955 = vpop.xlane.xlu0 %954
    %v956 = vsel %vm116, %v952, -inf
    %957 = vmax.xlane.f32.xlu0 %v956
    %v958 = vpop.xlane.xlu0 %957
    %v959 = vsub.f32 %v951, %v955
    %v960 = vsub.f32 %v952, %v958
    %v961 = vmul.f32 %v959, 1.442695
    %v962 = vpow.pop %v961
    %v963 = vmul.f32 %v960, 1.442695
    %v964 = vpow.pop %v963
    %v965 = vperm.slane %v48, 0
    %v966 = vperm.slane %v54, 0
    %v969 = vmul.f32 %v962, %v965
    %v970 = vmul.f32 %v964, %v966
    %v971 = vsel %vm116, %v969, 0.0
    %972 = vadd.xlane.f32.xlu0 %v971
    %v973 = vpop.xlane.xlu0 %972
    %v974 = vsel %vm116, %v970, 0.0
    %975 = vadd.xlane.f32.xlu0 %v974
    %v976 = vpop.xlane.xlu0 %975
    %v977 = vmax.f32 %v973, 1e-30
    %v978 = vmax.f32 %v976, 1e-30
    %v979 = vrcp.pop %v977
    %v980 = vmul.f32 %v977, %v979
    %v981 = vsub.f32 1.0, %v980
    %v982 = vmul.f32 %v979, %v981
    %v983 = vadd.f32 %v979, %v982
    %vm984 = vweird.f32 %v977
    %vm985 = vweird.f32 %v979
    %vm986 = vmor %vm984, %vm985
    %v987 = vsel %vm986, %v979, %v983
    %v988 = vand.u32 2147483647, %v977
    %vm989 = vcmp.eq.f32.partialorder %v988, 8.507059e+37
    %v990 = vand.u32 %v977, 2147483648
    %v991 = vor.u32 1.1754944e-38, %v990
    %v992 = vsel %vm989, %v991, %v987
    %v993 = vmul.f32 %v969, %v992
    %v994 = vrcp.pop %v978
    %v995 = vmul.f32 %v978, %v994
    %v996 = vsub.f32 1.0, %v995
    %v997 = vmul.f32 %v994, %v996
    %v998 = vadd.f32 %v994, %v997
    %vm999 = vweird.f32 %v978
    %vm1000 = vweird.f32 %v994
    %vm1001 = vmor %vm999, %vm1000
    %v1002 = vsel %vm1001, %v994, %v998
    %v1003 = vand.u32 2147483647, %v978
    %vm1004 = vcmp.eq.f32.partialorder %v1003, 8.507059e+37
    %v1005 = vand.u32 %v978, 2147483648
    %v1006 = vor.u32 1.1754944e-38, %v1005
    %v1007 = vsel %vm1004, %v1006, %v1002
    %v1008 = vmul.f32 %v970, %v1007
    %v1009 = vlog2.pop %v977
    %v1010 = vmul.f32 %v1009, 0.6931472
    %v1011 = vlog2.pop %v978
    %v1012 = vmul.f32 %v1011, 0.6931472
    %v1013 = vsub.f32 %v959, %v1010
    %v1014 = vsub.f32 %v960, %v1012
    %v1015 = vmul.f32 %v993, %v1013
    %v1016 = vmul.f32 %v1008, %v1014
    %v1017 = vsel %vm949, %v1015, 0.0
    %v1018 = vsel %vm950, %v1016, 0.0
    %v1019 = vsel %vm116, %v1017, 0.0
    %1020 = vadd.xlane.f32.xlu0 %v1019
    %v1021 = vpop.xlane.xlu0 %1020
    %v1022 = vsel %vm116, %v1018, 0.0
    %1023 = vadd.xlane.f32.xlu0 %v1022
    %v1024 = vpop.xlane.xlu0 %1023
    %v1025 = vlaneseq
    %v1026 = vshrl.u32 %v1025, 7
    %1028 = vset.pattern.permute.xlu0 %v1026
    %1029 = vperm.xlu0 %1028, %v965
    %v1030 = vpop.permute.xlu0 %1029
    %v1031 = vperm.slane %v48, 1
    %v1032 = vlaneseq
    %v1033 = vshrl.u32 %v1032, 7
    %1035 = vset.pattern.permute.xlu0 %v1033
    %1036 = vperm.xlu0 %1035, %v1031
    %v1037 = vpop.permute.xlu0 %1036
    %v1040 = vmul.f32 %v1021, %v1030
    %v1041 = vmul.f32 %v1024, %v1037
    %1044 = vset.pattern.permute.xlu0 0
    %1045 = vperm.xlu0 %1044, %v1040
    %v1046 = vpop.permute.xlu0 %1045
    %1047 = vset.pattern.permute.xlu0 0
    %1048 = vperm.xlu0 %1047, %v1041
    %v1049 = vpop.permute.xlu0 %1048
    %v1050 = vlaneseq
    %v1051 = vand.u32 %v1050, 127
    %v1052 = vperm.slane %v1046, %v1051
    %v1053 = vperm.slane %v1049, %v1051
    %vm1054 = vcmask 1041409
    %v1055 = vsel %vm1054, %v1053, %v1052
    %v1057 = vsel %vm56, %v1055, 0.0
    %1058 = vadd.xlane.f32.xlu0 %v1057
    %v1059 = vpop.xlane.xlu0 %1058
    %v1060 = vrcp.pop %v60
    %v1061 = vmul.f32 %v60, %v1060
    %v1062 = vsub.f32 1.0, %v1061
    %v1063 = vmul.f32 %v1060, %v1062
    %v1064 = vadd.f32 %v1060, %v1063
    %vm1065 = vweird.f32 %v60
    %vm1066 = vweird.f32 %v1060
    %vm1067 = vmor %vm1065, %vm1066
    %v1068 = vsel %vm1067, %v1060, %v1064
    %v1069 = vand.u32 2147483647, %v60
    %vm1070 = vcmp.eq.f32.partialorder %v1069, 8.507059e+37
    %v1071 = vand.u32 %v60, 2147483648
    %v1072 = vor.u32 1.1754944e-38, %v1071
    %v1073 = vsel %vm1070, %v1072, %v1068
    %v1074 = vmul.f32 %v1059, %v1073
    %v1075 = vadd.f32 %v1074, 0.0
    %s1076 = scalar_lea.vmem %s3, 32
    %v1077 = vld [vmem:[%s1076] sm:$0xff]
    %v1078 = vld [vmem:[%s1076 + $0x8] sm:$0xff]
    %v1079 = vld [vmem:[%s1076 + $0x10] sm:$0xff]
    %v1080 = vld [vmem:[%s1076 + $0x18] sm:$0xff]
    %s1081 = scalar_lea.vmem %s4, 1
    %v1082 = vld [vmem:[%s1081] sm:$0x1]
    %s1083 = scalar_lea.vmem %s5, 32
    %v1084 = vld [vmem:[%s1083] sm:$0xff]
    %v1085 = vld [vmem:[%s1083 + $0x8] sm:$0xff]
    %v1086 = vld [vmem:[%s1083 + $0x10] sm:$0xff]
    %v1087 = vld [vmem:[%s1083 + $0x18] sm:$0xff]
    %s1088 = scalar_lea.vmem %s6, 1
    %v1089 = vld [vmem:[%s1088] sm:$0x1]
    %s1090 = scalar_lea.vmem %s7, 64
    %v1091 = vld [vmem:[%s1090] sm:$0xff]
    %v1092 = vld [vmem:[%s1090 + $0x8] sm:$0xff]
    %v1093 = vld [vmem:[%s1090 + $0x10] sm:$0xff]
    %v1094 = vld [vmem:[%s1090 + $0x18] sm:$0xff]
    %v1095 = vld [vmem:[%s1090 + $0x20] sm:$0xff]
    %v1096 = vld [vmem:[%s1090 + $0x28] sm:$0xff]
    %v1097 = vld [vmem:[%s1090 + $0x30] sm:$0xff]
    %v1098 = vld [vmem:[%s1090 + $0x38] sm:$0xff]
    %s1099 = scalar_lea.vmem %s8, 8
    %v1100 = vld [vmem:[%s1099] sm:$0x3f]
    %v1102 = vperm.slane %v1082, 0
    %v1105 = vsel %vm83, %v939, 0
    %v1108 = vsel %vm83, %v940, 0
    %1110 = vmatpush.msra.mxu0 0.0
    %1111 = vmatpush.msra.mxu0 0.0
    %1112 = vmatpush.msra.mxu0 0.0
    %1113 = vmatpush.msra.mxu0 0.0
    %1114 = vmatpush.msra.mxu0 0.0
    %1115 = vmatpush.msra.mxu0 0.0
    %1116 = vmatpush.msra.mxu0 0.0
    %1117 = vmatpush.msra.mxu0 0.0
    %1118 = vmatpush.msra.mxu0 0.0
    %1119 = vmatpush.msra.mxu0 0.0
    %1120 = vmatpush.msra.mxu0 0.0
    %1121 = vmatpush.msra.mxu0 0.0
    %1122 = vmatpush.msra.mxu0 %v1080
    %1123 = vmatpush.msra.mxu0 %v1079
    %1124 = vmatpush.msra.mxu0 %v1078
    %1125 = vmatpush.msra.mxu0 %v1077
    %1126 = vmatmul.f32.gmra.mxu0 %v1105
    %v1127 = vpop.f32.mrf.mxu0
    %v1128 = vadd.f32 %v1102, %v1127
    %1129 = vmatmul.f32.gmra.mxu0 %v1108
    %v1130 = vpop.f32.mrf.mxu0
    %v1131 = vadd.f32 %v1102, %v1130
    %1132 = vdwg.mxu0
    %1134 = vrot.lane.b32.xlu0 %v1128, 96
    %v1135 = vpop.permute.xlu0 %1134
    %v1136 = vsel %vm116, %v1128, 0
    %v1138 = vsel %vm116, %v1135, 0
    %1140 = vmatpush.xpose.msra.mxu0 0.0
    %1141 = vmatpush.xpose.msra.mxu0 0.0
    %1142 = vmatpush.xpose.msra.mxu0 0.0
    %1143 = vmatpush.xpose.msra.mxu0 0.0
    %1144 = vmatpush.xpose.msra.mxu0 0.0
    %1145 = vmatpush.xpose.msra.mxu0 0.0
    %1146 = vmatpush.xpose.msra.mxu0 0.0
    %1147 = vmatpush.xpose.msra.mxu0 0.0
    %1148 = vmatpush.xpose.msra.mxu0 0.0
    %1149 = vmatpush.xpose.msra.mxu0 0.0
    %1150 = vmatpush.xpose.msra.mxu0 0.0
    %1151 = vmatpush.xpose.msra.mxu0 0.0
    %1152 = vmatpush.xpose.msra.mxu0 0.0
    %1153 = vmatpush.xpose.msra.mxu0 0.0
    %1154 = vmatpush.xpose.msra.mxu0 0.0
    %1155 = vmatpush.xpose.msra.mxu0 %v1138
    %1156 = vmatmul.f32.gmra.mxu0 %v1136
    %v1157 = vpop.f32.mrf.mxu0
    %v1158 = vadd.f32 0.0, %v1157
    %1159 = vdwg.mxu0
    %1161 = vrot.lane.b32.xlu0 %v1131, 96
    %v1162 = vpop.permute.xlu0 %1161
    %v1163 = vsel %vm116, %v1131, 0
    %v1165 = vsel %vm116, %v1162, 0
    %1167 = vmatpush.xpose.msra.mxu0 0.0
    %1168 = vmatpush.xpose.msra.mxu0 0.0
    %1169 = vmatpush.xpose.msra.mxu0 0.0
    %1170 = vmatpush.xpose.msra.mxu0 0.0
    %1171 = vmatpush.xpose.msra.mxu0 0.0
    %1172 = vmatpush.xpose.msra.mxu0 0.0
    %1173 = vmatpush.xpose.msra.mxu0 0.0
    %1174 = vmatpush.xpose.msra.mxu0 0.0
    %1175 = vmatpush.xpose.msra.mxu0 0.0
    %1176 = vmatpush.xpose.msra.mxu0 0.0
    %1177 = vmatpush.xpose.msra.mxu0 0.0
    %1178 = vmatpush.xpose.msra.mxu0 0.0
    %1179 = vmatpush.xpose.msra.mxu0 0.0
    %1180 = vmatpush.xpose.msra.mxu0 0.0
    %1181 = vmatpush.xpose.msra.mxu0 0.0
    %1182 = vmatpush.xpose.msra.mxu0 %v1165
    %1183 = vmatmul.f32.gmra.mxu0 %v1163
    %v1184 = vpop.f32.mrf.mxu0
    %v1185 = vadd.f32 0.0, %v1184
    %1186 = vdwg.mxu0
    %v1187 = vmul.f32 %v1158, 0.35355338
    %v1188 = vmul.f32 %v1185, 0.35355338
    %v1189 = vadd.f32 %v1187, %v170
    %v1190 = vadd.f32 %v1188, %v171
    %v1191 = vsel %vm116, %v1189, -inf
    %1192 = vmax.xlane.f32.xlu0 %v1191
    %v1193 = vpop.xlane.xlu0 %1192
    %v1194 = vsel %vm116, %v1190, -inf
    %1195 = vmax.xlane.f32.xlu0 %v1194
    %v1196 = vpop.xlane.xlu0 %1195
    %v1197 = vsub.f32 %v1189, %v1193
    %v1198 = vsub.f32 %v1190, %v1196
    %v1199 = vmul.f32 %v1197, 1.442695
    %v1200 = vpow.pop %v1199
    %v1201 = vmul.f32 %v1198, 1.442695
    %v1202 = vpow.pop %v1201
    %v1203 = vsel %vm116, %v1200, 0.0
    %1204 = vadd.xlane.f32.xlu0 %v1203
    %v1205 = vpop.xlane.xlu0 %1204
    %v1206 = vsel %vm116, %v1202, 0.0
    %1207 = vadd.xlane.f32.xlu0 %v1206
    %v1208 = vpop.xlane.xlu0 %1207
    %v1209 = vrcp.pop %v1205
    %v1210 = vrcp.pop %v1208
    %v1211 = vmul.f32 %v1200, %v1209
    %v1212 = vmul.f32 %v1202, %v1210
    %s1213 = scalar_lea.vmem %s12, 64
    %1214 = vst.msk [vmem:[%s1213] sm:$0xff] %vm116, %v1211
    %1215 = vst.msk [vmem:[%s1213 + $0x8] sm:$0xff] %vm116, %v1212
    %v1216 = vadd.f32 %v1211, 0.0
    %v1217 = vadd.f32 %v1212, 0.0
    %1218 = vrot.lane.b32.xlu0 %v1128, 64
    %v1219 = vpop.permute.xlu0 %1218
    %v1222 = vsel %vm116, %v1211, 0
    %1224 = vmatpush.msra.mxu0 0.0
    %1225 = vmatpush.msra.mxu0 0.0
    %1226 = vmatpush.msra.mxu0 0.0
    %1227 = vmatpush.msra.mxu0 0.0
    %1228 = vmatpush.msra.mxu0 0.0
    %1229 = vmatpush.msra.mxu0 0.0
    %1230 = vmatpush.msra.mxu0 0.0
    %1231 = vmatpush.msra.mxu0 0.0
    %1232 = vmatpush.msra.mxu0 0.0
    %1233 = vmatpush.msra.mxu0 0.0
    %1234 = vmatpush.msra.mxu0 0.0
    %1235 = vmatpush.msra.mxu0 0.0
    %1236 = vmatpush.msra.mxu0 0.0
    %1237 = vmatpush.msra.mxu0 0.0
    %1238 = vmatpush.msra.mxu0 0.0
    %1239 = vmatpush.msra.mxu0 %v1219
    %1240 = vmatmul.f32.gmra.mxu0 %v1222
    %v1241 = vpop.f32.mrf.mxu0
    %v1242 = vadd.f32 0.0, %v1241
    %1243 = vdwg.mxu0
    %1244 = vrot.lane.b32.xlu0 %v1131, 64
    %v1245 = vpop.permute.xlu0 %1244
    %v1248 = vsel %vm116, %v1212, 0
    %1250 = vmatpush.msra.mxu0 0.0
    %1251 = vmatpush.msra.mxu0 0.0
    %1252 = vmatpush.msra.mxu0 0.0
    %1253 = vmatpush.msra.mxu0 0.0
    %1254 = vmatpush.msra.mxu0 0.0
    %1255 = vmatpush.msra.mxu0 0.0
    %1256 = vmatpush.msra.mxu0 0.0
    %1257 = vmatpush.msra.mxu0 0.0
    %1258 = vmatpush.msra.mxu0 0.0
    %1259 = vmatpush.msra.mxu0 0.0
    %1260 = vmatpush.msra.mxu0 0.0
    %1261 = vmatpush.msra.mxu0 0.0
    %1262 = vmatpush.msra.mxu0 0.0
    %1263 = vmatpush.msra.mxu0 0.0
    %1264 = vmatpush.msra.mxu0 0.0
    %1265 = vmatpush.msra.mxu0 %v1245
    %1266 = vmatmul.f32.gmra.mxu0 %v1248
    %v1267 = vpop.f32.mrf.mxu0
    %v1268 = vadd.f32 0.0, %v1267
    %1269 = vdwg.mxu0
    %1270 = vrot.lane.b32.xlu0 %v1128, 120
    %v1271 = vpop.permute.xlu0 %1270
    %1272 = vrot.lane.b32.xlu0 %v1128, 88
    %v1273 = vpop.permute.xlu0 %1272
    %v1274 = vsel %vm116, %v1271, 0
    %v1276 = vsel %vm116, %v1273, 0
    %1278 = vmatpush.xpose.msra.mxu0 0.0
    %1279 = vmatpush.xpose.msra.mxu0 0.0
    %1280 = vmatpush.xpose.msra.mxu0 0.0
    %1281 = vmatpush.xpose.msra.mxu0 0.0
    %1282 = vmatpush.xpose.msra.mxu0 0.0
    %1283 = vmatpush.xpose.msra.mxu0 0.0
    %1284 = vmatpush.xpose.msra.mxu0 0.0
    %1285 = vmatpush.xpose.msra.mxu0 0.0
    %1286 = vmatpush.xpose.msra.mxu0 0.0
    %1287 = vmatpush.xpose.msra.mxu0 0.0
    %1288 = vmatpush.xpose.msra.mxu0 0.0
    %1289 = vmatpush.xpose.msra.mxu0 0.0
    %1290 = vmatpush.xpose.msra.mxu0 0.0
    %1291 = vmatpush.xpose.msra.mxu0 0.0
    %1292 = vmatpush.xpose.msra.mxu0 0.0
    %1293 = vmatpush.xpose.msra.mxu0 %v1276
    %1294 = vmatmul.f32.gmra.mxu0 %v1274
    %v1295 = vpop.f32.mrf.mxu0
    %v1296 = vadd.f32 0.0, %v1295
    %1297 = vdwg.mxu0
    %1298 = vrot.lane.b32.xlu0 %v1131, 120
    %v1299 = vpop.permute.xlu0 %1298
    %1300 = vrot.lane.b32.xlu0 %v1131, 88
    %v1301 = vpop.permute.xlu0 %1300
    %v1302 = vsel %vm116, %v1299, 0
    %v1304 = vsel %vm116, %v1301, 0
    %1306 = vmatpush.xpose.msra.mxu0 0.0
    %1307 = vmatpush.xpose.msra.mxu0 0.0
    %1308 = vmatpush.xpose.msra.mxu0 0.0
    %1309 = vmatpush.xpose.msra.mxu0 0.0
    %1310 = vmatpush.xpose.msra.mxu0 0.0
    %1311 = vmatpush.xpose.msra.mxu0 0.0
    %1312 = vmatpush.xpose.msra.mxu0 0.0
    %1313 = vmatpush.xpose.msra.mxu0 0.0
    %1314 = vmatpush.xpose.msra.mxu0 0.0
    %1315 = vmatpush.xpose.msra.mxu0 0.0
    %1316 = vmatpush.xpose.msra.mxu0 0.0
    %1317 = vmatpush.xpose.msra.mxu0 0.0
    %1318 = vmatpush.xpose.msra.mxu0 0.0
    %1319 = vmatpush.xpose.msra.mxu0 0.0
    %1320 = vmatpush.xpose.msra.mxu0 0.0
    %1321 = vmatpush.xpose.msra.mxu0 %v1304
    %1322 = vmatmul.f32.gmra.mxu0 %v1302
    %v1323 = vpop.f32.mrf.mxu0
    %v1324 = vadd.f32 0.0, %v1323
    %1325 = vdwg.mxu0
    %v1326 = vmul.f32 %v1296, 0.35355338
    %v1327 = vmul.f32 %v1324, 0.35355338
    %v1328 = vadd.f32 %v1326, %v170
    %v1329 = vadd.f32 %v1327, %v171
    %v1330 = vsel %vm116, %v1328, -inf
    %1331 = vmax.xlane.f32.xlu0 %v1330
    %v1332 = vpop.xlane.xlu0 %1331
    %v1333 = vsel %vm116, %v1329, -inf
    %1334 = vmax.xlane.f32.xlu0 %v1333
    %v1335 = vpop.xlane.xlu0 %1334
    %v1336 = vsub.f32 %v1328, %v1332
    %v1337 = vsub.f32 %v1329, %v1335
    %v1338 = vmul.f32 %v1336, 1.442695
    %v1339 = vpow.pop %v1338
    %v1340 = vmul.f32 %v1337, 1.442695
    %v1341 = vpow.pop %v1340
    %v1342 = vsel %vm116, %v1339, 0.0
    %1343 = vadd.xlane.f32.xlu0 %v1342
    %v1344 = vpop.xlane.xlu0 %1343
    %v1345 = vsel %vm116, %v1341, 0.0
    %1346 = vadd.xlane.f32.xlu0 %v1345
    %v1347 = vpop.xlane.xlu0 %1346
    %v1348 = vrcp.pop %v1344
    %v1349 = vrcp.pop %v1347
    %v1350 = vmul.f32 %v1339, %v1348
    %v1351 = vmul.f32 %v1341, %v1349
    %s1352 = scalar_lea.vmem %s12, 80
    %1353 = vst.msk [vmem:[%s1352] sm:$0xff] %vm116, %v1350
    %1354 = vst.msk [vmem:[%s1352 + $0x8] sm:$0xff] %vm116, %v1351
    %v1355 = vadd.f32 %v1216, %v1350
    %v1356 = vadd.f32 %v1217, %v1351
    %1357 = vrot.lane.b32.xlu0 %v1128, 56
    %v1358 = vpop.permute.xlu0 %1357
    %v1361 = vsel %vm116, %v1350, 0
    %1363 = vmatpush.msra.mxu0 0.0
    %1364 = vmatpush.msra.mxu0 0.0
    %1365 = vmatpush.msra.mxu0 0.0
    %1366 = vmatpush.msra.mxu0 0.0
    %1367 = vmatpush.msra.mxu0 0.0
    %1368 = vmatpush.msra.mxu0 0.0
    %1369 = vmatpush.msra.mxu0 0.0
    %1370 = vmatpush.msra.mxu0 0.0
    %1371 = vmatpush.msra.mxu0 0.0
    %1372 = vmatpush.msra.mxu0 0.0
    %1373 = vmatpush.msra.mxu0 0.0
    %1374 = vmatpush.msra.mxu0 0.0
    %1375 = vmatpush.msra.mxu0 0.0
    %1376 = vmatpush.msra.mxu0 0.0
    %1377 = vmatpush.msra.mxu0 0.0
    %1378 = vmatpush.msra.mxu0 %v1358
    %1379 = vmatmul.f32.gmra.mxu0 %v1361
    %v1380 = vpop.f32.mrf.mxu0
    %v1381 = vadd.f32 0.0, %v1380
    %1382 = vdwg.mxu0
    %1383 = vrot.lane.b32.xlu0 %v1131, 56
    %v1384 = vpop.permute.xlu0 %1383
    %v1387 = vsel %vm116, %v1351, 0
    %1389 = vmatpush.msra.mxu0 0.0
    %1390 = vmatpush.msra.mxu0 0.0
    %1391 = vmatpush.msra.mxu0 0.0
    %1392 = vmatpush.msra.mxu0 0.0
    %1393 = vmatpush.msra.mxu0 0.0
    %1394 = vmatpush.msra.mxu0 0.0
    %1395 = vmatpush.msra.mxu0 0.0
    %1396 = vmatpush.msra.mxu0 0.0
    %1397 = vmatpush.msra.mxu0 0.0
    %1398 = vmatpush.msra.mxu0 0.0
    %1399 = vmatpush.msra.mxu0 0.0
    %1400 = vmatpush.msra.mxu0 0.0
    %1401 = vmatpush.msra.mxu0 0.0
    %1402 = vmatpush.msra.mxu0 0.0
    %1403 = vmatpush.msra.mxu0 0.0
    %1404 = vmatpush.msra.mxu0 %v1384
    %1405 = vmatmul.f32.gmra.mxu0 %v1387
    %v1406 = vpop.f32.mrf.mxu0
    %v1407 = vadd.f32 0.0, %v1406
    %1408 = vdwg.mxu0
    %1409 = vrot.lane.b32.xlu0 %v1128, 112
    %v1410 = vpop.permute.xlu0 %1409
    %1411 = vrot.lane.b32.xlu0 %v1128, 80
    %v1412 = vpop.permute.xlu0 %1411
    %v1413 = vsel %vm116, %v1410, 0
    %v1415 = vsel %vm116, %v1412, 0
    %1417 = vmatpush.xpose.msra.mxu0 0.0
    %1418 = vmatpush.xpose.msra.mxu0 0.0
    %1419 = vmatpush.xpose.msra.mxu0 0.0
    %1420 = vmatpush.xpose.msra.mxu0 0.0
    %1421 = vmatpush.xpose.msra.mxu0 0.0
    %1422 = vmatpush.xpose.msra.mxu0 0.0
    %1423 = vmatpush.xpose.msra.mxu0 0.0
    %1424 = vmatpush.xpose.msra.mxu0 0.0
    %1425 = vmatpush.xpose.msra.mxu0 0.0
    %1426 = vmatpush.xpose.msra.mxu0 0.0
    %1427 = vmatpush.xpose.msra.mxu0 0.0
    %1428 = vmatpush.xpose.msra.mxu0 0.0
    %1429 = vmatpush.xpose.msra.mxu0 0.0
    %1430 = vmatpush.xpose.msra.mxu0 0.0
    %1431 = vmatpush.xpose.msra.mxu0 0.0
    %1432 = vmatpush.xpose.msra.mxu0 %v1415
    %1433 = vmatmul.f32.gmra.mxu0 %v1413
    %v1434 = vpop.f32.mrf.mxu0
    %v1435 = vadd.f32 0.0, %v1434
    %1436 = vdwg.mxu0
    %1437 = vrot.lane.b32.xlu0 %v1131, 112
    %v1438 = vpop.permute.xlu0 %1437
    %1439 = vrot.lane.b32.xlu0 %v1131, 80
    %v1440 = vpop.permute.xlu0 %1439
    %v1441 = vsel %vm116, %v1438, 0
    %v1443 = vsel %vm116, %v1440, 0
    %1445 = vmatpush.xpose.msra.mxu0 0.0
    %1446 = vmatpush.xpose.msra.mxu0 0.0
    %1447 = vmatpush.xpose.msra.mxu0 0.0
    %1448 = vmatpush.xpose.msra.mxu0 0.0
    %1449 = vmatpush.xpose.msra.mxu0 0.0
    %1450 = vmatpush.xpose.msra.mxu0 0.0
    %1451 = vmatpush.xpose.msra.mxu0 0.0
    %1452 = vmatpush.xpose.msra.mxu0 0.0
    %1453 = vmatpush.xpose.msra.mxu0 0.0
    %1454 = vmatpush.xpose.msra.mxu0 0.0
    %1455 = vmatpush.xpose.msra.mxu0 0.0
    %1456 = vmatpush.xpose.msra.mxu0 0.0
    %1457 = vmatpush.xpose.msra.mxu0 0.0
    %1458 = vmatpush.xpose.msra.mxu0 0.0
    %1459 = vmatpush.xpose.msra.mxu0 0.0
    %1460 = vmatpush.xpose.msra.mxu0 %v1443
    %1461 = vmatmul.f32.gmra.mxu0 %v1441
    %v1462 = vpop.f32.mrf.mxu0
    %v1463 = vadd.f32 0.0, %v1462
    %1464 = vdwg.mxu0
    %v1465 = vmul.f32 %v1435, 0.35355338
    %v1466 = vmul.f32 %v1463, 0.35355338
    %v1467 = vadd.f32 %v1465, %v170
    %v1468 = vadd.f32 %v1466, %v171
    %v1469 = vsel %vm116, %v1467, -inf
    %1470 = vmax.xlane.f32.xlu0 %v1469
    %v1471 = vpop.xlane.xlu0 %1470
    %v1472 = vsel %vm116, %v1468, -inf
    %1473 = vmax.xlane.f32.xlu0 %v1472
    %v1474 = vpop.xlane.xlu0 %1473
    %v1475 = vsub.f32 %v1467, %v1471
    %v1476 = vsub.f32 %v1468, %v1474
    %v1477 = vmul.f32 %v1475, 1.442695
    %v1478 = vpow.pop %v1477
    %v1479 = vmul.f32 %v1476, 1.442695
    %v1480 = vpow.pop %v1479
    %v1481 = vsel %vm116, %v1478, 0.0
    %1482 = vadd.xlane.f32.xlu0 %v1481
    %v1483 = vpop.xlane.xlu0 %1482
    %v1484 = vsel %vm116, %v1480, 0.0
    %1485 = vadd.xlane.f32.xlu0 %v1484
    %v1486 = vpop.xlane.xlu0 %1485
    %v1487 = vrcp.pop %v1483
    %v1488 = vrcp.pop %v1486
    %v1489 = vmul.f32 %v1478, %v1487
    %v1490 = vmul.f32 %v1480, %v1488
    %s1491 = scalar_lea.vmem %s12, 96
    %1492 = vst.msk [vmem:[%s1491] sm:$0xff] %vm116, %v1489
    %1493 = vst.msk [vmem:[%s1491 + $0x8] sm:$0xff] %vm116, %v1490
    %v1494 = vadd.f32 %v1355, %v1489
    %v1495 = vadd.f32 %v1356, %v1490
    %1496 = vrot.lane.b32.xlu0 %v1128, 48
    %v1497 = vpop.permute.xlu0 %1496
    %v1500 = vsel %vm116, %v1489, 0
    %1502 = vmatpush.msra.mxu0 0.0
    %1503 = vmatpush.msra.mxu0 0.0
    %1504 = vmatpush.msra.mxu0 0.0
    %1505 = vmatpush.msra.mxu0 0.0
    %1506 = vmatpush.msra.mxu0 0.0
    %1507 = vmatpush.msra.mxu0 0.0
    %1508 = vmatpush.msra.mxu0 0.0
    %1509 = vmatpush.msra.mxu0 0.0
    %1510 = vmatpush.msra.mxu0 0.0
    %1511 = vmatpush.msra.mxu0 0.0
    %1512 = vmatpush.msra.mxu0 0.0
    %1513 = vmatpush.msra.mxu0 0.0
    %1514 = vmatpush.msra.mxu0 0.0
    %1515 = vmatpush.msra.mxu0 0.0
    %1516 = vmatpush.msra.mxu0 0.0
    %1517 = vmatpush.msra.mxu0 %v1497
    %1518 = vmatmul.f32.gmra.mxu0 %v1500
    %v1519 = vpop.f32.mrf.mxu0
    %v1520 = vadd.f32 0.0, %v1519
    %1521 = vdwg.mxu0
    %1522 = vrot.lane.b32.xlu0 %v1131, 48
    %v1523 = vpop.permute.xlu0 %1522
    %v1526 = vsel %vm116, %v1490, 0
    %1528 = vmatpush.msra.mxu0 0.0
    %1529 = vmatpush.msra.mxu0 0.0
    %1530 = vmatpush.msra.mxu0 0.0
    %1531 = vmatpush.msra.mxu0 0.0
    %1532 = vmatpush.msra.mxu0 0.0
    %1533 = vmatpush.msra.mxu0 0.0
    %1534 = vmatpush.msra.mxu0 0.0
    %1535 = vmatpush.msra.mxu0 0.0
    %1536 = vmatpush.msra.mxu0 0.0
    %1537 = vmatpush.msra.mxu0 0.0
    %1538 = vmatpush.msra.mxu0 0.0
    %1539 = vmatpush.msra.mxu0 0.0
    %1540 = vmatpush.msra.mxu0 0.0
    %1541 = vmatpush.msra.mxu0 0.0
    %1542 = vmatpush.msra.mxu0 0.0
    %1543 = vmatpush.msra.mxu0 %v1523
    %1544 = vmatmul.f32.gmra.mxu0 %v1526
    %v1545 = vpop.f32.mrf.mxu0
    %v1546 = vadd.f32 0.0, %v1545
    %1547 = vdwg.mxu0
    %1548 = vrot.lane.b32.xlu0 %v1128, 104
    %v1549 = vpop.permute.xlu0 %1548
    %1550 = vrot.lane.b32.xlu0 %v1128, 72
    %v1551 = vpop.permute.xlu0 %1550
    %v1552 = vsel %vm116, %v1549, 0
    %v1554 = vsel %vm116, %v1551, 0
    %1556 = vmatpush.xpose.msra.mxu0 0.0
    %1557 = vmatpush.xpose.msra.mxu0 0.0
    %1558 = vmatpush.xpose.msra.mxu0 0.0
    %1559 = vmatpush.xpose.msra.mxu0 0.0
    %1560 = vmatpush.xpose.msra.mxu0 0.0
    %1561 = vmatpush.xpose.msra.mxu0 0.0
    %1562 = vmatpush.xpose.msra.mxu0 0.0
    %1563 = vmatpush.xpose.msra.mxu0 0.0
    %1564 = vmatpush.xpose.msra.mxu0 0.0
    %1565 = vmatpush.xpose.msra.mxu0 0.0
    %1566 = vmatpush.xpose.msra.mxu0 0.0
    %1567 = vmatpush.xpose.msra.mxu0 0.0
    %1568 = vmatpush.xpose.msra.mxu0 0.0
    %1569 = vmatpush.xpose.msra.mxu0 0.0
    %1570 = vmatpush.xpose.msra.mxu0 0.0
    %1571 = vmatpush.xpose.msra.mxu0 %v1554
    %1572 = vmatmul.f32.gmra.mxu0 %v1552
    %v1573 = vpop.f32.mrf.mxu0
    %v1574 = vadd.f32 0.0, %v1573
    %1575 = vdwg.mxu0
    %1576 = vrot.lane.b32.xlu0 %v1131, 104
    %v1577 = vpop.permute.xlu0 %1576
    %1578 = vrot.lane.b32.xlu0 %v1131, 72
    %v1579 = vpop.permute.xlu0 %1578
    %v1580 = vsel %vm116, %v1577, 0
    %v1582 = vsel %vm116, %v1579, 0
    %1584 = vmatpush.xpose.msra.mxu0 0.0
    %1585 = vmatpush.xpose.msra.mxu0 0.0
    %1586 = vmatpush.xpose.msra.mxu0 0.0
    %1587 = vmatpush.xpose.msra.mxu0 0.0
    %1588 = vmatpush.xpose.msra.mxu0 0.0
    %1589 = vmatpush.xpose.msra.mxu0 0.0
    %1590 = vmatpush.xpose.msra.mxu0 0.0
    %1591 = vmatpush.xpose.msra.mxu0 0.0
    %1592 = vmatpush.xpose.msra.mxu0 0.0
    %1593 = vmatpush.xpose.msra.mxu0 0.0
    %1594 = vmatpush.xpose.msra.mxu0 0.0
    %1595 = vmatpush.xpose.msra.mxu0 0.0
    %1596 = vmatpush.xpose.msra.mxu0 0.0
    %1597 = vmatpush.xpose.msra.mxu0 0.0
    %1598 = vmatpush.xpose.msra.mxu0 0.0
    %1599 = vmatpush.xpose.msra.mxu0 %v1582
    %1600 = vmatmul.f32.gmra.mxu0 %v1580
    %v1601 = vpop.f32.mrf.mxu0
    %v1602 = vadd.f32 0.0, %v1601
    %1603 = vdwg.mxu0
    %v1604 = vmul.f32 %v1574, 0.35355338
    %v1605 = vmul.f32 %v1602, 0.35355338
    %v1606 = vadd.f32 %v1604, %v170
    %v1607 = vadd.f32 %v1605, %v171
    %v1608 = vsel %vm116, %v1606, -inf
    %1609 = vmax.xlane.f32.xlu0 %v1608
    %v1610 = vpop.xlane.xlu0 %1609
    %v1611 = vsel %vm116, %v1607, -inf
    %1612 = vmax.xlane.f32.xlu0 %v1611
    %v1613 = vpop.xlane.xlu0 %1612
    %v1614 = vsub.f32 %v1606, %v1610
    %v1615 = vsub.f32 %v1607, %v1613
    %v1616 = vmul.f32 %v1614, 1.442695
    %v1617 = vpow.pop %v1616
    %v1618 = vmul.f32 %v1615, 1.442695
    %v1619 = vpow.pop %v1618
    %v1620 = vsel %vm116, %v1617, 0.0
    %1621 = vadd.xlane.f32.xlu0 %v1620
    %v1622 = vpop.xlane.xlu0 %1621
    %v1623 = vsel %vm116, %v1619, 0.0
    %1624 = vadd.xlane.f32.xlu0 %v1623
    %v1625 = vpop.xlane.xlu0 %1624
    %v1626 = vrcp.pop %v1622
    %v1627 = vrcp.pop %v1625
    %v1628 = vmul.f32 %v1617, %v1626
    %v1629 = vmul.f32 %v1619, %v1627
    %s1630 = scalar_lea.vmem %s12, 112
    %1631 = vst.msk [vmem:[%s1630] sm:$0xff] %vm116, %v1628
    %1632 = vst.msk [vmem:[%s1630 + $0x8] sm:$0xff] %vm116, %v1629
    %v1633 = vadd.f32 %v1494, %v1628
    %v1634 = vadd.f32 %v1495, %v1629
    %1635 = vrot.lane.b32.xlu0 %v1128, 40
    %v1636 = vpop.permute.xlu0 %1635
    %v1639 = vsel %vm116, %v1628, 0
    %1641 = vmatpush.msra.mxu0 0.0
    %1642 = vmatpush.msra.mxu0 0.0
    %1643 = vmatpush.msra.mxu0 0.0
    %1644 = vmatpush.msra.mxu0 0.0
    %1645 = vmatpush.msra.mxu0 0.0
    %1646 = vmatpush.msra.mxu0 0.0
    %1647 = vmatpush.msra.mxu0 0.0
    %1648 = vmatpush.msra.mxu0 0.0
    %1649 = vmatpush.msra.mxu0 0.0
    %1650 = vmatpush.msra.mxu0 0.0
    %1651 = vmatpush.msra.mxu0 0.0
    %1652 = vmatpush.msra.mxu0 0.0
    %1653 = vmatpush.msra.mxu0 0.0
    %1654 = vmatpush.msra.mxu0 0.0
    %1655 = vmatpush.msra.mxu0 0.0
    %1656 = vmatpush.msra.mxu0 %v1636
    %1657 = vmatmul.f32.gmra.mxu0 %v1639
    %v1658 = vpop.f32.mrf.mxu0
    %v1659 = vadd.f32 0.0, %v1658
    %1660 = vdwg.mxu0
    %1661 = vrot.lane.b32.xlu0 %v1131, 40
    %v1662 = vpop.permute.xlu0 %1661
    %v1665 = vsel %vm116, %v1629, 0
    %1667 = vmatpush.msra.mxu0 0.0
    %1668 = vmatpush.msra.mxu0 0.0
    %1669 = vmatpush.msra.mxu0 0.0
    %1670 = vmatpush.msra.mxu0 0.0
    %1671 = vmatpush.msra.mxu0 0.0
    %1672 = vmatpush.msra.mxu0 0.0
    %1673 = vmatpush.msra.mxu0 0.0
    %1674 = vmatpush.msra.mxu0 0.0
    %1675 = vmatpush.msra.mxu0 0.0
    %1676 = vmatpush.msra.mxu0 0.0
    %1677 = vmatpush.msra.mxu0 0.0
    %1678 = vmatpush.msra.mxu0 0.0
    %1679 = vmatpush.msra.mxu0 0.0
    %1680 = vmatpush.msra.mxu0 0.0
    %1681 = vmatpush.msra.mxu0 0.0
    %1682 = vmatpush.msra.mxu0 %v1662
    %1683 = vmatmul.f32.gmra.mxu0 %v1665
    %v1684 = vpop.f32.mrf.mxu0
    %v1685 = vadd.f32 0.0, %v1684
    %1686 = vdwg.mxu0
    %1689 = vrot.lane.b32.xlu0 %v1381, 8
    %v1690 = vpop.permute.xlu0 %1689
    %1691 = vrot.lane.b32.xlu0 %v1407, 8
    %v1692 = vpop.permute.xlu0 %1691
    %1697 = vrot.lane.b32.xlu0 %v1520, 16
    %v1698 = vpop.permute.xlu0 %1697
    %1699 = vrot.lane.b32.xlu0 %v1546, 16
    %v1700 = vpop.permute.xlu0 %1699
    %1705 = vrot.lane.b32.xlu0 %v1659, 24
    %v1706 = vpop.permute.xlu0 %1705
    %1707 = vrot.lane.b32.xlu0 %v1685, 24
    %v1708 = vpop.permute.xlu0 %1707
    %v1711 = vsel %vm116, %v1242, %v1690
    %v1712 = vsel %vm116, %v1268, %v1692
    %v1713 = vsel %vm697, %v1711, %v1698
    %v1714 = vsel %vm697, %v1712, %v1700
    %v1715 = vsel %vm700, %v1713, %v1706
    %v1716 = vsel %vm700, %v1714, %v1708
    %v1717 = vperm.slane %v1100, 0
    %1722 = vrot.lane.b32.xlu0 %v1077, 32
    %v1723 = vpop.permute.xlu0 %1722
    %1724 = vrot.lane.b32.xlu0 %v1078, 32
    %v1725 = vpop.permute.xlu0 %1724
    %1726 = vrot.lane.b32.xlu0 %v1079, 32
    %v1727 = vpop.permute.xlu0 %1726
    %1728 = vrot.lane.b32.xlu0 %v1080, 32
    %v1729 = vpop.permute.xlu0 %1728
    %v1735 = vsel %vm83, %v1715, 0
    %v1738 = vsel %vm83, %v1716, 0
    %1740 = vmatpush.msra.mxu0 0.0
    %1741 = vmatpush.msra.mxu0 0.0
    %1742 = vmatpush.msra.mxu0 0.0
    %1743 = vmatpush.msra.mxu0 0.0
    %1744 = vmatpush.msra.mxu0 0.0
    %1745 = vmatpush.msra.mxu0 0.0
    %1746 = vmatpush.msra.mxu0 0.0
    %1747 = vmatpush.msra.mxu0 0.0
    %1748 = vmatpush.msra.mxu0 0.0
    %1749 = vmatpush.msra.mxu0 0.0
    %1750 = vmatpush.msra.mxu0 0.0
    %1751 = vmatpush.msra.mxu0 0.0
    %1752 = vmatpush.msra.mxu0 %v1729
    %1753 = vmatpush.msra.mxu0 %v1727
    %1754 = vmatpush.msra.mxu0 %v1725
    %1755 = vmatpush.msra.mxu0 %v1723
    %1756 = vmatmul.f32.gmra.mxu0 %v1735
    %v1757 = vpop.f32.mrf.mxu0
    %v1758 = vadd.f32 %v1717, %v1757
    %1759 = vmatmul.f32.gmra.mxu0 %v1738
    %v1760 = vpop.f32.mrf.mxu0
    %v1761 = vadd.f32 %v1717, %v1760
    %1762 = vdwg.mxu0
    %v1763 = vadd.f32 %v939, %v1758
    %v1764 = vadd.f32 %v940, %v1761
    %v1765 = vsel %vm83, %v1763, 0.0
    %1766 = vadd.xlane.f32.xlu0 %v1765
    %v1767 = vpop.xlane.xlu0 %1766
    %v1768 = vsel %vm83, %v1764, 0.0
    %1769 = vadd.xlane.f32.xlu0 %v1768
    %v1770 = vpop.xlane.xlu0 %1769
    %v1771 = vmul.f32 %v1767, %v763
    %v1772 = vmul.f32 %v1770, %v763
    %v1773 = vsub.f32 %v1763, %v1771
    %v1774 = vsub.f32 %v1764, %v1772
    %v1775 = vmul.f32 %v1773, %v1773
    %v1776 = vmul.f32 %v1774, %v1774
    %v1777 = vsel %vm83, %v1775, 0.0
    %1778 = vadd.xlane.f32.xlu0 %v1777
    %v1779 = vpop.xlane.xlu0 %1778
    %v1780 = vsel %vm83, %v1776, 0.0
    %1781 = vadd.xlane.f32.xlu0 %v1780
    %v1782 = vpop.xlane.xlu0 %1781
    %v1783 = vmul.f32 %v1779, %v763
    %v1784 = vmul.f32 %v1782, %v763
    %v1785 = vadd.f32 %v1783, 1e-12
    %v1786 = vadd.f32 %v1784, 1e-12
    %v1787 = vrsqrt.pop %v1785
    %v1788 = vmul.f32 %v1787, %v1785
    %v1789 = vmul.f32 %v1788, %v1787
    %v1790 = vmul.f32 0.5, %v1789
    %v1791 = vsub.f32 1.5, %v1790
    %v1792 = vmul.f32 %v1787, %v1791
    %vm1793 = vweird.f32 %v1785
    %vm1794 = vweird.f32 %v1787
    %vm1795 = vmor %vm1793, %vm1794
    %v1796 = vsel %vm1795, %v1787, %v1792
    %v1797 = vrsqrt.pop %v1786
    %v1798 = vmul.f32 %v1797, %v1786
    %v1799 = vmul.f32 %v1798, %v1797
    %v1800 = vmul.f32 0.5, %v1799
    %v1801 = vsub.f32 1.5, %v1800
    %v1802 = vmul.f32 %v1797, %v1801
    %vm1803 = vweird.f32 %v1786
    %vm1804 = vweird.f32 %v1797
    %vm1805 = vmor %vm1803, %vm1804
    %v1806 = vsel %vm1805, %v1797, %v1802
    %v1807 = vmul.f32 %v1773, %v1796
    %v1808 = vmul.f32 %v1774, %v1806
    %v1809 = vperm.slane %v1100, 1
    %v1810 = vmul.f32 %v1807, %v1809
    %v1811 = vmul.f32 %v1808, %v1809
    %v1812 = vperm.slane %v1100, 2
    %v1813 = vadd.f32 %v1810, %v1812
    %v1814 = vadd.f32 %v1811, %v1812
    %v1816 = vperm.slane %v1089, 0
    %v1819 = vsel %vm83, %v1813, 0
    %v1822 = vsel %vm83, %v1814, 0
    %1824 = vmatpush.msra.mxu0 0.0
    %1825 = vmatpush.msra.mxu0 0.0
    %1826 = vmatpush.msra.mxu0 0.0
    %1827 = vmatpush.msra.mxu0 0.0
    %1828 = vmatpush.msra.mxu0 0.0
    %1829 = vmatpush.msra.mxu0 0.0
    %1830 = vmatpush.msra.mxu0 0.0
    %1831 = vmatpush.msra.mxu0 0.0
    %1832 = vmatpush.msra.mxu0 0.0
    %1833 = vmatpush.msra.mxu0 0.0
    %1834 = vmatpush.msra.mxu0 0.0
    %1835 = vmatpush.msra.mxu0 0.0
    %1836 = vmatpush.msra.mxu0 %v1087
    %1837 = vmatpush.msra.mxu0 %v1086
    %1838 = vmatpush.msra.mxu0 %v1085
    %1839 = vmatpush.msra.mxu0 %v1084
    %1840 = vmatmul.f32.gmra.mxu0 %v1819
    %v1841 = vpop.f32.mrf.mxu0
    %v1842 = vadd.f32 %v1816, %v1841
    %1843 = vmatmul.f32.gmra.mxu0 %v1822
    %v1844 = vpop.f32.mrf.mxu0
    %v1845 = vadd.f32 %v1816, %v1844
    %1846 = vdwg.mxu0
    %v1847 = vmul.f32 %v1842, 0.5
    %v1848 = vmul.f32 %v1845, 0.5
    %v1849 = vmul.f32 %v1842, %v1842
    %v1850 = vmul.f32 %v1845, %v1845
    %v1851 = vmul.f32 %v1842, %v1849
    %v1852 = vmul.f32 %v1845, %v1850
    %v1853 = vmul.f32 %v1851, 0.044715
    %v1854 = vmul.f32 %v1852, 0.044715
    %v1855 = vadd.f32 %v1842, %v1853
    %v1856 = vadd.f32 %v1845, %v1854
    %v1857 = vmul.f32 %v1855, 0.7978846
    %v1858 = vmul.f32 %v1856, 0.7978846
    %v1859 = vtanh.pop %v1857
    %v1860 = vtanh.pop %v1858
    %v1861 = vadd.f32 %v1859, 1.0
    %v1862 = vadd.f32 %v1860, 1.0
    %v1863 = vmul.f32 %v1847, %v1861
    %v1864 = vmul.f32 %v1848, %v1862
    %v1865 = vperm.slane %v1100, 3
    %v1867 = vsel %vm859, %v1863, 0
    %v1870 = vsel %vm859, %v1864, 0
    %1872 = vmatpush.msra.mxu0 0.0
    %1873 = vmatpush.msra.mxu0 0.0
    %1874 = vmatpush.msra.mxu0 0.0
    %1875 = vmatpush.msra.mxu0 0.0
    %1876 = vmatpush.msra.mxu0 0.0
    %1877 = vmatpush.msra.mxu0 0.0
    %1878 = vmatpush.msra.mxu0 0.0
    %1879 = vmatpush.msra.mxu0 0.0
    %1880 = vmatpush.msra.mxu0 %v1098
    %1881 = vmatpush.msra.mxu0 %v1097
    %1882 = vmatpush.msra.mxu0 %v1096
    %1883 = vmatpush.msra.mxu0 %v1095
    %1884 = vmatpush.msra.mxu0 %v1094
    %1885 = vmatpush.msra.mxu0 %v1093
    %1886 = vmatpush.msra.mxu0 %v1092
    %1887 = vmatpush.msra.mxu0 %v1091
    %1888 = vmatmul.f32.gmra.mxu0 %v1867
    %v1889 = vpop.f32.mrf.mxu0
    %v1890 = vadd.f32 %v1865, %v1889
    %1891 = vmatmul.f32.gmra.mxu0 %v1870
    %v1892 = vpop.f32.mrf.mxu0
    %v1893 = vadd.f32 %v1865, %v1892
    %1894 = vdwg.mxu0
    %v1895 = vadd.f32 %v1813, %v1890
    %v1896 = vadd.f32 %v1814, %v1893
    %v1897 = vsel %vm83, %v1895, 0.0
    %1898 = vadd.xlane.f32.xlu0 %v1897
    %v1899 = vpop.xlane.xlu0 %1898
    %v1900 = vsel %vm83, %v1896, 0.0
    %1901 = vadd.xlane.f32.xlu0 %v1900
    %v1902 = vpop.xlane.xlu0 %1901
    %v1903 = vmul.f32 %v1899, %v763
    %v1904 = vmul.f32 %v1902, %v763
    %v1905 = vsub.f32 %v1895, %v1903
    %v1906 = vsub.f32 %v1896, %v1904
    %v1907 = vmul.f32 %v1905, %v1905
    %v1908 = vmul.f32 %v1906, %v1906
    %v1909 = vsel %vm83, %v1907, 0.0
    %1910 = vadd.xlane.f32.xlu0 %v1909
    %v1911 = vpop.xlane.xlu0 %1910
    %v1912 = vsel %vm83, %v1908, 0.0
    %1913 = vadd.xlane.f32.xlu0 %v1912
    %v1914 = vpop.xlane.xlu0 %1913
    %v1915 = vmul.f32 %v1911, %v763
    %v1916 = vmul.f32 %v1914, %v763
    %v1917 = vadd.f32 %v1915, 1e-12
    %v1918 = vadd.f32 %v1916, 1e-12
    %v1919 = vrsqrt.pop %v1917
    %v1920 = vmul.f32 %v1919, %v1917
    %v1921 = vmul.f32 %v1920, %v1919
    %v1922 = vmul.f32 0.5, %v1921
    %v1923 = vsub.f32 1.5, %v1922
    %v1924 = vmul.f32 %v1919, %v1923
    %vm1925 = vweird.f32 %v1917
    %vm1926 = vweird.f32 %v1919
    %vm1927 = vmor %vm1925, %vm1926
    %v1928 = vsel %vm1927, %v1919, %v1924
    %v1929 = vrsqrt.pop %v1918
    %v1930 = vmul.f32 %v1929, %v1918
    %v1931 = vmul.f32 %v1930, %v1929
    %v1932 = vmul.f32 0.5, %v1931
    %v1933 = vsub.f32 1.5, %v1932
    %v1934 = vmul.f32 %v1929, %v1933
    %vm1935 = vweird.f32 %v1918
    %vm1936 = vweird.f32 %v1929
    %vm1937 = vmor %vm1935, %vm1936
    %v1938 = vsel %vm1937, %v1929, %v1934
    %v1939 = vmul.f32 %v1905, %v1928
    %v1940 = vmul.f32 %v1906, %v1938
    %v1941 = vperm.slane %v1100, 4
    %v1942 = vmul.f32 %v1939, %v1941
    %v1943 = vmul.f32 %v1940, %v1941
    %v1944 = vperm.slane %v1100, 5
    %v1945 = vadd.f32 %v1942, %v1944
    %v1946 = vadd.f32 %v1943, %v1944
    %v1947 = vmul.f32 %v1633, 0.25
    %v1948 = vmul.f32 %v1634, 0.25
    %v1949 = vsel %vm949, %v1947, -1e+09
    %v1950 = vsel %vm950, %v1948, -1e+09
    %v1951 = vsel %vm116, %v1949, -inf
    %1952 = vmax.xlane.f32.xlu0 %v1951
    %v1953 = vpop.xlane.xlu0 %1952
    %v1954 = vsel %vm116, %v1950, -inf
    %1955 = vmax.xlane.f32.xlu0 %v1954
    %v1956 = vpop.xlane.xlu0 %1955
    %v1957 = vsub.f32 %v1949, %v1953
    %v1958 = vsub.f32 %v1950, %v1956
    %v1959 = vmul.f32 %v1957, 1.442695
    %v1960 = vpow.pop %v1959
    %v1961 = vmul.f32 %v1958, 1.442695
    %v1962 = vpow.pop %v1961
    %v1963 = vmul.f32 %v1960, %v965
    %v1964 = vmul.f32 %v1962, %v966
    %v1965 = vsel %vm116, %v1963, 0.0
    %1966 = vadd.xlane.f32.xlu0 %v1965
    %v1967 = vpop.xlane.xlu0 %1966
    %v1968 = vsel %vm116, %v1964, 0.0
    %1969 = vadd.xlane.f32.xlu0 %v1968
    %v1970 = vpop.xlane.xlu0 %1969
    %v1971 = vmax.f32 %v1967, 1e-30
    %v1972 = vmax.f32 %v1970, 1e-30
    %v1973 = vrcp.pop %v1971
    %v1974 = vmul.f32 %v1971, %v1973
    %v1975 = vsub.f32 1.0, %v1974
    %v1976 = vmul.f32 %v1973, %v1975
    %v1977 = vadd.f32 %v1973, %v1976
    %vm1978 = vweird.f32 %v1971
    %vm1979 = vweird.f32 %v1973
    %vm1980 = vmor %vm1978, %vm1979
    %v1981 = vsel %vm1980, %v1973, %v1977
    %v1982 = vand.u32 2147483647, %v1971
    %vm1983 = vcmp.eq.f32.partialorder %v1982, 8.507059e+37
    %v1984 = vand.u32 %v1971, 2147483648
    %v1985 = vor.u32 1.1754944e-38, %v1984
    %v1986 = vsel %vm1983, %v1985, %v1981
    %v1987 = vmul.f32 %v1963, %v1986
    %v1988 = vrcp.pop %v1972
    %v1989 = vmul.f32 %v1972, %v1988
    %v1990 = vsub.f32 1.0, %v1989
    %v1991 = vmul.f32 %v1988, %v1990
    %v1992 = vadd.f32 %v1988, %v1991
    %vm1993 = vweird.f32 %v1972
    %vm1994 = vweird.f32 %v1988
    %vm1995 = vmor %vm1993, %vm1994
    %v1996 = vsel %vm1995, %v1988, %v1992
    %v1997 = vand.u32 2147483647, %v1972
    %vm1998 = vcmp.eq.f32.partialorder %v1997, 8.507059e+37
    %v1999 = vand.u32 %v1972, 2147483648
    %v2000 = vor.u32 1.1754944e-38, %v1999
    %v2001 = vsel %vm1998, %v2000, %v1996
    %v2002 = vmul.f32 %v1964, %v2001
    %v2003 = vlog2.pop %v1971
    %v2004 = vmul.f32 %v2003, 0.6931472
    %v2005 = vlog2.pop %v1972
    %v2006 = vmul.f32 %v2005, 0.6931472
    %v2007 = vsub.f32 %v1957, %v2004
    %v2008 = vsub.f32 %v1958, %v2006
    %v2009 = vmul.f32 %v1987, %v2007
    %v2010 = vmul.f32 %v2002, %v2008
    %v2011 = vsel %vm949, %v2009, 0.0
    %v2012 = vsel %vm950, %v2010, 0.0
    %v2013 = vsel %vm116, %v2011, 0.0
    %2014 = vadd.xlane.f32.xlu0 %v2013
    %v2015 = vpop.xlane.xlu0 %2014
    %v2016 = vsel %vm116, %v2012, 0.0
    %2017 = vadd.xlane.f32.xlu0 %v2016
    %v2018 = vpop.xlane.xlu0 %2017
    %v2019 = vmul.f32 %v2015, %v1030
    %v2020 = vmul.f32 %v2018, %v1037
    %2023 = vset.pattern.permute.xlu0 0
    %2024 = vperm.xlu0 %2023, %v2019
    %v2025 = vpop.permute.xlu0 %2024
    %2026 = vset.pattern.permute.xlu0 0
    %2027 = vperm.xlu0 %2026, %v2020
    %v2028 = vpop.permute.xlu0 %2027
    %v2029 = vperm.slane %v2025, %v1051
    %v2030 = vperm.slane %v2028, %v1051
    %v2031 = vsel %vm1054, %v2030, %v2029
    %v2033 = vsel %vm56, %v2031, 0.0
    %2034 = vadd.xlane.f32.xlu0 %v2033
    %v2035 = vpop.xlane.xlu0 %2034
    %v2036 = vmul.f32 %v2035, %v1073
    %v2037 = vadd.f32 %v1075, %v2036
    %2038 = vst.msk [vmem:[#allocation2] sm:$0xff] %vm83, %v1945
    %2039 = vst.msk [vmem:[#allocation2 + $0x8] sm:$0xff] %vm83, %v1946
    %vm2040 = vcmask 1041408
    %v2041 = vsel %vm2040, %v2037, 0.0
    %v2042 = vrot.slane %v2041, 4
    %v2043 = vadd.f32 %v2041, %v2042
    %v2044 = vrot.slane %v2043, 2
    %v2045 = vadd.f32 %v2043, %v2044
    %v2046 = vrot.slane %v2045, 1
    %v2047 = vadd.f32 %v2045, %v2046
    %v2048 = vmul.f32 %v2047, 0.5
    %vm2049 = vcmask 0
    %2050 = vst.msk [vmem:[#allocation7] sm:$0x1] %vm2049, %v2048
    %v2052 = vrot.slane %v1946, 7
    %vm2054 = vcmask 1040384
    %v2055 = vsel %vm2054, %v1945, %v2052
    %v2056 = vld [vmem:[%s9] sm:$0xff]
    %v2057 = vld [vmem:[%s9 + $0x8] sm:$0xff]
    %v2058 = vld [vmem:[%s9 + $0x10] sm:$0xff]
    %v2059 = vld [vmem:[%s9 + $0x18] sm:$0xff]
    %v2060 = vld [vmem:[%s10] sm:$0x1]
    %v2062 = vperm.slane %v2060, 0
    %v2065 = vsel %vm83, %v2055, 0
    %2067 = vmatpush.msra.mxu0 0.0
    %2068 = vmatpush.msra.mxu0 0.0
    %2069 = vmatpush.msra.mxu0 0.0
    %2070 = vmatpush.msra.mxu0 0.0
    %2071 = vmatpush.msra.mxu0 0.0
    %2072 = vmatpush.msra.mxu0 0.0
    %2073 = vmatpush.msra.mxu0 0.0
    %2074 = vmatpush.msra.mxu0 0.0
    %2075 = vmatpush.msra.mxu0 0.0
    %2076 = vmatpush.msra.mxu0 0.0
    %2077 = vmatpush.msra.mxu0 0.0
    %2078 = vmatpush.msra.mxu0 0.0
    %2079 = vmatpush.msra.mxu0 %v2059
    %2080 = vmatpush.msra.mxu0 %v2058
    %2081 = vmatpush.msra.mxu0 %v2057
    %2082 = vmatpush.msra.mxu0 %v2056
    %2083 = vmatmul.f32.gmra.mxu0 %v2065
    %v2084 = vpop.f32.mrf.mxu0
    %v2085 = vadd.f32 %v2062, %v2084
    %2086 = vdwg.mxu0
    %v2087 = vtanh.pop %v2085
    %2092 = vrot.lane.b32.xlu0 %v2056, 96
    %v2093 = vpop.permute.xlu0 %2092
    %2094 = vrot.lane.b32.xlu0 %v2057, 96
    %v2095 = vpop.permute.xlu0 %2094
    %2096 = vrot.lane.b32.xlu0 %v2058, 96
    %v2097 = vpop.permute.xlu0 %2096
    %2098 = vrot.lane.b32.xlu0 %v2059, 96
    %v2099 = vpop.permute.xlu0 %2098
    %2104 = vrot.lane.b32.xlu0 %v2062, 96
    %v2105 = vpop.permute.xlu0 %2104
    %v2108 = vsel %vm83, %v2087, 0
    %2110 = vmatpush.msra.mxu0 0.0
    %2111 = vmatpush.msra.mxu0 0.0
    %2112 = vmatpush.msra.mxu0 0.0
    %2113 = vmatpush.msra.mxu0 0.0
    %2114 = vmatpush.msra.mxu0 0.0
    %2115 = vmatpush.msra.mxu0 0.0
    %2116 = vmatpush.msra.mxu0 0.0
    %2117 = vmatpush.msra.mxu0 0.0
    %2118 = vmatpush.msra.mxu0 0.0
    %2119 = vmatpush.msra.mxu0 0.0
    %2120 = vmatpush.msra.mxu0 0.0
    %2121 = vmatpush.msra.mxu0 0.0
    %2122 = vmatpush.msra.mxu0 %v2099
    %2123 = vmatpush.msra.mxu0 %v2097
    %2124 = vmatpush.msra.mxu0 %v2095
    %2125 = vmatpush.msra.mxu0 %v2093
    %2126 = vmatmul.f32.gmra.mxu0 %v2108
    %v2127 = vpop.f32.mrf.mxu0
    %v2128 = vadd.f32 %v2105, %v2127
    %2129 = vdwg.mxu0
    %vm2130 = vcmask 9216
    %2131 = vst.msk [vmem:[#allocation4] sm:$0x3] %vm2130, %v2128
    %v2132 = vsel %vm2130, %v2128, -inf
    %2133 = vmax.xlane.f32.xlu0 %v2132
    %v2134 = vpop.xlane.xlu0 %2133
    %v2135 = vsub.f32 %v2128, %v2134
    %v2136 = vmul.f32 %v2135, 1.442695
    %v2137 = vpow.pop %v2136
    %v2138 = vsel %vm2130, %v2137, 0.0
    %2139 = vadd.xlane.f32.xlu0 %v2138
    %v2140 = vpop.xlane.xlu0 %2139
    %v2141 = vlog2.pop %v2140
    %v2142 = vmul.f32 %v2141, 0.6931472
    %v2143 = vadd.f32 %v2134, %v2142
    %v2144 = vld [vmem:[%s2] sm:$0x3]
    %v2145 = vmul.f32 %v2144, %v2128
    %v2146 = vsel %vm2130, %v2145, 0.0
    %2147 = vadd.xlane.f32.xlu0 %v2146
    %v2148 = vpop.xlane.xlu0 %2147
    %v2149 = vsub.f32 %v2143, %v2148
    %v2150 = vsel %vm2040, %v2149, 0.0
    %v2151 = vrot.slane %v2150, 4
    %v2152 = vadd.f32 %v2150, %v2151
    %v2153 = vrot.slane %v2152, 2
    %v2154 = vadd.f32 %v2152, %v2153
    %v2155 = vrot.slane %v2154, 1
    %v2156 = vadd.f32 %v2154, %v2155
    %v2157 = vmul.f32 %v2156, 0.5
    %2158 = vst.msk [vmem:[#allocation6] sm:$0x1] %vm2049, %v2157
    // Predicated region
    $region46: #{ear_forward.1} parent=1 // pred_check
      _
    $region47: #{ear_forward.1} parent=1 // pred_check_branch
      %2160 = sbr.rel (0) target = $region49
    $region48: #{ear_forward.1} parent=1 // pred_region
      %2162 = vsyncadd [#allocation3], 0
      %s2163 = sshll.u32 [#allocation2], 4
      %s2164 = int_to_ptr.vmem [resolvable:$true] %s2163
      %s2165 = sshll.u32 %s11, 4
      %s2166 = int_to_ptr.hbm [resolvable:$true] %s2165
      %2171 = dma.vmem_to_hbm [thread:$0]  %s2164, 256, %s2166, [#allocation3], 128, 128, 8
    $region49: #{ear_forward.1} parent=1 // pred_fallthru
      _
    // Predicated region
    $region50: #{ear_forward.1} parent=1 // pred_check
      _
    $region51: #{ear_forward.1} parent=1 // pred_check_branch
      %2173 = sbr.rel (0) target = $region53
    $region52: #{ear_forward.1} parent=1 // pred_region
      _
    $region53: #{ear_forward.1} parent=1 // pred_fallthru
      _
    // Predicated region
    $region54: #{ear_forward.1} parent=1 // pred_check
      _
    $region55: #{ear_forward.1} parent=1 // pred_check_branch
      %2175 = sbr.rel (0) target = $region57
    $region56: #{ear_forward.1} parent=1 // pred_region
      %2177 = vsyncadd [#allocation5], 0
      %s2179 = sshll.u32 [#allocation4], 4
      %s2180 = int_to_ptr.vmem [resolvable:$true] %s2179
      %s2181 = sshll.u32 %s13, 4
      %s2182 = int_to_ptr.hbm [resolvable:$true] %s2181
      %2184 = dma.vmem_to_hbm [thread:$0]  %s2180, 32, %s2182, [#allocation5]
    $region57: #{ear_forward.1} parent=1 // pred_fallthru
      _
    // Predicated region
    $region58: #{ear_forward.1} parent=1 // pred_check
      _
    $region59: #{ear_forward.1} parent=1 // pred_check_branch
      %2186 = sbr.rel (0) target = $region61
    $region60: #{ear_forward.1} parent=1 // pred_region
      %2188 = vsyncadd [#allocation5], 0
      %s2190 = sshll.u32 [#allocation6], 4
      %s2191 = int_to_ptr.vmem [resolvable:$true] %s2190
      %s2192 = sshll.u32 %s14, 4
      %s2193 = int_to_ptr.hbm [resolvable:$true] %s2192
      %2195 = dma.vmem_to_hbm [thread:$0]  %s2191, 16, %s2193, [#allocation5]
    $region61: #{ear_forward.1} parent=1 // pred_fallthru
      _
    // Predicated region
    $region62: #{ear_forward.1} parent=1 // pred_check
      _
    $region63: #{ear_forward.1} parent=1 // pred_check_branch
      %2197 = sbr.rel (0) target = $region65
    $region64: #{ear_forward.1} parent=1 // pred_region
      %2199 = vsyncadd [#allocation8], 0
      %s2201 = sshll.u32 [#allocation7], 4
      %s2202 = int_to_ptr.vmem [resolvable:$true] %s2201
      %s2203 = sshll.u32 %s15, 4
      %s2204 = int_to_ptr.hbm [resolvable:$true] %s2203
      %2206 = dma.vmem_to_hbm [thread:$0]  %s2202, 16, %s2204, [#allocation8]
    $region65: #{ear_forward.1} parent=1 // pred_fallthru
      _
    // Predicated region
    $region66: #{ear_forward.1} parent=1 // pred_check
      _
    $region67: #{ear_forward.1} parent=1 // pred_check_branch
      %2208 = sbr.rel (0) target = $region69
    $region68: #{ear_forward.1} parent=1 // pred_region
      %2210 = dma.done [#allocation3], 256
    $region69: #{ear_forward.1} parent=1 // pred_fallthru
      _
    // Predicated region
    $region70: #{ear_forward.1} parent=1 // pred_check
      _
    $region71: #{ear_forward.1} parent=1 // pred_check_branch
      %2212 = sbr.rel (0) target = $region73
    $region72: #{ear_forward.1} parent=1 // pred_region
      _
    $region73: #{ear_forward.1} parent=1 // pred_fallthru
      _
    // Predicated region
    $region74: #{ear_forward.1} parent=1 // pred_check
      _
    $region75: #{ear_forward.1} parent=1 // pred_check_branch
      %2214 = sbr.rel (0) target = $region77
    $region76: #{ear_forward.1} parent=1 // pred_region
      %2216 = dma.done [#allocation5], 32
    $region77: #{ear_forward.1} parent=1 // pred_fallthru
      _
    // Predicated region
    $region78: #{ear_forward.1} parent=1 // pred_check
      _
    $region79: #{ear_forward.1} parent=1 // pred_check_branch
      %2218 = sbr.rel (0) target = $region81
    $region80: #{ear_forward.1} parent=1 // pred_region
      %2220 = dma.done [#allocation5], 16
    $region81: #{ear_forward.1} parent=1 // pred_fallthru
      _
    // Predicated region
    $region82: #{ear_forward.1} parent=1 // pred_check
      _
    $region83: #{ear_forward.1} parent=1 // pred_check_branch
      %2222 = sbr.rel (0) target = $region85
    $region84: #{ear_forward.1} parent=1 // pred_region
      %2224 = dma.done [#allocation8], 16
    $region85: #{ear_forward.1} parent=1 // pred_fallthru
      _
    %2225 = vsyncpa [#allocation3], 1
    %2226 = vsyncpa [#allocation5], 1
    %2227 = vsyncpa [#allocation8], 1

</llo_original>
